<compile_context>
chip_gen: v7x
topology: tpu7x:2x2x1
jax: 0.10.0
libtpu: 0.0.40
codegen_flags: <defaults>
</compile_context>

<pallas_src>
import math
import jax
import jax.numpy as jnp
from jax.experimental import pallas as pl
from jax.experimental.pallas import tpu as pltpu

D_MODEL = 32
N_HEADS = 4
D_HEAD = D_MODEL // N_HEADS
D_FF = 64
EPS = 1e-6
SCALE = 1.0 / math.sqrt(D_HEAD)

# Row layout of the packed (NUM_VEC_ROWS, VEC_COLS) parameter-vector array.
(ROW_LN0_G, ROW_LN0_B,
 ROW_LN1_G, ROW_LN1_B,
 ROW_LN2_G, ROW_LN2_B,
 ROW_SA_BQ, ROW_SA_BK, ROW_SA_BV, ROW_SA_BO,
 ROW_CA_BQ, ROW_CA_BK, ROW_CA_BV, ROW_CA_BO,
 ROW_FF_B2, ROW_FF_B1) = range(16)
NUM_VEC_ROWS = 16
VEC_COLS = D_FF  # 64 >= D_MODEL


def _layernorm(x, gamma, beta):
    # Annotated-Transformer LayerNorm (unbiased std, divide by std+eps).
    mean = jnp.mean(x, axis=-1, keepdims=True)
    n = x.shape[-1]
    var = jnp.sum((x - mean) ** 2, axis=-1, keepdims=True) / (n - 1)
    std = jnp.sqrt(var)
    return gamma * (x - mean) / (std + EPS) + beta


def _attention_ctx(q, k, v, masks, T, s_len):
    """Multi-head scaled-dot-product attention context (no output projection).

    q: (B*T, D) already scaled by 1/sqrt(d_head); k, v: (B*s_len, D);
    masks: (B, T, s_len).  Static unroll over (batch, head): all slices are
    sublane-aligned rows / small lane ranges, all matmuls are 2-D.
    Returns the concatenated per-head context, shape (B*T, D).
    """
    B = masks.shape[0]
    ctx_rows = []
    for b in range(B):
        qr = q[b * T:(b + 1) * T]
        kr = k[b * s_len:(b + 1) * s_len]
        vr = v[b * s_len:(b + 1) * s_len]
        m = masks[b]                                   # (T, s_len)
        heads = []
        for h in range(N_HEADS):
            sl = slice(h * D_HEAD, (h + 1) * D_HEAD)
            s = jnp.dot(qr[:, sl], kr[:, sl].T,
                        preferred_element_type=jnp.float32)
            s = jnp.where(m > 0, s, jnp.float32(-1e9))
            s = s - jnp.max(s, axis=-1, keepdims=True)
            p = jnp.exp(s)
            inv = pl.reciprocal(jnp.sum(p, axis=-1, keepdims=True), approx=True)
            p = p * inv                                # softmax; dropout = identity
            heads.append(jnp.dot(p, vr[:, sl],
                                 preferred_element_type=jnp.float32))
        ctx_rows.append(jnp.concatenate(heads, axis=-1))   # (T, D)
    return jnp.concatenate(ctx_rows, axis=0)               # (B*T, D)


def decoder_layer_kernel(x_ref, mem_ref, tgt_mask_ref, src_mask_ref, vec_ref,
                         sa_wqkv_ref, sa_wo_ref,
                         ca_wq_ref, ca_wkv_ref, ca_wo_ref,
                         ff_w1_ref, ff_w2_ref,
                         out_ref):
    B, T, _ = tgt_mask_ref.shape
    S = src_mask_ref.shape[2]

    x = x_ref[...]                 # (B*T, D)
    mem = mem_ref[...]             # (B*S, D)
    tgt_mask = tgt_mask_ref[...]   # (B, T, T)
    src_mask = src_mask_ref[...]   # (B, T, S)
    P = vec_ref[...]               # (16, 64) packed biases + LN params

    def vec(row, n=D_MODEL):
        return P[row:row + 1, :n]  # (1, n), broadcasts over rows

    # ---- sublayer 0: self-attention (q = k = v = LN(x)) -------------------
    xn = _layernorm(x, vec(ROW_LN0_G), vec(ROW_LN0_B))
    qkv = jnp.dot(xn, sa_wqkv_ref[...], preferred_element_type=jnp.float32)
    q = (qkv[:, 0:D_MODEL] + vec(ROW_SA_BQ)) * SCALE
    k = qkv[:, D_MODEL:2 * D_MODEL] + vec(ROW_SA_BK)
    v = qkv[:, 2 * D_MODEL:3 * D_MODEL] + vec(ROW_SA_BV)
    ctx = _attention_ctx(q, k, v, tgt_mask, T, T)
    x = x + jnp.dot(ctx, sa_wo_ref[...],
                    preferred_element_type=jnp.float32) + vec(ROW_SA_BO)

    # ---- sublayer 1: src-attention (q = LN(x), k = v = memory) ------------
    xn = _layernorm(x, vec(ROW_LN1_G), vec(ROW_LN1_B))
    q = (jnp.dot(xn, ca_wq_ref[...], preferred_element_type=jnp.float32)
         + vec(ROW_CA_BQ)) * SCALE
    kv = jnp.dot(mem, ca_wkv_ref[...], preferred_element_type=jnp.float32)
    k = kv[:, 0:D_MODEL] + vec(ROW_CA_BK)
    v = kv[:, D_MODEL:2 * D_MODEL] + vec(ROW_CA_BV)
    ctx = _attention_ctx(q, k, v, src_mask, T, S)
    x = x + jnp.dot(ctx, ca_wo_ref[...],
                    preferred_element_type=jnp.float32) + vec(ROW_CA_BO)

    # ---- sublayer 2: position-wise feed-forward ----------------------------
    xn = _layernorm(x, vec(ROW_LN2_G), vec(ROW_LN2_B))
    h = jnp.dot(xn, ff_w1_ref[...], preferred_element_type=jnp.float32) \
        + vec(ROW_FF_B1, D_FF)
    h = jnp.maximum(h, 0.0)
    y = jnp.dot(h, ff_w2_ref[...], preferred_element_type=jnp.float32) \
        + vec(ROW_FF_B2)
    out_ref[...] = x + y           # residual; dropout = identity (eval mode)


def _pack_vectors(p):
    def row32(v):
        v = v.reshape(1, D_MODEL).astype(jnp.float32)
        return jnp.pad(v, ((0, 0), (0, VEC_COLS - D_MODEL)))

    rows = [row32(p[k]) for k in (
        "ln0_g", "ln0_b", "ln1_g", "ln1_b", "ln2_g", "ln2_b",
        "sa_bq", "sa_bk", "sa_bv", "sa_bo",
        "ca_bq", "ca_bk", "ca_bv", "ca_bo",
        "ff_b2")]
    rows.append(p["ff_b1"].reshape(1, D_FF).astype(jnp.float32))
    return jnp.concatenate(rows, axis=0)      # (16, 64)


def _full_spec(shape):
    zeros = (0,) * len(shape)
    return pl.BlockSpec(shape, lambda i, _z=zeros: _z)


def decoder_layer(params, x, memory, src_mask, tgt_mask):
    """Fused DecoderLayer forward: one pallas_call, one grid step for the batch."""
    p = params
    B, T, D = x.shape
    S = memory.shape[1]

    vecs = _pack_vectors(p)
    sa_wqkv = jnp.concatenate([p["sa_wq"], p["sa_wk"], p["sa_wv"]], axis=1)  # (D,3D)
    ca_wkv = jnp.concatenate([p["ca_wk"], p["ca_wv"]], axis=1)               # (D,2D)

    # Flatten batch*seq in the wrapper (free XLA reshape) so every dense op in
    # the kernel is a single 2-D matmul over B*T rows.
    x2 = x.reshape(B * T, D)
    mem2 = memory.reshape(B * S, D)

    in_specs = [
        _full_spec((B * T, D)),                 # x (flattened)
        _full_spec((B * S, D)),                 # memory (flattened)
        _full_spec((B, T, T)),                  # tgt_mask
        _full_spec((B, T, S)),                  # src_mask
        _full_spec((NUM_VEC_ROWS, VEC_COLS)),   # packed biases / LN params
        _full_spec((D, 3 * D)),                 # sa Wqkv
        _full_spec((D, D)),                     # sa Wo
        _full_spec((D, D)),                     # ca Wq
        _full_spec((D, 2 * D)),                 # ca Wkv
        _full_spec((D, D)),                     # ca Wo
        _full_spec((D, D_FF)),                  # ff W1
        _full_spec((D_FF, D)),                  # ff W2
    ]

    out = pl.pallas_call(
        decoder_layer_kernel,
        out_shape=jax.ShapeDtypeStruct((B * T, D), x.dtype),
        grid=(1,),
        in_specs=in_specs,
        out_specs=_full_spec((B * T, D)),
        compiler_params=pltpu.CompilerParams(
            dimension_semantics=("arbitrary",)),
    )(x2, mem2, tgt_mask, src_mask, vecs,
      sa_wqkv, p["sa_wo"], p["ca_wq"], ca_wkv, p["ca_wo"],
      p["ff_w1"], p["ff_w2"])
    return out.reshape(B, T, D)


def init_params(key):
    ks = iter(jax.random.split(key, 32))

    def lin(din, dout):
        w = jax.random.normal(next(ks), (din, dout), jnp.float32) * 0.05
        b = jax.random.normal(next(ks), (1, dout), jnp.float32) * 0.05
        return w, b

    p = {}
    for pre in ("sa", "ca"):
        p[f"{pre}_wq"], p[f"{pre}_bq"] = lin(D_MODEL, D_MODEL)
        p[f"{pre}_wk"], p[f"{pre}_bk"] = lin(D_MODEL, D_MODEL)
        p[f"{pre}_wv"], p[f"{pre}_bv"] = lin(D_MODEL, D_MODEL)
        p[f"{pre}_wo"], p[f"{pre}_bo"] = lin(D_MODEL, D_MODEL)
    p["ff_w1"], p["ff_b1"] = lin(D_MODEL, D_FF)
    p["ff_w2"], p["ff_b2"] = lin(D_FF, D_MODEL)
    for i in range(3):
        p[f"ln{i}_g"] = jnp.ones((1, D_MODEL), jnp.float32)
        p[f"ln{i}_b"] = jnp.zeros((1, D_MODEL), jnp.float32)
    return p


if __name__ == "__main__":
    B, T, S = 2, 8, 8
    key = jax.random.PRNGKey(0)
    kx, km, kp = jax.random.split(key, 3)

    x = jax.random.normal(kx, (B, T, D_MODEL), jnp.float32)
    memory = jax.random.normal(km, (B, S, D_MODEL), jnp.float32)
    # causal target mask, full source mask (1 = attend, 0 = masked)
    tgt_mask = jnp.broadcast_to(jnp.tril(jnp.ones((T, T), jnp.float32)), (B, T, T))
    src_mask = jnp.ones((B, T, S), jnp.float32)

    params = init_params(kp)

    fwd = jax.jit(decoder_layer)
    out = fwd(params, x, memory, src_mask, tgt_mask)
    out = jax.block_until_ready(out)
    assert out.shape == (B, T, D_MODEL)
    # TODO(synk): dropout is stochastic at train time; implemented as identity (eval mode).
    # TODO(synk): on v6e/v7x, bf16 storage/MXU inputs would halve DMA bytes; kept
    # f32 here to preserve reference-level numerics at these tiny shapes.
    print("KERNEL_OK")
</pallas_src>

<mosaic_0001>
module attributes {stable_mosaic.version = 11 : i64} {
  func.func @decoder_layer_kernel(%arg0: i32, %arg1: memref<16x32xf32, #tpu.memory_space<vmem>>, %arg2: memref<16x32xf32, #tpu.memory_space<vmem>>, %arg3: memref<2x8x8xf32, #tpu.memory_space<vmem>>, %arg4: memref<2x8x8xf32, #tpu.memory_space<vmem>>, %arg5: memref<16x64xf32, #tpu.memory_space<vmem>>, %arg6: memref<32x96xf32, #tpu.memory_space<vmem>>, %arg7: memref<32x32xf32, #tpu.memory_space<vmem>>, %arg8: memref<32x32xf32, #tpu.memory_space<vmem>>, %arg9: memref<32x64xf32, #tpu.memory_space<vmem>>, %arg10: memref<32x32xf32, #tpu.memory_space<vmem>>, %arg11: memref<32x64xf32, #tpu.memory_space<vmem>>, %arg12: memref<64x32xf32, #tpu.memory_space<vmem>>, %arg13: memref<16x32xf32, #tpu.memory_space<vmem>>) attributes {dimension_semantics = [#tpu.dimension_semantics<arbitrary>], iteration_bounds = array<i64: 1>, scalar_prefetch = 0 : i64, scratch_operands = 0 : i64, tpu.core_type = #tpu.core_type<tc>, window_params = [{pipeline_mode = #tpu.pipeline_mode<synchronous>, transform_indices = @transform_0, window_bounds = array<i64: 16, 32>}, {pipeline_mode = #tpu.pipeline_mode<synchronous>, transform_indices = @transform_1, window_bounds = array<i64: 16, 32>}, {pipeline_mode = #tpu.pipeline_mode<synchronous>, transform_indices = @transform_2, window_bounds = array<i64: 2, 8, 8>}, {pipeline_mode = #tpu.pipeline_mode<synchronous>, transform_indices = @transform_3, window_bounds = array<i64: 2, 8, 8>}, {pipeline_mode = #tpu.pipeline_mode<synchronous>, transform_indices = @transform_4, window_bounds = array<i64: 16, 64>}, {pipeline_mode = #tpu.pipeline_mode<synchronous>, transform_indices = @transform_5, window_bounds = array<i64: 32, 96>}, {pipeline_mode = #tpu.pipeline_mode<synchronous>, transform_indices = @transform_6, window_bounds = array<i64: 32, 32>}, {pipeline_mode = #tpu.pipeline_mode<synchronous>, transform_indices = @transform_7, window_bounds = array<i64: 32, 32>}, {pipeline_mode = #tpu.pipeline_mode<synchronous>, transform_indices = @transform_8, window_bounds = array<i64: 32, 64>}, {pipeline_mode = #tpu.pipeline_mode<synchronous>, transform_indices = @transform_9, window_bounds = array<i64: 32, 32>}, {pipeline_mode = #tpu.pipeline_mode<synchronous>, transform_indices = @transform_10, window_bounds = array<i64: 32, 64>}, {pipeline_mode = #tpu.pipeline_mode<synchronous>, transform_indices = @transform_11, window_bounds = array<i64: 64, 32>}, {pipeline_mode = #tpu.pipeline_mode<synchronous>, transform_indices = @transform_12, window_bounds = array<i64: 16, 32>}]} {
    %c0 = arith.constant 0 : index
    %c0_0 = arith.constant 0 : index
    %0 = vector.load %arg1[%c0, %c0_0] : memref<16x32xf32, #tpu.memory_space<vmem>>, vector<16x32xf32>
    %c0_1 = arith.constant 0 : index
    %c0_2 = arith.constant 0 : index
    %1 = vector.load %arg2[%c0_1, %c0_2] : memref<16x32xf32, #tpu.memory_space<vmem>>, vector<16x32xf32>
    %c0_3 = arith.constant 0 : index
    %c0_4 = arith.constant 0 : index
    %c0_5 = arith.constant 0 : index
    %2 = vector.load %arg3[%c0_3, %c0_4, %c0_5] : memref<2x8x8xf32, #tpu.memory_space<vmem>>, vector<2x8x8xf32>
    %c0_6 = arith.constant 0 : index
    %c0_7 = arith.constant 0 : index
    %c0_8 = arith.constant 0 : index
    %3 = vector.load %arg4[%c0_6, %c0_7, %c0_8] : memref<2x8x8xf32, #tpu.memory_space<vmem>>, vector<2x8x8xf32>
    %c0_9 = arith.constant 0 : index
    %c0_10 = arith.constant 0 : index
    %4 = vector.load %arg5[%c0_9, %c0_10] : memref<16x64xf32, #tpu.memory_space<vmem>>, vector<16x64xf32>
    %5 = vector.extract_strided_slice %4 {offsets = [0, 0], sizes = [1, 32], strides = [1, 1]} : vector<16x64xf32> to vector<1x32xf32>
    %6 = vector.extract_strided_slice %4 {offsets = [1, 0], sizes = [1, 32], strides = [1, 1]} : vector<16x64xf32> to vector<1x32xf32>
    %cst = arith.constant dense<0.000000e+00> : vector<16xf32>
    %7 = vector.multi_reduction <add>, %0, %cst [1] : vector<16x32xf32> to vector<16xf32>
    %8 = vector.shape_cast %7 : vector<16xf32> to vector<16x1xf32>
    %cst_11 = arith.constant 3.200000e+01 : f32
    %9 = vector.broadcast %cst_11 : f32 to vector<16x1xf32>
    %10 = arith.divf %8, %9 : vector<16x1xf32>
    %11 = vector.broadcast %10 : vector<16x1xf32> to vector<16x32xf32>
    %12 = arith.subf %0, %11 : vector<16x32xf32>
    %13 = arith.mulf %12, %12 : vector<16x32xf32>
    %cst_12 = arith.constant dense<0.000000e+00> : vector<16xf32>
    %14 = vector.multi_reduction <add>, %13, %cst_12 [1] : vector<16x32xf32> to vector<16xf32>
    %15 = vector.shape_cast %14 : vector<16xf32> to vector<16x1xf32>
    %cst_13 = arith.constant 3.100000e+01 : f32
    %16 = vector.broadcast %cst_13 : f32 to vector<16x1xf32>
    %17 = arith.divf %15, %16 : vector<16x1xf32>
    %18 = math.sqrt %17 : vector<16x1xf32>
    %19 = vector.broadcast %10 : vector<16x1xf32> to vector<16x32xf32>
    %20 = arith.subf %0, %19 : vector<16x32xf32>
    %21 = vector.broadcast %5 : vector<1x32xf32> to vector<16x32xf32>
    %22 = arith.mulf %21, %20 : vector<16x32xf32>
    %cst_14 = arith.constant 9.99999997E-7 : f32
    %23 = vector.broadcast %cst_14 : f32 to vector<16x1xf32>
    %24 = arith.addf %18, %23 : vector<16x1xf32>
    %25 = vector.broadcast %24 : vector<16x1xf32> to vector<16x32xf32>
    %26 = arith.divf %22, %25 : vector<16x32xf32>
    %27 = vector.broadcast %6 : vector<1x32xf32> to vector<16x32xf32>
    %28 = arith.addf %26, %27 : vector<16x32xf32>
    %c0_15 = arith.constant 0 : index
    %c0_16 = arith.constant 0 : index
    %29 = vector.load %arg6[%c0_15, %c0_16] : memref<32x96xf32, #tpu.memory_space<vmem>>, vector<32x96xf32>
    %cst_17 = arith.constant dense<0.000000e+00> : vector<16x96xf32>
    %30 = tpu.matmul %28, %29, %cst_17 {dimension_numbers = #tpu.dot_dimension_numbers<[1], [0], [0], [1], [0, 0, 1, 1], [], []>} : vector<16x32xf32>, vector<32x96xf32>, vector<16x96xf32> -> vector<16x96xf32>
    %31 = vector.extract_strided_slice %30 {offsets = [0, 0], sizes = [16, 32], strides = [1, 1]} : vector<16x96xf32> to vector<16x32xf32>
    %32 = vector.extract_strided_slice %4 {offsets = [6, 0], sizes = [1, 32], strides = [1, 1]} : vector<16x64xf32> to vector<1x32xf32>
    %33 = vector.broadcast %32 : vector<1x32xf32> to vector<16x32xf32>
    %34 = arith.addf %31, %33 : vector<16x32xf32>
    %cst_18 = arith.constant 0.353553385 : f32
    %35 = vector.broadcast %cst_18 : f32 to vector<16x32xf32>
    %36 = arith.mulf %34, %35 : vector<16x32xf32>
    %37 = vector.extract_strided_slice %30 {offsets = [0, 32], sizes = [16, 32], strides = [1, 1]} : vector<16x96xf32> to vector<16x32xf32>
    %38 = vector.extract_strided_slice %4 {offsets = [7, 0], sizes = [1, 32], strides = [1, 1]} : vector<16x64xf32> to vector<1x32xf32>
    %39 = vector.broadcast %38 : vector<1x32xf32> to vector<16x32xf32>
    %40 = arith.addf %37, %39 : vector<16x32xf32>
    %41 = vector.extract_strided_slice %30 {offsets = [0, 64], sizes = [16, 32], strides = [1, 1]} : vector<16x96xf32> to vector<16x32xf32>
    %42 = vector.extract_strided_slice %4 {offsets = [8, 0], sizes = [1, 32], strides = [1, 1]} : vector<16x64xf32> to vector<1x32xf32>
    %43 = vector.broadcast %42 : vector<1x32xf32> to vector<16x32xf32>
    %44 = arith.addf %41, %43 : vector<16x32xf32>
    %45 = vector.extract_strided_slice %36 {offsets = [0, 0], sizes = [8, 32], strides = [1, 1]} : vector<16x32xf32> to vector<8x32xf32>
    %46 = vector.extract_strided_slice %40 {offsets = [0, 0], sizes = [8, 32], strides = [1, 1]} : vector<16x32xf32> to vector<8x32xf32>
    %47 = vector.extract_strided_slice %44 {offsets = [0, 0], sizes = [8, 32], strides = [1, 1]} : vector<16x32xf32> to vector<8x32xf32>
    %48 = vector.extract_strided_slice %2 {offsets = [0, 0, 0], sizes = [1, 8, 8], strides = [1, 1, 1]} : vector<2x8x8xf32> to vector<1x8x8xf32>
    %49 = vector.shape_cast %48 : vector<1x8x8xf32> to vector<8x8xf32>
    %50 = vector.extract_strided_slice %45 {offsets = [0, 0], sizes = [8, 8], strides = [1, 1]} : vector<8x32xf32> to vector<8x8xf32>
    %51 = vector.extract_strided_slice %46 {offsets = [0, 0], sizes = [8, 8], strides = [1, 1]} : vector<8x32xf32> to vector<8x8xf32>
    %52 = tpu.transpose %51, [1, 0] : vector<8x8xf32> -> vector<8x8xf32>
    %cst_19 = arith.constant dense<0.000000e+00> : vector<8x8xf32>
    %53 = tpu.matmul %50, %52, %cst_19 {dimension_numbers = #tpu.dot_dimension_numbers<[1], [0], [0], [1], [0, 0, 1, 1], [], []>} : vector<8x8xf32>, vector<8x8xf32>, vector<8x8xf32> -> vector<8x8xf32>
    %cst_20 = arith.constant 0.000000e+00 : f32
    %54 = vector.broadcast %cst_20 : f32 to vector<8x8xf32>
    %55 = arith.cmpf ogt, %49, %54 : vector<8x8xf32>
    %cst_21 = arith.constant -1.000000e+09 : f32
    %56 = vector.broadcast %cst_21 : f32 to vector<8x8xf32>
    %57 = arith.select %55, %53, %56 : vector<8x8xi1>, vector<8x8xf32>
    %cst_22 = arith.constant dense<0xFF800000> : vector<8xf32>
    %58 = vector.multi_reduction <maximumf>, %57, %cst_22 [1] : vector<8x8xf32> to vector<8xf32>
    %59 = vector.shape_cast %58 : vector<8xf32> to vector<8x1xf32>
    %60 = vector.broadcast %59 : vector<8x1xf32> to vector<8x8xf32>
    %61 = arith.subf %57, %60 : vector<8x8xf32>
    %62 = math.exp %61 : vector<8x8xf32>
    %cst_23 = arith.constant dense<0.000000e+00> : vector<8xf32>
    %63 = vector.multi_reduction <add>, %62, %cst_23 [1] : vector<8x8xf32> to vector<8xf32>
    %64 = vector.shape_cast %63 : vector<8xf32> to vector<8x1xf32>
    %65 = tpu.reciprocal %64 {approx = true} : vector<8x1xf32> -> vector<8x1xf32>
    %66 = vector.broadcast %65 : vector<8x1xf32> to vector<8x8xf32>
    %67 = arith.mulf %62, %66 : vector<8x8xf32>
    %68 = vector.extract_strided_slice %47 {offsets = [0, 0], sizes = [8, 8], strides = [1, 1]} : vector<8x32xf32> to vector<8x8xf32>
    %cst_24 = arith.constant dense<0.000000e+00> : vector<8x8xf32>
    %69 = tpu.matmul %67, %68, %cst_24 {dimension_numbers = #tpu.dot_dimension_numbers<[1], [0], [0], [1], [0, 0, 1, 1], [], []>} : vector<8x8xf32>, vector<8x8xf32>, vector<8x8xf32> -> vector<8x8xf32>
    %70 = vector.extract_strided_slice %45 {offsets = [0, 8], sizes = [8, 8], strides = [1, 1]} : vector<8x32xf32> to vector<8x8xf32>
    %71 = vector.extract_strided_slice %46 {offsets = [0, 8], sizes = [8, 8], strides = [1, 1]} : vector<8x32xf32> to vector<8x8xf32>
    %72 = tpu.transpose %71, [1, 0] : vector<8x8xf32> -> vector<8x8xf32>
    %cst_25 = arith.constant dense<0.000000e+00> : vector<8x8xf32>
    %73 = tpu.matmul %70, %72, %cst_25 {dimension_numbers = #tpu.dot_dimension_numbers<[1], [0], [0], [1], [0, 0, 1, 1], [], []>} : vector<8x8xf32>, vector<8x8xf32>, vector<8x8xf32> -> vector<8x8xf32>
    %cst_26 = arith.constant 0.000000e+00 : f32
    %74 = vector.broadcast %cst_26 : f32 to vector<8x8xf32>
    %75 = arith.cmpf ogt, %49, %74 : vector<8x8xf32>
    %cst_27 = arith.constant -1.000000e+09 : f32
    %76 = vector.broadcast %cst_27 : f32 to vector<8x8xf32>
    %77 = arith.select %75, %73, %76 : vector<8x8xi1>, vector<8x8xf32>
    %cst_28 = arith.constant dense<0xFF800000> : vector<8xf32>
    %78 = vector.multi_reduction <maximumf>, %77, %cst_28 [1] : vector<8x8xf32> to vector<8xf32>
    %79 = vector.shape_cast %78 : vector<8xf32> to vector<8x1xf32>
    %80 = vector.broadcast %79 : vector<8x1xf32> to vector<8x8xf32>
    %81 = arith.subf %77, %80 : vector<8x8xf32>
    %82 = math.exp %81 : vector<8x8xf32>
    %cst_29 = arith.constant dense<0.000000e+00> : vector<8xf32>
    %83 = vector.multi_reduction <add>, %82, %cst_29 [1] : vector<8x8xf32> to vector<8xf32>
    %84 = vector.shape_cast %83 : vector<8xf32> to vector<8x1xf32>
    %85 = tpu.reciprocal %84 {approx = true} : vector<8x1xf32> -> vector<8x1xf32>
    %86 = vector.broadcast %85 : vector<8x1xf32> to vector<8x8xf32>
    %87 = arith.mulf %82, %86 : vector<8x8xf32>
    %88 = vector.extract_strided_slice %47 {offsets = [0, 8], sizes = [8, 8], strides = [1, 1]} : vector<8x32xf32> to vector<8x8xf32>
    %cst_30 = arith.constant dense<0.000000e+00> : vector<8x8xf32>
    %89 = tpu.matmul %87, %88, %cst_30 {dimension_numbers = #tpu.dot_dimension_numbers<[1], [0], [0], [1], [0, 0, 1, 1], [], []>} : vector<8x8xf32>, vector<8x8xf32>, vector<8x8xf32> -> vector<8x8xf32>
    %90 = vector.extract_strided_slice %45 {offsets = [0, 16], sizes = [8, 8], strides = [1, 1]} : vector<8x32xf32> to vector<8x8xf32>
    %91 = vector.extract_strided_slice %46 {offsets = [0, 16], sizes = [8, 8], strides = [1, 1]} : vector<8x32xf32> to vector<8x8xf32>
    %92 = tpu.transpose %91, [1, 0] : vector<8x8xf32> -> vector<8x8xf32>
    %cst_31 = arith.constant dense<0.000000e+00> : vector<8x8xf32>
    %93 = tpu.matmul %90, %92, %cst_31 {dimension_numbers = #tpu.dot_dimension_numbers<[1], [0], [0], [1], [0, 0, 1, 1], [], []>} : vector<8x8xf32>, vector<8x8xf32>, vector<8x8xf32> -> vector<8x8xf32>
    %cst_32 = arith.constant 0.000000e+00 : f32
    %94 = vector.broadcast %cst_32 : f32 to vector<8x8xf32>
    %95 = arith.cmpf ogt, %49, %94 : vector<8x8xf32>
    %cst_33 = arith.constant -1.000000e+09 : f32
    %96 = vector.broadcast %cst_33 : f32 to vector<8x8xf32>
    %97 = arith.select %95, %93, %96 : vector<8x8xi1>, vector<8x8xf32>
    %cst_34 = arith.constant dense<0xFF800000> : vector<8xf32>
    %98 = vector.multi_reduction <maximumf>, %97, %cst_34 [1] : vector<8x8xf32> to vector<8xf32>
    %99 = vector.shape_cast %98 : vector<8xf32> to vector<8x1xf32>
    %100 = vector.broadcast %99 : vector<8x1xf32> to vector<8x8xf32>
    %101 = arith.subf %97, %100 : vector<8x8xf32>
    %102 = math.exp %101 : vector<8x8xf32>
    %cst_35 = arith.constant dense<0.000000e+00> : vector<8xf32>
    %103 = vector.multi_reduction <add>, %102, %cst_35 [1] : vector<8x8xf32> to vector<8xf32>
    %104 = vector.shape_cast %103 : vector<8xf32> to vector<8x1xf32>
    %105 = tpu.reciprocal %104 {approx = true} : vector<8x1xf32> -> vector<8x1xf32>
    %106 = vector.broadcast %105 : vector<8x1xf32> to vector<8x8xf32>
    %107 = arith.mulf %102, %106 : vector<8x8xf32>
    %108 = vector.extract_strided_slice %47 {offsets = [0, 16], sizes = [8, 8], strides = [1, 1]} : vector<8x32xf32> to vector<8x8xf32>
    %cst_36 = arith.constant dense<0.000000e+00> : vector<8x8xf32>
    %109 = tpu.matmul %107, %108, %cst_36 {dimension_numbers = #tpu.dot_dimension_numbers<[1], [0], [0], [1], [0, 0, 1, 1], [], []>} : vector<8x8xf32>, vector<8x8xf32>, vector<8x8xf32> -> vector<8x8xf32>
    %110 = vector.extract_strided_slice %45 {offsets = [0, 24], sizes = [8, 8], strides = [1, 1]} : vector<8x32xf32> to vector<8x8xf32>
    %111 = vector.extract_strided_slice %46 {offsets = [0, 24], sizes = [8, 8], strides = [1, 1]} : vector<8x32xf32> to vector<8x8xf32>
    %112 = tpu.transpose %111, [1, 0] : vector<8x8xf32> -> vector<8x8xf32>
    %cst_37 = arith.constant dense<0.000000e+00> : vector<8x8xf32>
    %113 = tpu.matmul %110, %112, %cst_37 {dimension_numbers = #tpu.dot_dimension_numbers<[1], [0], [0], [1], [0, 0, 1, 1], [], []>} : vector<8x8xf32>, vector<8x8xf32>, vector<8x8xf32> -> vector<8x8xf32>
    %cst_38 = arith.constant 0.000000e+00 : f32
    %114 = vector.broadcast %cst_38 : f32 to vector<8x8xf32>
    %115 = arith.cmpf ogt, %49, %114 : vector<8x8xf32>
    %cst_39 = arith.constant -1.000000e+09 : f32
    %116 = vector.broadcast %cst_39 : f32 to vector<8x8xf32>
    %117 = arith.select %115, %113, %116 : vector<8x8xi1>, vector<8x8xf32>
    %cst_40 = arith.constant dense<0xFF800000> : vector<8xf32>
    %118 = vector.multi_reduction <maximumf>, %117, %cst_40 [1] : vector<8x8xf32> to vector<8xf32>
    %119 = vector.shape_cast %118 : vector<8xf32> to vector<8x1xf32>
    %120 = vector.broadcast %119 : vector<8x1xf32> to vector<8x8xf32>
    %121 = arith.subf %117, %120 : vector<8x8xf32>
    %122 = math.exp %121 : vector<8x8xf32>
    %cst_41 = arith.constant dense<0.000000e+00> : vector<8xf32>
    %123 = vector.multi_reduction <add>, %122, %cst_41 [1] : vector<8x8xf32> to vector<8xf32>
    %124 = vector.shape_cast %123 : vector<8xf32> to vector<8x1xf32>
    %125 = tpu.reciprocal %124 {approx = true} : vector<8x1xf32> -> vector<8x1xf32>
    %126 = vector.broadcast %125 : vector<8x1xf32> to vector<8x8xf32>
    %127 = arith.mulf %122, %126 : vector<8x8xf32>
    %128 = vector.extract_strided_slice %47 {offsets = [0, 24], sizes = [8, 8], strides = [1, 1]} : vector<8x32xf32> to vector<8x8xf32>
    %cst_42 = arith.constant dense<0.000000e+00> : vector<8x8xf32>
    %129 = tpu.matmul %127, %128, %cst_42 {dimension_numbers = #tpu.dot_dimension_numbers<[1], [0], [0], [1], [0, 0, 1, 1], [], []>} : vector<8x8xf32>, vector<8x8xf32>, vector<8x8xf32> -> vector<8x8xf32>
    %130 = tpu.concatenate %69, %89, %109, %129 in 1 : vector<8x8xf32>, vector<8x8xf32>, vector<8x8xf32>, vector<8x8xf32> -> vector<8x32xf32>
    %131 = vector.extract_strided_slice %36 {offsets = [8, 0], sizes = [8, 32], strides = [1, 1]} : vector<16x32xf32> to vector<8x32xf32>
    %132 = vector.extract_strided_slice %40 {offsets = [8, 0], sizes = [8, 32], strides = [1, 1]} : vector<16x32xf32> to vector<8x32xf32>
    %133 = vector.extract_strided_slice %44 {offsets = [8, 0], sizes = [8, 32], strides = [1, 1]} : vector<16x32xf32> to vector<8x32xf32>
    %134 = vector.extract_strided_slice %2 {offsets = [1, 0, 0], sizes = [1, 8, 8], strides = [1, 1, 1]} : vector<2x8x8xf32> to vector<1x8x8xf32>
    %135 = vector.shape_cast %134 : vector<1x8x8xf32> to vector<8x8xf32>
    %136 = vector.extract_strided_slice %131 {offsets = [0, 0], sizes = [8, 8], strides = [1, 1]} : vector<8x32xf32> to vector<8x8xf32>
    %137 = vector.extract_strided_slice %132 {offsets = [0, 0], sizes = [8, 8], strides = [1, 1]} : vector<8x32xf32> to vector<8x8xf32>
    %138 = tpu.transpose %137, [1, 0] : vector<8x8xf32> -> vector<8x8xf32>
    %cst_43 = arith.constant dense<0.000000e+00> : vector<8x8xf32>
    %139 = tpu.matmul %136, %138, %cst_43 {dimension_numbers = #tpu.dot_dimension_numbers<[1], [0], [0], [1], [0, 0, 1, 1], [], []>} : vector<8x8xf32>, vector<8x8xf32>, vector<8x8xf32> -> vector<8x8xf32>
    %cst_44 = arith.constant 0.000000e+00 : f32
    %140 = vector.broadcast %cst_44 : f32 to vector<8x8xf32>
    %141 = arith.cmpf ogt, %135, %140 : vector<8x8xf32>
    %cst_45 = arith.constant -1.000000e+09 : f32
    %142 = vector.broadcast %cst_45 : f32 to vector<8x8xf32>
    %143 = arith.select %141, %139, %142 : vector<8x8xi1>, vector<8x8xf32>
    %cst_46 = arith.constant dense<0xFF800000> : vector<8xf32>
    %144 = vector.multi_reduction <maximumf>, %143, %cst_46 [1] : vector<8x8xf32> to vector<8xf32>
    %145 = vector.shape_cast %144 : vector<8xf32> to vector<8x1xf32>
    %146 = vector.broadcast %145 : vector<8x1xf32> to vector<8x8xf32>
    %147 = arith.subf %143, %146 : vector<8x8xf32>
    %148 = math.exp %147 : vector<8x8xf32>
    %cst_47 = arith.constant dense<0.000000e+00> : vector<8xf32>
    %149 = vector.multi_reduction <add>, %148, %cst_47 [1] : vector<8x8xf32> to vector<8xf32>
    %150 = vector.shape_cast %149 : vector<8xf32> to vector<8x1xf32>
    %151 = tpu.reciprocal %150 {approx = true} : vector<8x1xf32> -> vector<8x1xf32>
    %152 = vector.broadcast %151 : vector<8x1xf32> to vector<8x8xf32>
    %153 = arith.mulf %148, %152 : vector<8x8xf32>
    %154 = vector.extract_strided_slice %133 {offsets = [0, 0], sizes = [8, 8], strides = [1, 1]} : vector<8x32xf32> to vector<8x8xf32>
    %cst_48 = arith.constant dense<0.000000e+00> : vector<8x8xf32>
    %155 = tpu.matmul %153, %154, %cst_48 {dimension_numbers = #tpu.dot_dimension_numbers<[1], [0], [0], [1], [0, 0, 1, 1], [], []>} : vector<8x8xf32>, vector<8x8xf32>, vector<8x8xf32> -> vector<8x8xf32>
    %156 = vector.extract_strided_slice %131 {offsets = [0, 8], sizes = [8, 8], strides = [1, 1]} : vector<8x32xf32> to vector<8x8xf32>
    %157 = vector.extract_strided_slice %132 {offsets = [0, 8], sizes = [8, 8], strides = [1, 1]} : vector<8x32xf32> to vector<8x8xf32>
    %158 = tpu.transpose %157, [1, 0] : vector<8x8xf32> -> vector<8x8xf32>
    %cst_49 = arith.constant dense<0.000000e+00> : vector<8x8xf32>
    %159 = tpu.matmul %156, %158, %cst_49 {dimension_numbers = #tpu.dot_dimension_numbers<[1], [0], [0], [1], [0, 0, 1, 1], [], []>} : vector<8x8xf32>, vector<8x8xf32>, vector<8x8xf32> -> vector<8x8xf32>
    %cst_50 = arith.constant 0.000000e+00 : f32
    %160 = vector.broadcast %cst_50 : f32 to vector<8x8xf32>
    %161 = arith.cmpf ogt, %135, %160 : vector<8x8xf32>
    %cst_51 = arith.constant -1.000000e+09 : f32
    %162 = vector.broadcast %cst_51 : f32 to vector<8x8xf32>
    %163 = arith.select %161, %159, %162 : vector<8x8xi1>, vector<8x8xf32>
    %cst_52 = arith.constant dense<0xFF800000> : vector<8xf32>
    %164 = vector.multi_reduction <maximumf>, %163, %cst_52 [1] : vector<8x8xf32> to vector<8xf32>
    %165 = vector.shape_cast %164 : vector<8xf32> to vector<8x1xf32>
    %166 = vector.broadcast %165 : vector<8x1xf32> to vector<8x8xf32>
    %167 = arith.subf %163, %166 : vector<8x8xf32>
    %168 = math.exp %167 : vector<8x8xf32>
    %cst_53 = arith.constant dense<0.000000e+00> : vector<8xf32>
    %169 = vector.multi_reduction <add>, %168, %cst_53 [1] : vector<8x8xf32> to vector<8xf32>
    %170 = vector.shape_cast %169 : vector<8xf32> to vector<8x1xf32>
    %171 = tpu.reciprocal %170 {approx = true} : vector<8x1xf32> -> vector<8x1xf32>
    %172 = vector.broadcast %171 : vector<8x1xf32> to vector<8x8xf32>
    %173 = arith.mulf %168, %172 : vector<8x8xf32>
    %174 = vector.extract_strided_slice %133 {offsets = [0, 8], sizes = [8, 8], strides = [1, 1]} : vector<8x32xf32> to vector<8x8xf32>
    %cst_54 = arith.constant dense<0.000000e+00> : vector<8x8xf32>
    %175 = tpu.matmul %173, %174, %cst_54 {dimension_numbers = #tpu.dot_dimension_numbers<[1], [0], [0], [1], [0, 0, 1, 1], [], []>} : vector<8x8xf32>, vector<8x8xf32>, vector<8x8xf32> -> vector<8x8xf32>
    %176 = vector.extract_strided_slice %131 {offsets = [0, 16], sizes = [8, 8], strides = [1, 1]} : vector<8x32xf32> to vector<8x8xf32>
    %177 = vector.extract_strided_slice %132 {offsets = [0, 16], sizes = [8, 8], strides = [1, 1]} : vector<8x32xf32> to vector<8x8xf32>
    %178 = tpu.transpose %177, [1, 0] : vector<8x8xf32> -> vector<8x8xf32>
    %cst_55 = arith.constant dense<0.000000e+00> : vector<8x8xf32>
    %179 = tpu.matmul %176, %178, %cst_55 {dimension_numbers = #tpu.dot_dimension_numbers<[1], [0], [0], [1], [0, 0, 1, 1], [], []>} : vector<8x8xf32>, vector<8x8xf32>, vector<8x8xf32> -> vector<8x8xf32>
    %cst_56 = arith.constant 0.000000e+00 : f32
    %180 = vector.broadcast %cst_56 : f32 to vector<8x8xf32>
    %181 = arith.cmpf ogt, %135, %180 : vector<8x8xf32>
    %cst_57 = arith.constant -1.000000e+09 : f32
    %182 = vector.broadcast %cst_57 : f32 to vector<8x8xf32>
    %183 = arith.select %181, %179, %182 : vector<8x8xi1>, vector<8x8xf32>
    %cst_58 = arith.constant dense<0xFF800000> : vector<8xf32>
    %184 = vector.multi_reduction <maximumf>, %183, %cst_58 [1] : vector<8x8xf32> to vector<8xf32>
    %185 = vector.shape_cast %184 : vector<8xf32> to vector<8x1xf32>
    %186 = vector.broadcast %185 : vector<8x1xf32> to vector<8x8xf32>
    %187 = arith.subf %183, %186 : vector<8x8xf32>
    %188 = math.exp %187 : vector<8x8xf32>
    %cst_59 = arith.constant dense<0.000000e+00> : vector<8xf32>
    %189 = vector.multi_reduction <add>, %188, %cst_59 [1] : vector<8x8xf32> to vector<8xf32>
    %190 = vector.shape_cast %189 : vector<8xf32> to vector<8x1xf32>
    %191 = tpu.reciprocal %190 {approx = true} : vector<8x1xf32> -> vector<8x1xf32>
    %192 = vector.broadcast %191 : vector<8x1xf32> to vector<8x8xf32>
    %193 = arith.mulf %188, %192 : vector<8x8xf32>
    %194 = vector.extract_strided_slice %133 {offsets = [0, 16], sizes = [8, 8], strides = [1, 1]} : vector<8x32xf32> to vector<8x8xf32>
    %cst_60 = arith.constant dense<0.000000e+00> : vector<8x8xf32>
    %195 = tpu.matmul %193, %194, %cst_60 {dimension_numbers = #tpu.dot_dimension_numbers<[1], [0], [0], [1], [0, 0, 1, 1], [], []>} : vector<8x8xf32>, vector<8x8xf32>, vector<8x8xf32> -> vector<8x8xf32>
    %196 = vector.extract_strided_slice %131 {offsets = [0, 24], sizes = [8, 8], strides = [1, 1]} : vector<8x32xf32> to vector<8x8xf32>
    %197 = vector.extract_strided_slice %132 {offsets = [0, 24], sizes = [8, 8], strides = [1, 1]} : vector<8x32xf32> to vector<8x8xf32>
    %198 = tpu.transpose %197, [1, 0] : vector<8x8xf32> -> vector<8x8xf32>
    %cst_61 = arith.constant dense<0.000000e+00> : vector<8x8xf32>
    %199 = tpu.matmul %196, %198, %cst_61 {dimension_numbers = #tpu.dot_dimension_numbers<[1], [0], [0], [1], [0, 0, 1, 1], [], []>} : vector<8x8xf32>, vector<8x8xf32>, vector<8x8xf32> -> vector<8x8xf32>
    %cst_62 = arith.constant 0.000000e+00 : f32
    %200 = vector.broadcast %cst_62 : f32 to vector<8x8xf32>
    %201 = arith.cmpf ogt, %135, %200 : vector<8x8xf32>
    %cst_63 = arith.constant -1.000000e+09 : f32
    %202 = vector.broadcast %cst_63 : f32 to vector<8x8xf32>
    %203 = arith.select %201, %199, %202 : vector<8x8xi1>, vector<8x8xf32>
    %cst_64 = arith.constant dense<0xFF800000> : vector<8xf32>
    %204 = vector.multi_reduction <maximumf>, %203, %cst_64 [1] : vector<8x8xf32> to vector<8xf32>
    %205 = vector.shape_cast %204 : vector<8xf32> to vector<8x1xf32>
    %206 = vector.broadcast %205 : vector<8x1xf32> to vector<8x8xf32>
    %207 = arith.subf %203, %206 : vector<8x8xf32>
    %208 = math.exp %207 : vector<8x8xf32>
    %cst_65 = arith.constant dense<0.000000e+00> : vector<8xf32>
    %209 = vector.multi_reduction <add>, %208, %cst_65 [1] : vector<8x8xf32> to vector<8xf32>
    %210 = vector.shape_cast %209 : vector<8xf32> to vector<8x1xf32>
    %211 = tpu.reciprocal %210 {approx = true} : vector<8x1xf32> -> vector<8x1xf32>
    %212 = vector.broadcast %211 : vector<8x1xf32> to vector<8x8xf32>
    %213 = arith.mulf %208, %212 : vector<8x8xf32>
    %214 = vector.extract_strided_slice %133 {offsets = [0, 24], sizes = [8, 8], strides = [1, 1]} : vector<8x32xf32> to vector<8x8xf32>
    %cst_66 = arith.constant dense<0.000000e+00> : vector<8x8xf32>
    %215 = tpu.matmul %213, %214, %cst_66 {dimension_numbers = #tpu.dot_dimension_numbers<[1], [0], [0], [1], [0, 0, 1, 1], [], []>} : vector<8x8xf32>, vector<8x8xf32>, vector<8x8xf32> -> vector<8x8xf32>
    %216 = tpu.concatenate %155, %175, %195, %215 in 1 : vector<8x8xf32>, vector<8x8xf32>, vector<8x8xf32>, vector<8x8xf32> -> vector<8x32xf32>
    %217 = tpu.concatenate %130, %216 in 0 : vector<8x32xf32>, vector<8x32xf32> -> vector<16x32xf32>
    %c0_67 = arith.constant 0 : index
    %c0_68 = arith.constant 0 : index
    %218 = vector.load %arg7[%c0_67, %c0_68] : memref<32x32xf32, #tpu.memory_space<vmem>>, vector<32x32xf32>
    %cst_69 = arith.constant dense<0.000000e+00> : vector<16x32xf32>
    %219 = tpu.matmul %217, %218, %cst_69 {dimension_numbers = #tpu.dot_dimension_numbers<[1], [0], [0], [1], [0, 0, 1, 1], [], []>} : vector<16x32xf32>, vector<32x32xf32>, vector<16x32xf32> -> vector<16x32xf32>
    %220 = arith.addf %0, %219 : vector<16x32xf32>
    %221 = vector.extract_strided_slice %4 {offsets = [9, 0], sizes = [1, 32], strides = [1, 1]} : vector<16x64xf32> to vector<1x32xf32>
    %222 = vector.broadcast %221 : vector<1x32xf32> to vector<16x32xf32>
    %223 = arith.addf %220, %222 : vector<16x32xf32>
    %224 = vector.extract_strided_slice %4 {offsets = [2, 0], sizes = [1, 32], strides = [1, 1]} : vector<16x64xf32> to vector<1x32xf32>
    %225 = vector.extract_strided_slice %4 {offsets = [3, 0], sizes = [1, 32], strides = [1, 1]} : vector<16x64xf32> to vector<1x32xf32>
    %cst_70 = arith.constant dense<0.000000e+00> : vector<16xf32>
    %226 = vector.multi_reduction <add>, %223, %cst_70 [1] : vector<16x32xf32> to vector<16xf32>
    %227 = vector.shape_cast %226 : vector<16xf32> to vector<16x1xf32>
    %cst_71 = arith.constant 3.200000e+01 : f32
    %228 = vector.broadcast %cst_71 : f32 to vector<16x1xf32>
    %229 = arith.divf %227, %228 : vector<16x1xf32>
    %230 = vector.broadcast %229 : vector<16x1xf32> to vector<16x32xf32>
    %231 = arith.subf %223, %230 : vector<16x32xf32>
    %232 = arith.mulf %231, %231 : vector<16x32xf32>
    %cst_72 = arith.constant dense<0.000000e+00> : vector<16xf32>
    %233 = vector.multi_reduction <add>, %232, %cst_72 [1] : vector<16x32xf32> to vector<16xf32>
    %234 = vector.shape_cast %233 : vector<16xf32> to vector<16x1xf32>
    %cst_73 = arith.constant 3.100000e+01 : f32
    %235 = vector.broadcast %cst_73 : f32 to vector<16x1xf32>
    %236 = arith.divf %234, %235 : vector<16x1xf32>
    %237 = math.sqrt %236 : vector<16x1xf32>
    %238 = vector.broadcast %229 : vector<16x1xf32> to vector<16x32xf32>
    %239 = arith.subf %223, %238 : vector<16x32xf32>
    %240 = vector.broadcast %224 : vector<1x32xf32> to vector<16x32xf32>
    %241 = arith.mulf %240, %239 : vector<16x32xf32>
    %cst_74 = arith.constant 9.99999997E-7 : f32
    %242 = vector.broadcast %cst_74 : f32 to vector<16x1xf32>
    %243 = arith.addf %237, %242 : vector<16x1xf32>
    %244 = vector.broadcast %243 : vector<16x1xf32> to vector<16x32xf32>
    %245 = arith.divf %241, %244 : vector<16x32xf32>
    %246 = vector.broadcast %225 : vector<1x32xf32> to vector<16x32xf32>
    %247 = arith.addf %245, %246 : vector<16x32xf32>
    %c0_75 = arith.constant 0 : index
    %c0_76 = arith.constant 0 : index
    %248 = vector.load %arg8[%c0_75, %c0_76] : memref<32x32xf32, #tpu.memory_space<vmem>>, vector<32x32xf32>
    %cst_77 = arith.constant dense<0.000000e+00> : vector<16x32xf32>
    %249 = tpu.matmul %247, %248, %cst_77 {dimension_numbers = #tpu.dot_dimension_numbers<[1], [0], [0], [1], [0, 0, 1, 1], [], []>} : vector<16x32xf32>, vector<32x32xf32>, vector<16x32xf32> -> vector<16x32xf32>
    %250 = vector.extract_strided_slice %4 {offsets = [10, 0], sizes = [1, 32], strides = [1, 1]} : vector<16x64xf32> to vector<1x32xf32>
    %251 = vector.broadcast %250 : vector<1x32xf32> to vector<16x32xf32>
    %252 = arith.addf %249, %251 : vector<16x32xf32>
    %cst_78 = arith.constant 0.353553385 : f32
    %253 = vector.broadcast %cst_78 : f32 to vector<16x32xf32>
    %254 = arith.mulf %252, %253 : vector<16x32xf32>
    %c0_79 = arith.constant 0 : index
    %c0_80 = arith.constant 0 : index
    %255 = vector.load %arg9[%c0_79, %c0_80] : memref<32x64xf32, #tpu.memory_space<vmem>>, vector<32x64xf32>
    %cst_81 = arith.constant dense<0.000000e+00> : vector<16x64xf32>
    %256 = tpu.matmul %1, %255, %cst_81 {dimension_numbers = #tpu.dot_dimension_numbers<[1], [0], [0], [1], [0, 0, 1, 1], [], []>} : vector<16x32xf32>, vector<32x64xf32>, vector<16x64xf32> -> vector<16x64xf32>
    %257 = vector.extract_strided_slice %256 {offsets = [0, 0], sizes = [16, 32], strides = [1, 1]} : vector<16x64xf32> to vector<16x32xf32>
    %258 = vector.extract_strided_slice %4 {offsets = [11, 0], sizes = [1, 32], strides = [1, 1]} : vector<16x64xf32> to vector<1x32xf32>
    %259 = vector.broadcast %258 : vector<1x32xf32> to vector<16x32xf32>
    %260 = arith.addf %257, %259 : vector<16x32xf32>
    %261 = vector.extract_strided_slice %256 {offsets = [0, 32], sizes = [16, 32], strides = [1, 1]} : vector<16x64xf32> to vector<16x32xf32>
    %262 = vector.extract_strided_slice %4 {offsets = [12, 0], sizes = [1, 32], strides = [1, 1]} : vector<16x64xf32> to vector<1x32xf32>
    %263 = vector.broadcast %262 : vector<1x32xf32> to vector<16x32xf32>
    %264 = arith.addf %261, %263 : vector<16x32xf32>
    %265 = vector.extract_strided_slice %254 {offsets = [0, 0], sizes = [8, 32], strides = [1, 1]} : vector<16x32xf32> to vector<8x32xf32>
    %266 = vector.extract_strided_slice %260 {offsets = [0, 0], sizes = [8, 32], strides = [1, 1]} : vector<16x32xf32> to vector<8x32xf32>
    %267 = vector.extract_strided_slice %264 {offsets = [0, 0], sizes = [8, 32], strides = [1, 1]} : vector<16x32xf32> to vector<8x32xf32>
    %268 = vector.extract_strided_slice %3 {offsets = [0, 0, 0], sizes = [1, 8, 8], strides = [1, 1, 1]} : vector<2x8x8xf32> to vector<1x8x8xf32>
    %269 = vector.shape_cast %268 : vector<1x8x8xf32> to vector<8x8xf32>
    %270 = vector.extract_strided_slice %265 {offsets = [0, 0], sizes = [8, 8], strides = [1, 1]} : vector<8x32xf32> to vector<8x8xf32>
    %271 = vector.extract_strided_slice %266 {offsets = [0, 0], sizes = [8, 8], strides = [1, 1]} : vector<8x32xf32> to vector<8x8xf32>
    %272 = tpu.transpose %271, [1, 0] : vector<8x8xf32> -> vector<8x8xf32>
    %cst_82 = arith.constant dense<0.000000e+00> : vector<8x8xf32>
    %273 = tpu.matmul %270, %272, %cst_82 {dimension_numbers = #tpu.dot_dimension_numbers<[1], [0], [0], [1], [0, 0, 1, 1], [], []>} : vector<8x8xf32>, vector<8x8xf32>, vector<8x8xf32> -> vector<8x8xf32>
    %cst_83 = arith.constant 0.000000e+00 : f32
    %274 = vector.broadcast %cst_83 : f32 to vector<8x8xf32>
    %275 = arith.cmpf ogt, %269, %274 : vector<8x8xf32>
    %cst_84 = arith.constant -1.000000e+09 : f32
    %276 = vector.broadcast %cst_84 : f32 to vector<8x8xf32>
    %277 = arith.select %275, %273, %276 : vector<8x8xi1>, vector<8x8xf32>
    %cst_85 = arith.constant dense<0xFF800000> : vector<8xf32>
    %278 = vector.multi_reduction <maximumf>, %277, %cst_85 [1] : vector<8x8xf32> to vector<8xf32>
    %279 = vector.shape_cast %278 : vector<8xf32> to vector<8x1xf32>
    %280 = vector.broadcast %279 : vector<8x1xf32> to vector<8x8xf32>
    %281 = arith.subf %277, %280 : vector<8x8xf32>
    %282 = math.exp %281 : vector<8x8xf32>
    %cst_86 = arith.constant dense<0.000000e+00> : vector<8xf32>
    %283 = vector.multi_reduction <add>, %282, %cst_86 [1] : vector<8x8xf32> to vector<8xf32>
    %284 = vector.shape_cast %283 : vector<8xf32> to vector<8x1xf32>
    %285 = tpu.reciprocal %284 {approx = true} : vector<8x1xf32> -> vector<8x1xf32>
    %286 = vector.broadcast %285 : vector<8x1xf32> to vector<8x8xf32>
    %287 = arith.mulf %282, %286 : vector<8x8xf32>
    %288 = vector.extract_strided_slice %267 {offsets = [0, 0], sizes = [8, 8], strides = [1, 1]} : vector<8x32xf32> to vector<8x8xf32>
    %cst_87 = arith.constant dense<0.000000e+00> : vector<8x8xf32>
    %289 = tpu.matmul %287, %288, %cst_87 {dimension_numbers = #tpu.dot_dimension_numbers<[1], [0], [0], [1], [0, 0, 1, 1], [], []>} : vector<8x8xf32>, vector<8x8xf32>, vector<8x8xf32> -> vector<8x8xf32>
    %290 = vector.extract_strided_slice %265 {offsets = [0, 8], sizes = [8, 8], strides = [1, 1]} : vector<8x32xf32> to vector<8x8xf32>
    %291 = vector.extract_strided_slice %266 {offsets = [0, 8], sizes = [8, 8], strides = [1, 1]} : vector<8x32xf32> to vector<8x8xf32>
    %292 = tpu.transpose %291, [1, 0] : vector<8x8xf32> -> vector<8x8xf32>
    %cst_88 = arith.constant dense<0.000000e+00> : vector<8x8xf32>
    %293 = tpu.matmul %290, %292, %cst_88 {dimension_numbers = #tpu.dot_dimension_numbers<[1], [0], [0], [1], [0, 0, 1, 1], [], []>} : vector<8x8xf32>, vector<8x8xf32>, vector<8x8xf32> -> vector<8x8xf32>
    %cst_89 = arith.constant 0.000000e+00 : f32
    %294 = vector.broadcast %cst_89 : f32 to vector<8x8xf32>
    %295 = arith.cmpf ogt, %269, %294 : vector<8x8xf32>
    %cst_90 = arith.constant -1.000000e+09 : f32
    %296 = vector.broadcast %cst_90 : f32 to vector<8x8xf32>
    %297 = arith.select %295, %293, %296 : vector<8x8xi1>, vector<8x8xf32>
    %cst_91 = arith.constant dense<0xFF800000> : vector<8xf32>
    %298 = vector.multi_reduction <maximumf>, %297, %cst_91 [1] : vector<8x8xf32> to vector<8xf32>
    %299 = vector.shape_cast %298 : vector<8xf32> to vector<8x1xf32>
    %300 = vector.broadcast %299 : vector<8x1xf32> to vector<8x8xf32>
    %301 = arith.subf %297, %300 : vector<8x8xf32>
    %302 = math.exp %301 : vector<8x8xf32>
    %cst_92 = arith.constant dense<0.000000e+00> : vector<8xf32>
    %303 = vector.multi_reduction <add>, %302, %cst_92 [1] : vector<8x8xf32> to vector<8xf32>
    %304 = vector.shape_cast %303 : vector<8xf32> to vector<8x1xf32>
    %305 = tpu.reciprocal %304 {approx = true} : vector<8x1xf32> -> vector<8x1xf32>
    %306 = vector.broadcast %305 : vector<8x1xf32> to vector<8x8xf32>
    %307 = arith.mulf %302, %306 : vector<8x8xf32>
    %308 = vector.extract_strided_slice %267 {offsets = [0, 8], sizes = [8, 8], strides = [1, 1]} : vector<8x32xf32> to vector<8x8xf32>
    %cst_93 = arith.constant dense<0.000000e+00> : vector<8x8xf32>
    %309 = tpu.matmul %307, %308, %cst_93 {dimension_numbers = #tpu.dot_dimension_numbers<[1], [0], [0], [1], [0, 0, 1, 1], [], []>} : vector<8x8xf32>, vector<8x8xf32>, vector<8x8xf32> -> vector<8x8xf32>
    %310 = vector.extract_strided_slice %265 {offsets = [0, 16], sizes = [8, 8], strides = [1, 1]} : vector<8x32xf32> to vector<8x8xf32>
    %311 = vector.extract_strided_slice %266 {offsets = [0, 16], sizes = [8, 8], strides = [1, 1]} : vector<8x32xf32> to vector<8x8xf32>
    %312 = tpu.transpose %311, [1, 0] : vector<8x8xf32> -> vector<8x8xf32>
    %cst_94 = arith.constant dense<0.000000e+00> : vector<8x8xf32>
    %313 = tpu.matmul %310, %312, %cst_94 {dimension_numbers = #tpu.dot_dimension_numbers<[1], [0], [0], [1], [0, 0, 1, 1], [], []>} : vector<8x8xf32>, vector<8x8xf32>, vector<8x8xf32> -> vector<8x8xf32>
    %cst_95 = arith.constant 0.000000e+00 : f32
    %314 = vector.broadcast %cst_95 : f32 to vector<8x8xf32>
    %315 = arith.cmpf ogt, %269, %314 : vector<8x8xf32>
    %cst_96 = arith.constant -1.000000e+09 : f32
    %316 = vector.broadcast %cst_96 : f32 to vector<8x8xf32>
    %317 = arith.select %315, %313, %316 : vector<8x8xi1>, vector<8x8xf32>
    %cst_97 = arith.constant dense<0xFF800000> : vector<8xf32>
    %318 = vector.multi_reduction <maximumf>, %317, %cst_97 [1] : vector<8x8xf32> to vector<8xf32>
    %319 = vector.shape_cast %318 : vector<8xf32> to vector<8x1xf32>
    %320 = vector.broadcast %319 : vector<8x1xf32> to vector<8x8xf32>
    %321 = arith.subf %317, %320 : vector<8x8xf32>
    %322 = math.exp %321 : vector<8x8xf32>
    %cst_98 = arith.constant dense<0.000000e+00> : vector<8xf32>
    %323 = vector.multi_reduction <add>, %322, %cst_98 [1] : vector<8x8xf32> to vector<8xf32>
    %324 = vector.shape_cast %323 : vector<8xf32> to vector<8x1xf32>
    %325 = tpu.reciprocal %324 {approx = true} : vector<8x1xf32> -> vector<8x1xf32>
    %326 = vector.broadcast %325 : vector<8x1xf32> to vector<8x8xf32>
    %327 = arith.mulf %322, %326 : vector<8x8xf32>
    %328 = vector.extract_strided_slice %267 {offsets = [0, 16], sizes = [8, 8], strides = [1, 1]} : vector<8x32xf32> to vector<8x8xf32>
    %cst_99 = arith.constant dense<0.000000e+00> : vector<8x8xf32>
    %329 = tpu.matmul %327, %328, %cst_99 {dimension_numbers = #tpu.dot_dimension_numbers<[1], [0], [0], [1], [0, 0, 1, 1], [], []>} : vector<8x8xf32>, vector<8x8xf32>, vector<8x8xf32> -> vector<8x8xf32>
    %330 = vector.extract_strided_slice %265 {offsets = [0, 24], sizes = [8, 8], strides = [1, 1]} : vector<8x32xf32> to vector<8x8xf32>
    %331 = vector.extract_strided_slice %266 {offsets = [0, 24], sizes = [8, 8], strides = [1, 1]} : vector<8x32xf32> to vector<8x8xf32>
    %332 = tpu.transpose %331, [1, 0] : vector<8x8xf32> -> vector<8x8xf32>
    %cst_100 = arith.constant dense<0.000000e+00> : vector<8x8xf32>
    %333 = tpu.matmul %330, %332, %cst_100 {dimension_numbers = #tpu.dot_dimension_numbers<[1], [0], [0], [1], [0, 0, 1, 1], [], []>} : vector<8x8xf32>, vector<8x8xf32>, vector<8x8xf32> -> vector<8x8xf32>
    %cst_101 = arith.constant 0.000000e+00 : f32
    %334 = vector.broadcast %cst_101 : f32 to vector<8x8xf32>
    %335 = arith.cmpf ogt, %269, %334 : vector<8x8xf32>
    %cst_102 = arith.constant -1.000000e+09 : f32
    %336 = vector.broadcast %cst_102 : f32 to vector<8x8xf32>
    %337 = arith.select %335, %333, %336 : vector<8x8xi1>, vector<8x8xf32>
    %cst_103 = arith.constant dense<0xFF800000> : vector<8xf32>
    %338 = vector.multi_reduction <maximumf>, %337, %cst_103 [1] : vector<8x8xf32> to vector<8xf32>
    %339 = vector.shape_cast %338 : vector<8xf32> to vector<8x1xf32>
    %340 = vector.broadcast %339 : vector<8x1xf32> to vector<8x8xf32>
    %341 = arith.subf %337, %340 : vector<8x8xf32>
    %342 = math.exp %341 : vector<8x8xf32>
    %cst_104 = arith.constant dense<0.000000e+00> : vector<8xf32>
    %343 = vector.multi_reduction <add>, %342, %cst_104 [1] : vector<8x8xf32> to vector<8xf32>
    %344 = vector.shape_cast %343 : vector<8xf32> to vector<8x1xf32>
    %345 = tpu.reciprocal %344 {approx = true} : vector<8x1xf32> -> vector<8x1xf32>
    %346 = vector.broadcast %345 : vector<8x1xf32> to vector<8x8xf32>
    %347 = arith.mulf %342, %346 : vector<8x8xf32>
    %348 = vector.extract_strided_slice %267 {offsets = [0, 24], sizes = [8, 8], strides = [1, 1]} : vector<8x32xf32> to vector<8x8xf32>
    %cst_105 = arith.constant dense<0.000000e+00> : vector<8x8xf32>
    %349 = tpu.matmul %347, %348, %cst_105 {dimension_numbers = #tpu.dot_dimension_numbers<[1], [0], [0], [1], [0, 0, 1, 1], [], []>} : vector<8x8xf32>, vector<8x8xf32>, vector<8x8xf32> -> vector<8x8xf32>
    %350 = tpu.concatenate %289, %309, %329, %349 in 1 : vector<8x8xf32>, vector<8x8xf32>, vector<8x8xf32>, vector<8x8xf32> -> vector<8x32xf32>
    %351 = vector.extract_strided_slice %254 {offsets = [8, 0], sizes = [8, 32], strides = [1, 1]} : vector<16x32xf32> to vector<8x32xf32>
    %352 = vector.extract_strided_slice %260 {offsets = [8, 0], sizes = [8, 32], strides = [1, 1]} : vector<16x32xf32> to vector<8x32xf32>
    %353 = vector.extract_strided_slice %264 {offsets = [8, 0], sizes = [8, 32], strides = [1, 1]} : vector<16x32xf32> to vector<8x32xf32>
    %354 = vector.extract_strided_slice %3 {offsets = [1, 0, 0], sizes = [1, 8, 8], strides = [1, 1, 1]} : vector<2x8x8xf32> to vector<1x8x8xf32>
    %355 = vector.shape_cast %354 : vector<1x8x8xf32> to vector<8x8xf32>
    %356 = vector.extract_strided_slice %351 {offsets = [0, 0], sizes = [8, 8], strides = [1, 1]} : vector<8x32xf32> to vector<8x8xf32>
    %357 = vector.extract_strided_slice %352 {offsets = [0, 0], sizes = [8, 8], strides = [1, 1]} : vector<8x32xf32> to vector<8x8xf32>
    %358 = tpu.transpose %357, [1, 0] : vector<8x8xf32> -> vector<8x8xf32>
    %cst_106 = arith.constant dense<0.000000e+00> : vector<8x8xf32>
    %359 = tpu.matmul %356, %358, %cst_106 {dimension_numbers = #tpu.dot_dimension_numbers<[1], [0], [0], [1], [0, 0, 1, 1], [], []>} : vector<8x8xf32>, vector<8x8xf32>, vector<8x8xf32> -> vector<8x8xf32>
    %cst_107 = arith.constant 0.000000e+00 : f32
    %360 = vector.broadcast %cst_107 : f32 to vector<8x8xf32>
    %361 = arith.cmpf ogt, %355, %360 : vector<8x8xf32>
    %cst_108 = arith.constant -1.000000e+09 : f32
    %362 = vector.broadcast %cst_108 : f32 to vector<8x8xf32>
    %363 = arith.select %361, %359, %362 : vector<8x8xi1>, vector<8x8xf32>
    %cst_109 = arith.constant dense<0xFF800000> : vector<8xf32>
    %364 = vector.multi_reduction <maximumf>, %363, %cst_109 [1] : vector<8x8xf32> to vector<8xf32>
    %365 = vector.shape_cast %364 : vector<8xf32> to vector<8x1xf32>
    %366 = vector.broadcast %365 : vector<8x1xf32> to vector<8x8xf32>
    %367 = arith.subf %363, %366 : vector<8x8xf32>
    %368 = math.exp %367 : vector<8x8xf32>
    %cst_110 = arith.constant dense<0.000000e+00> : vector<8xf32>
    %369 = vector.multi_reduction <add>, %368, %cst_110 [1] : vector<8x8xf32> to vector<8xf32>
    %370 = vector.shape_cast %369 : vector<8xf32> to vector<8x1xf32>
    %371 = tpu.reciprocal %370 {approx = true} : vector<8x1xf32> -> vector<8x1xf32>
    %372 = vector.broadcast %371 : vector<8x1xf32> to vector<8x8xf32>
    %373 = arith.mulf %368, %372 : vector<8x8xf32>
    %374 = vector.extract_strided_slice %353 {offsets = [0, 0], sizes = [8, 8], strides = [1, 1]} : vector<8x32xf32> to vector<8x8xf32>
    %cst_111 = arith.constant dense<0.000000e+00> : vector<8x8xf32>
    %375 = tpu.matmul %373, %374, %cst_111 {dimension_numbers = #tpu.dot_dimension_numbers<[1], [0], [0], [1], [0, 0, 1, 1], [], []>} : vector<8x8xf32>, vector<8x8xf32>, vector<8x8xf32> -> vector<8x8xf32>
    %376 = vector.extract_strided_slice %351 {offsets = [0, 8], sizes = [8, 8], strides = [1, 1]} : vector<8x32xf32> to vector<8x8xf32>
    %377 = vector.extract_strided_slice %352 {offsets = [0, 8], sizes = [8, 8], strides = [1, 1]} : vector<8x32xf32> to vector<8x8xf32>
    %378 = tpu.transpose %377, [1, 0] : vector<8x8xf32> -> vector<8x8xf32>
    %cst_112 = arith.constant dense<0.000000e+00> : vector<8x8xf32>
    %379 = tpu.matmul %376, %378, %cst_112 {dimension_numbers = #tpu.dot_dimension_numbers<[1], [0], [0], [1], [0, 0, 1, 1], [], []>} : vector<8x8xf32>, vector<8x8xf32>, vector<8x8xf32> -> vector<8x8xf32>
    %cst_113 = arith.constant 0.000000e+00 : f32
    %380 = vector.broadcast %cst_113 : f32 to vector<8x8xf32>
    %381 = arith.cmpf ogt, %355, %380 : vector<8x8xf32>
    %cst_114 = arith.constant -1.000000e+09 : f32
    %382 = vector.broadcast %cst_114 : f32 to vector<8x8xf32>
    %383 = arith.select %381, %379, %382 : vector<8x8xi1>, vector<8x8xf32>
    %cst_115 = arith.constant dense<0xFF800000> : vector<8xf32>
    %384 = vector.multi_reduction <maximumf>, %383, %cst_115 [1] : vector<8x8xf32> to vector<8xf32>
    %385 = vector.shape_cast %384 : vector<8xf32> to vector<8x1xf32>
    %386 = vector.broadcast %385 : vector<8x1xf32> to vector<8x8xf32>
    %387 = arith.subf %383, %386 : vector<8x8xf32>
    %388 = math.exp %387 : vector<8x8xf32>
    %cst_116 = arith.constant dense<0.000000e+00> : vector<8xf32>
    %389 = vector.multi_reduction <add>, %388, %cst_116 [1] : vector<8x8xf32> to vector<8xf32>
    %390 = vector.shape_cast %389 : vector<8xf32> to vector<8x1xf32>
    %391 = tpu.reciprocal %390 {approx = true} : vector<8x1xf32> -> vector<8x1xf32>
    %392 = vector.broadcast %391 : vector<8x1xf32> to vector<8x8xf32>
    %393 = arith.mulf %388, %392 : vector<8x8xf32>
    %394 = vector.extract_strided_slice %353 {offsets = [0, 8], sizes = [8, 8], strides = [1, 1]} : vector<8x32xf32> to vector<8x8xf32>
    %cst_117 = arith.constant dense<0.000000e+00> : vector<8x8xf32>
    %395 = tpu.matmul %393, %394, %cst_117 {dimension_numbers = #tpu.dot_dimension_numbers<[1], [0], [0], [1], [0, 0, 1, 1], [], []>} : vector<8x8xf32>, vector<8x8xf32>, vector<8x8xf32> -> vector<8x8xf32>
    %396 = vector.extract_strided_slice %351 {offsets = [0, 16], sizes = [8, 8], strides = [1, 1]} : vector<8x32xf32> to vector<8x8xf32>
    %397 = vector.extract_strided_slice %352 {offsets = [0, 16], sizes = [8, 8], strides = [1, 1]} : vector<8x32xf32> to vector<8x8xf32>
    %398 = tpu.transpose %397, [1, 0] : vector<8x8xf32> -> vector<8x8xf32>
    %cst_118 = arith.constant dense<0.000000e+00> : vector<8x8xf32>
    %399 = tpu.matmul %396, %398, %cst_118 {dimension_numbers = #tpu.dot_dimension_numbers<[1], [0], [0], [1], [0, 0, 1, 1], [], []>} : vector<8x8xf32>, vector<8x8xf32>, vector<8x8xf32> -> vector<8x8xf32>
    %cst_119 = arith.constant 0.000000e+00 : f32
    %400 = vector.broadcast %cst_119 : f32 to vector<8x8xf32>
    %401 = arith.cmpf ogt, %355, %400 : vector<8x8xf32>
    %cst_120 = arith.constant -1.000000e+09 : f32
    %402 = vector.broadcast %cst_120 : f32 to vector<8x8xf32>
    %403 = arith.select %401, %399, %402 : vector<8x8xi1>, vector<8x8xf32>
    %cst_121 = arith.constant dense<0xFF800000> : vector<8xf32>
    %404 = vector.multi_reduction <maximumf>, %403, %cst_121 [1] : vector<8x8xf32> to vector<8xf32>
    %405 = vector.shape_cast %404 : vector<8xf32> to vector<8x1xf32>
    %406 = vector.broadcast %405 : vector<8x1xf32> to vector<8x8xf32>
    %407 = arith.subf %403, %406 : vector<8x8xf32>
    %408 = math.exp %407 : vector<8x8xf32>
    %cst_122 = arith.constant dense<0.000000e+00> : vector<8xf32>
    %409 = vector.multi_reduction <add>, %408, %cst_122 [1] : vector<8x8xf32> to vector<8xf32>
    %410 = vector.shape_cast %409 : vector<8xf32> to vector<8x1xf32>
    %411 = tpu.reciprocal %410 {approx = true} : vector<8x1xf32> -> vector<8x1xf32>
    %412 = vector.broadcast %411 : vector<8x1xf32> to vector<8x8xf32>
    %413 = arith.mulf %408, %412 : vector<8x8xf32>
    %414 = vector.extract_strided_slice %353 {offsets = [0, 16], sizes = [8, 8], strides = [1, 1]} : vector<8x32xf32> to vector<8x8xf32>
    %cst_123 = arith.constant dense<0.000000e+00> : vector<8x8xf32>
    %415 = tpu.matmul %413, %414, %cst_123 {dimension_numbers = #tpu.dot_dimension_numbers<[1], [0], [0], [1], [0, 0, 1, 1], [], []>} : vector<8x8xf32>, vector<8x8xf32>, vector<8x8xf32> -> vector<8x8xf32>
    %416 = vector.extract_strided_slice %351 {offsets = [0, 24], sizes = [8, 8], strides = [1, 1]} : vector<8x32xf32> to vector<8x8xf32>
    %417 = vector.extract_strided_slice %352 {offsets = [0, 24], sizes = [8, 8], strides = [1, 1]} : vector<8x32xf32> to vector<8x8xf32>
    %418 = tpu.transpose %417, [1, 0] : vector<8x8xf32> -> vector<8x8xf32>
    %cst_124 = arith.constant dense<0.000000e+00> : vector<8x8xf32>
    %419 = tpu.matmul %416, %418, %cst_124 {dimension_numbers = #tpu.dot_dimension_numbers<[1], [0], [0], [1], [0, 0, 1, 1], [], []>} : vector<8x8xf32>, vector<8x8xf32>, vector<8x8xf32> -> vector<8x8xf32>
    %cst_125 = arith.constant 0.000000e+00 : f32
    %420 = vector.broadcast %cst_125 : f32 to vector<8x8xf32>
    %421 = arith.cmpf ogt, %355, %420 : vector<8x8xf32>
    %cst_126 = arith.constant -1.000000e+09 : f32
    %422 = vector.broadcast %cst_126 : f32 to vector<8x8xf32>
    %423 = arith.select %421, %419, %422 : vector<8x8xi1>, vector<8x8xf32>
    %cst_127 = arith.constant dense<0xFF800000> : vector<8xf32>
    %424 = vector.multi_reduction <maximumf>, %423, %cst_127 [1] : vector<8x8xf32> to vector<8xf32>
    %425 = vector.shape_cast %424 : vector<8xf32> to vector<8x1xf32>
    %426 = vector.broadcast %425 : vector<8x1xf32> to vector<8x8xf32>
    %427 = arith.subf %423, %426 : vector<8x8xf32>
    %428 = math.exp %427 : vector<8x8xf32>
    %cst_128 = arith.constant dense<0.000000e+00> : vector<8xf32>
    %429 = vector.multi_reduction <add>, %428, %cst_128 [1] : vector<8x8xf32> to vector<8xf32>
    %430 = vector.shape_cast %429 : vector<8xf32> to vector<8x1xf32>
    %431 = tpu.reciprocal %430 {approx = true} : vector<8x1xf32> -> vector<8x1xf32>
    %432 = vector.broadcast %431 : vector<8x1xf32> to vector<8x8xf32>
    %433 = arith.mulf %428, %432 : vector<8x8xf32>
    %434 = vector.extract_strided_slice %353 {offsets = [0, 24], sizes = [8, 8], strides = [1, 1]} : vector<8x32xf32> to vector<8x8xf32>
    %cst_129 = arith.constant dense<0.000000e+00> : vector<8x8xf32>
    %435 = tpu.matmul %433, %434, %cst_129 {dimension_numbers = #tpu.dot_dimension_numbers<[1], [0], [0], [1], [0, 0, 1, 1], [], []>} : vector<8x8xf32>, vector<8x8xf32>, vector<8x8xf32> -> vector<8x8xf32>
    %436 = tpu.concatenate %375, %395, %415, %435 in 1 : vector<8x8xf32>, vector<8x8xf32>, vector<8x8xf32>, vector<8x8xf32> -> vector<8x32xf32>
    %437 = tpu.concatenate %350, %436 in 0 : vector<8x32xf32>, vector<8x32xf32> -> vector<16x32xf32>
    %c0_130 = arith.constant 0 : index
    %c0_131 = arith.constant 0 : index
    %438 = vector.load %arg10[%c0_130, %c0_131] : memref<32x32xf32, #tpu.memory_space<vmem>>, vector<32x32xf32>
    %cst_132 = arith.constant dense<0.000000e+00> : vector<16x32xf32>
    %439 = tpu.matmul %437, %438, %cst_132 {dimension_numbers = #tpu.dot_dimension_numbers<[1], [0], [0], [1], [0, 0, 1, 1], [], []>} : vector<16x32xf32>, vector<32x32xf32>, vector<16x32xf32> -> vector<16x32xf32>
    %440 = arith.addf %223, %439 : vector<16x32xf32>
    %441 = vector.extract_strided_slice %4 {offsets = [13, 0], sizes = [1, 32], strides = [1, 1]} : vector<16x64xf32> to vector<1x32xf32>
    %442 = vector.broadcast %441 : vector<1x32xf32> to vector<16x32xf32>
    %443 = arith.addf %440, %442 : vector<16x32xf32>
    %444 = vector.extract_strided_slice %4 {offsets = [4, 0], sizes = [1, 32], strides = [1, 1]} : vector<16x64xf32> to vector<1x32xf32>
    %445 = vector.extract_strided_slice %4 {offsets = [5, 0], sizes = [1, 32], strides = [1, 1]} : vector<16x64xf32> to vector<1x32xf32>
    %cst_133 = arith.constant dense<0.000000e+00> : vector<16xf32>
    %446 = vector.multi_reduction <add>, %443, %cst_133 [1] : vector<16x32xf32> to vector<16xf32>
    %447 = vector.shape_cast %446 : vector<16xf32> to vector<16x1xf32>
    %cst_134 = arith.constant 3.200000e+01 : f32
    %448 = vector.broadcast %cst_134 : f32 to vector<16x1xf32>
    %449 = arith.divf %447, %448 : vector<16x1xf32>
    %450 = vector.broadcast %449 : vector<16x1xf32> to vector<16x32xf32>
    %451 = arith.subf %443, %450 : vector<16x32xf32>
    %452 = arith.mulf %451, %451 : vector<16x32xf32>
    %cst_135 = arith.constant dense<0.000000e+00> : vector<16xf32>
    %453 = vector.multi_reduction <add>, %452, %cst_135 [1] : vector<16x32xf32> to vector<16xf32>
    %454 = vector.shape_cast %453 : vector<16xf32> to vector<16x1xf32>
    %cst_136 = arith.constant 3.100000e+01 : f32
    %455 = vector.broadcast %cst_136 : f32 to vector<16x1xf32>
    %456 = arith.divf %454, %455 : vector<16x1xf32>
    %457 = math.sqrt %456 : vector<16x1xf32>
    %458 = vector.broadcast %449 : vector<16x1xf32> to vector<16x32xf32>
    %459 = arith.subf %443, %458 : vector<16x32xf32>
    %460 = vector.broadcast %444 : vector<1x32xf32> to vector<16x32xf32>
    %461 = arith.mulf %460, %459 : vector<16x32xf32>
    %cst_137 = arith.constant 9.99999997E-7 : f32
    %462 = vector.broadcast %cst_137 : f32 to vector<16x1xf32>
    %463 = arith.addf %457, %462 : vector<16x1xf32>
    %464 = vector.broadcast %463 : vector<16x1xf32> to vector<16x32xf32>
    %465 = arith.divf %461, %464 : vector<16x32xf32>
    %466 = vector.broadcast %445 : vector<1x32xf32> to vector<16x32xf32>
    %467 = arith.addf %465, %466 : vector<16x32xf32>
    %c0_138 = arith.constant 0 : index
    %c0_139 = arith.constant 0 : index
    %468 = vector.load %arg11[%c0_138, %c0_139] : memref<32x64xf32, #tpu.memory_space<vmem>>, vector<32x64xf32>
    %cst_140 = arith.constant dense<0.000000e+00> : vector<16x64xf32>
    %469 = tpu.matmul %467, %468, %cst_140 {dimension_numbers = #tpu.dot_dimension_numbers<[1], [0], [0], [1], [0, 0, 1, 1], [], []>} : vector<16x32xf32>, vector<32x64xf32>, vector<16x64xf32> -> vector<16x64xf32>
    %470 = vector.extract_strided_slice %4 {offsets = [15, 0], sizes = [1, 64], strides = [1, 1]} : vector<16x64xf32> to vector<1x64xf32>
    %471 = vector.broadcast %470 : vector<1x64xf32> to vector<16x64xf32>
    %472 = arith.addf %469, %471 : vector<16x64xf32>
    %cst_141 = arith.constant 0.000000e+00 : f32
    %473 = vector.broadcast %cst_141 : f32 to vector<16x64xf32>
    %474 = arith.maximumf %472, %473 : vector<16x64xf32>
    %c0_142 = arith.constant 0 : index
    %c0_143 = arith.constant 0 : index
    %475 = vector.load %arg12[%c0_142, %c0_143] : memref<64x32xf32, #tpu.memory_space<vmem>>, vector<64x32xf32>
    %cst_144 = arith.constant dense<0.000000e+00> : vector<16x32xf32>
    %476 = tpu.matmul %474, %475, %cst_144 {dimension_numbers = #tpu.dot_dimension_numbers<[1], [0], [0], [1], [0, 0, 1, 1], [], []>} : vector<16x64xf32>, vector<64x32xf32>, vector<16x32xf32> -> vector<16x32xf32>
    %477 = vector.extract_strided_slice %4 {offsets = [14, 0], sizes = [1, 32], strides = [1, 1]} : vector<16x64xf32> to vector<1x32xf32>
    %478 = vector.broadcast %477 : vector<1x32xf32> to vector<16x32xf32>
    %479 = arith.addf %476, %478 : vector<16x32xf32>
    %480 = arith.addf %443, %479 : vector<16x32xf32>
    %c0_145 = arith.constant 0 : index
    %c0_146 = arith.constant 0 : index
    %481 = vector.load %arg13[%c0_145, %c0_146] : memref<16x32xf32, #tpu.memory_space<vmem>>, vector<16x32xf32>
    tpu.vector_store %arg13[%c0_145, %c0_146], %480 {strides = array<i32>} : memref<16x32xf32, #tpu.memory_space<vmem>>, vector<16x32xf32>,
    return
  }
  func.func @transform_0(%arg0: i32) -> (i32, i32) {
    %c0_i32 = arith.constant 0 : i32
    %c0_i32_0 = arith.constant 0 : i32
    %c0_i32_1 = arith.constant 0 : i32
    return %c0_i32, %c0_i32_0 : i32, i32
  }
  func.func @transform_1(%arg0: i32) -> (i32, i32) {
    %c0_i32 = arith.constant 0 : i32
    %c0_i32_0 = arith.constant 0 : i32
    %c0_i32_1 = arith.constant 0 : i32
    return %c0_i32, %c0_i32_0 : i32, i32
  }
  func.func @transform_2(%arg0: i32) -> (i32, i32, i32) {
    %c0_i32 = arith.constant 0 : i32
    %c0_i32_0 = arith.constant 0 : i32
    %c0_i32_1 = arith.constant 0 : i32
    %c0_i32_2 = arith.constant 0 : i32
    return %c0_i32, %c0_i32_0, %c0_i32_1 : i32, i32, i32
  }
  func.func @transform_3(%arg0: i32) -> (i32, i32, i32) {
    %c0_i32 = arith.constant 0 : i32
    %c0_i32_0 = arith.constant 0 : i32
    %c0_i32_1 = arith.constant 0 : i32
    %c0_i32_2 = arith.constant 0 : i32
    return %c0_i32, %c0_i32_0, %c0_i32_1 : i32, i32, i32
  }
  func.func @transform_4(%arg0: i32) -> (i32, i32) {
    %c0_i32 = arith.constant 0 : i32
    %c0_i32_0 = arith.constant 0 : i32
    %c0_i32_1 = arith.constant 0 : i32
    return %c0_i32, %c0_i32_0 : i32, i32
  }
  func.func @transform_5(%arg0: i32) -> (i32, i32) {
    %c0_i32 = arith.constant 0 : i32
    %c0_i32_0 = arith.constant 0 : i32
    %c0_i32_1 = arith.constant 0 : i32
    return %c0_i32, %c0_i32_0 : i32, i32
  }
  func.func @transform_6(%arg0: i32) -> (i32, i32) {
    %c0_i32 = arith.constant 0 : i32
    %c0_i32_0 = arith.constant 0 : i32
    %c0_i32_1 = arith.constant 0 : i32
    return %c0_i32, %c0_i32_0 : i32, i32
  }
  func.func @transform_7(%arg0: i32) -> (i32, i32) {
    %c0_i32 = arith.constant 0 : i32
    %c0_i32_0 = arith.constant 0 : i32
    %c0_i32_1 = arith.constant 0 : i32
    return %c0_i32, %c0_i32_0 : i32, i32
  }
  func.func @transform_8(%arg0: i32) -> (i32, i32) {
    %c0_i32 = arith.constant 0 : i32
    %c0_i32_0 = arith.constant 0 : i32
    %c0_i32_1 = arith.constant 0 : i32
    return %c0_i32, %c0_i32_0 : i32, i32
  }
  func.func @transform_9(%arg0: i32) -> (i32, i32) {
    %c0_i32 = arith.constant 0 : i32
    %c0_i32_0 = arith.constant 0 : i32
    %c0_i32_1 = arith.constant 0 : i32
    return %c0_i32, %c0_i32_0 : i32, i32
  }
  func.func @transform_10(%arg0: i32) -> (i32, i32) {
    %c0_i32 = arith.constant 0 : i32
    %c0_i32_0 = arith.constant 0 : i32
    %c0_i32_1 = arith.constant 0 : i32
    return %c0_i32, %c0_i32_0 : i32, i32
  }
  func.func @transform_11(%arg0: i32) -> (i32, i32) {
    %c0_i32 = arith.constant 0 : i32
    %c0_i32_0 = arith.constant 0 : i32
    %c0_i32_1 = arith.constant 0 : i32
    return %c0_i32, %c0_i32_0 : i32, i32
  }
  func.func @transform_12(%arg0: i32) -> (i32, i32) {
    %c0_i32 = arith.constant 0 : i32
    %c0_i32_0 = arith.constant 0 : i32
    %c0_i32_1 = arith.constant 0 : i32
    return %c0_i32, %c0_i32_0 : i32, i32
  }
}

</mosaic_0001>

<llo_original>
// kernel: decoder_layer.1
$region0: #{decoder_layer.1}
  #allocation0 [shape = 'u32[]', space=smem, size = 0x4, offset = 0x4, fixed_abs, tag = 'smem constant byte address 0x4 - core index']
  #allocation1 [shape = 'u32[144,128]{1,0:T(1,128)}', space=vmem, size = 0x12000, scoped, tag = 'internal scratch']
  %s0 = inlined_call_operand.vmem [shape: f32[16,32], index: 0, kind: input, shape index: {}]
  %s1 = inlined_call_operand.vmem [shape: f32[16,32], index: 1, kind: input, shape index: {}]
  %s2 = inlined_call_operand.vmem [shape: f32[2,8,8], index: 2, kind: input, shape index: {}]
  %s3 = inlined_call_operand.vmem [shape: f32[2,8,8], index: 3, kind: input, shape index: {}]
  %s4 = inlined_call_operand.vmem [shape: f32[16,64], index: 4, kind: input, shape index: {}]
  %s5 = inlined_call_operand.vmem [shape: f32[32,96], index: 5, kind: input, shape index: {}]
  %s6 = inlined_call_operand.vmem [shape: f32[32,32], index: 6, kind: input, shape index: {}]
  %s7 = inlined_call_operand.vmem [shape: f32[32,32], index: 7, kind: input, shape index: {}]
  %s8 = inlined_call_operand.vmem [shape: f32[32,64], index: 8, kind: input, shape index: {}]
  %s9 = inlined_call_operand.vmem [shape: f32[32,32], index: 9, kind: input, shape index: {}]
  %s10 = inlined_call_operand.vmem [shape: f32[32,64], index: 10, kind: input, shape index: {}]
  %s11 = inlined_call_operand.vmem [shape: f32[64,32], index: 11, kind: input, shape index: {}]
  %s12 = inlined_call_operand.hbm [shape: f32[16,32], index: 12, kind: output, shape index: {}]
  %s13 = sld [smem:[#allocation0]]
  $region58: #{decoder_layer.1} parent=0
    _
  %s15 = ssub.s32 1, %s13
  %s16 = scalar_select 0, %s15, %s13
  $region1: #{decoder_layer.1} parent=0
    #allocation2 [shape = 'u8[8192]{0}', space=vmem, size = 0x2000, scoped, tag = 'output window, operand 0, single buffered']
    #allocation3 [shape = 's32[1]{0}', space=sflag, size = 0x4, scoped, tag = 'scoped memory for decoder_layer.1']
    %17 = vsyncpa [#allocation3], 0
    // Predicated region
    $region2: #{decoder_layer.1} parent=1 // pred_check
      _
    $region3: #{decoder_layer.1} parent=1 // pred_check_branch
      %19 = sbr.rel (0) target = $region5
    $region4: #{decoder_layer.1} parent=1 // pred_region
      _
    $region5: #{decoder_layer.1} parent=1 // pred_fallthru
      _
    // Predicated region
    $region6: #{decoder_layer.1} parent=1 // pred_check
      _
    $region7: #{decoder_layer.1} parent=1 // pred_check_branch
      %21 = sbr.rel (0) target = $region9
    $region8: #{decoder_layer.1} parent=1 // pred_region
      _
    $region9: #{decoder_layer.1} parent=1 // pred_fallthru
      _
    // Predicated region
    $region10: #{decoder_layer.1} parent=1 // pred_check
      _
    $region11: #{decoder_layer.1} parent=1 // pred_check_branch
      %23 = sbr.rel (0) target = $region13
    $region12: #{decoder_layer.1} parent=1 // pred_region
      _
    $region13: #{decoder_layer.1} parent=1 // pred_fallthru
      _
    // Predicated region
    $region14: #{decoder_layer.1} parent=1 // pred_check
      _
    $region15: #{decoder_layer.1} parent=1 // pred_check_branch
      %25 = sbr.rel (0) target = $region17
    $region16: #{decoder_layer.1} parent=1 // pred_region
      _
    $region17: #{decoder_layer.1} parent=1 // pred_fallthru
      _
    // Predicated region
    $region18: #{decoder_layer.1} parent=1 // pred_check
      _
    $region19: #{decoder_layer.1} parent=1 // pred_check_branch
      %27 = sbr.rel (0) target = $region21
    $region20: #{decoder_layer.1} parent=1 // pred_region
      _
    $region21: #{decoder_layer.1} parent=1 // pred_fallthru
      _
    // Predicated region
    $region22: #{decoder_layer.1} parent=1 // pred_check
      _
    $region23: #{decoder_layer.1} parent=1 // pred_check_branch
      %29 = sbr.rel (0) target = $region25
    $region24: #{decoder_layer.1} parent=1 // pred_region
      _
    $region25: #{decoder_layer.1} parent=1 // pred_fallthru
      _
    // Predicated region
    $region26: #{decoder_layer.1} parent=1 // pred_check
      _
    $region27: #{decoder_layer.1} parent=1 // pred_check_branch
      %31 = sbr.rel (0) target = $region29
    $region28: #{decoder_layer.1} parent=1 // pred_region
      _
    $region29: #{decoder_layer.1} parent=1 // pred_fallthru
      _
    // Predicated region
    $region30: #{decoder_layer.1} parent=1 // pred_check
      _
    $region31: #{decoder_layer.1} parent=1 // pred_check_branch
      %33 = sbr.rel (0) target = $region33
    $region32: #{decoder_layer.1} parent=1 // pred_region
      _
    $region33: #{decoder_layer.1} parent=1 // pred_fallthru
      _
    // Predicated region
    $region34: #{decoder_layer.1} parent=1 // pred_check
      _
    $region35: #{decoder_layer.1} parent=1 // pred_check_branch
      %35 = sbr.rel (0) target = $region37
    $region36: #{decoder_layer.1} parent=1 // pred_region
      _
    $region37: #{decoder_layer.1} parent=1 // pred_fallthru
      _
    // Predicated region
    $region38: #{decoder_layer.1} parent=1 // pred_check
      _
    $region39: #{decoder_layer.1} parent=1 // pred_check_branch
      %37 = sbr.rel (0) target = $region41
    $region40: #{decoder_layer.1} parent=1 // pred_region
      _
    $region41: #{decoder_layer.1} parent=1 // pred_fallthru
      _
    // Predicated region
    $region42: #{decoder_layer.1} parent=1 // pred_check
      _
    $region43: #{decoder_layer.1} parent=1 // pred_check_branch
      %39 = sbr.rel (0) target = $region45
    $region44: #{decoder_layer.1} parent=1 // pred_region
      _
    $region45: #{decoder_layer.1} parent=1 // pred_fallthru
      _
    // Predicated region
    $region46: #{decoder_layer.1} parent=1 // pred_check
      _
    $region47: #{decoder_layer.1} parent=1 // pred_check_branch
      %41 = sbr.rel (0) target = $region49
    $region48: #{decoder_layer.1} parent=1 // pred_region
      _
    $region49: #{decoder_layer.1} parent=1 // pred_fallthru
      _
    %v42 = vld [vmem:[%s0] sm:$0xff]
    %v43 = vld [vmem:[%s0 + $0x8] sm:$0xff]
    %v44 = vld [vmem:[%s1] sm:$0xff]
    %v45 = vld [vmem:[%s1 + $0x8] sm:$0xff]
    %v46 = vld [vmem:[%s2] sm:$0xff]
    %v47 = vld [vmem:[%s2 + $0x8] sm:$0xff]
    %v48 = vld [vmem:[%s3] sm:$0xff]
    %v49 = vld [vmem:[%s3 + $0x8] sm:$0xff]
    %v50 = vld [vmem:[%s4] sm:$0xff]
    %v51 = vld [vmem:[%s4 + $0x8] sm:$0xff]
    %vm52 = vcmask 261120
    %v53 = vsel %vm52, %v42, 0.0
    %54 = vadd.xlane.f32.xlu0 %v53
    %v55 = vpop.xlane.xlu0 %54
    %v56 = vsel %vm52, %v43, 0.0
    %57 = vadd.xlane.f32.xlu0 %v56
    %v58 = vpop.xlane.xlu0 %57
    %v59 = vrcp.pop 32.0
    %v60 = vmul.f32 %v55, %v59
    %v61 = vmul.f32 %v58, %v59
    %v62 = vsub.f32 %v42, %v60
    %v63 = vsub.f32 %v43, %v61
    %v64 = vmul.f32 %v62, %v62
    %v65 = vmul.f32 %v63, %v63
    %v66 = vsel %vm52, %v64, 0.0
    %67 = vadd.xlane.f32.xlu0 %v66
    %v68 = vpop.xlane.xlu0 %67
    %v69 = vsel %vm52, %v65, 0.0
    %70 = vadd.xlane.f32.xlu0 %v69
    %v71 = vpop.xlane.xlu0 %70
    %v72 = vrcp.pop 31.0
    %v73 = vmul.f32 %v68, %v72
    %v74 = vmul.f32 %v71, %v72
    %v75 = vrsqrt.pop %v73
    %v76 = vmul.f32 %v73, %v75
    %vm77 = vcmp.eq.f32.partialorder %v73, inf
    %v78 = vsel %vm77, %v73, %v76
    %vm79 = vcmp.eq.f32.partialorder %v73, 0.0
    %v80 = vand.u32 %v73, 2147483648
    %v81 = vsel %vm79, %v80, %v78
    %v82 = vrsqrt.pop %v74
    %v83 = vmul.f32 %v74, %v82
    %vm84 = vcmp.eq.f32.partialorder %v74, inf
    %v85 = vsel %vm84, %v74, %v83
    %vm86 = vcmp.eq.f32.partialorder %v74, 0.0
    %v87 = vand.u32 %v74, 2147483648
    %v88 = vsel %vm86, %v87, %v85
    %v89 = vlaneseq
    %v90 = vshrl.u32 %v89, 7
    %v91 = vsub.s32 0, %v90
    %v92 = vrot.slane %v50, %v91
    %v93 = vmul.f32 %v92, %v62
    %v94 = vmul.f32 %v92, %v63
    %v95 = vadd.f32 %v81, 1e-06
    %v96 = vadd.f32 %v88, 1e-06
    %v97 = vrcp.pop %v95
    %v98 = vmul.f32 %v93, %v97
    %v99 = vrcp.pop %v96
    %v100 = vmul.f32 %v94, %v99
    %v101 = vlaneseq
    %v102 = vshrl.u32 %v101, 7
    %v103 = vsub.s32 1, %v102
    %v104 = vrot.slane %v50, %v103
    %v105 = vadd.f32 %v98, %v104
    %v106 = vadd.f32 %v100, %v104
    %v107 = vld [vmem:[%s5] sm:$0xff]
    %v108 = vld [vmem:[%s5 + $0x8] sm:$0xff]
    %v109 = vld [vmem:[%s5 + $0x10] sm:$0xff]
    %v110 = vld [vmem:[%s5 + $0x18] sm:$0xff]
    %v112 = vsel %vm52, %v105, 0
    %v115 = vsel %vm52, %v106, 0
    %117 = vmatprep.subr.mxu0 0.0
    %118 = vmatpush1.msra.mxu0 %v107
    %119 = vmatprep.subr.mxu0 0.0
    %120 = vmatpush1.msra.mxu0 %v108
    %121 = vmatprep.subr.mxu0 0.0
    %122 = vmatpush1.msra.mxu0 %v109
    %123 = vmatprep.subr.mxu0 0.0
    %124 = vmatpush1.msra.mxu0 %v110
    %125 = vmatprep.subr.mxu0 0.0
    %126 = vmatpush1.msra.mxu0 0.0
    %127 = vmatprep.subr.mxu0 0.0
    %128 = vmatpush1.msra.mxu0 0.0
    %129 = vmatprep.subr.mxu0 0.0
    %130 = vmatpush1.msra.mxu0 0.0
    %131 = vmatprep.subr.mxu0 0.0
    %132 = vmatpush1.msra.mxu0 0.0
    %133 = vmatprep.subr.mxu0 0.0
    %134 = vmatpush1.msra.mxu0 0.0
    %135 = vmatprep.subr.mxu0 0.0
    %136 = vmatpush1.msra.mxu0 0.0
    %137 = vmatprep.subr.mxu0 0.0
    %138 = vmatpush1.msra.mxu0 0.0
    %139 = vmatprep.subr.mxu0 0.0
    %140 = vmatpush1.msra.mxu0 0.0
    %141 = vmatprep.subr.mxu0 0.0
    %142 = vmatpush1.msra.mxu0 0.0
    %143 = vmatprep.subr.mxu0 0.0
    %144 = vmatpush1.msra.mxu0 0.0
    %145 = vmatprep.subr.mxu0 0.0
    %146 = vmatpush1.msra.mxu0 0.0
    %147 = vmatprep.subr.mxu0 0.0
    %148 = vmatpush1.msra.mxu0 0.0
    %149 = vmatprep.subr.mxu0 0.0
    %150 = vmatpush1.msra.mxu0 0.0
    %151 = vmatprep.subr.mxu0 0.0
    %152 = vmatpush1.msra.mxu0 0.0
    %153 = vmatprep.subr.mxu0 0.0
    %154 = vmatpush1.msra.mxu0 0.0
    %155 = vmatprep.subr.mxu0 0.0
    %156 = vmatpush1.msra.mxu0 0.0
    %157 = vmatprep.subr.mxu0 0.0
    %158 = vmatpush1.msra.mxu0 0.0
    %159 = vmatprep.subr.mxu0 0.0
    %160 = vmatpush1.msra.mxu0 0.0
    %161 = vmatprep.subr.mxu0 0.0
    %162 = vmatpush1.msra.mxu0 0.0
    %163 = vmatprep.subr.mxu0 0.0
    %164 = vmatpush1.msra.mxu0 0.0
    %165 = vmatprep.subr.mxu0 0.0
    %166 = vmatpush1.msra.mxu0 0.0
    %167 = vmatprep.subr.mxu0 0.0
    %168 = vmatpush1.msra.mxu0 0.0
    %169 = vmatprep.subr.mxu0 0.0
    %170 = vmatpush1.msra.mxu0 0.0
    %171 = vmatprep.subr.mxu0 0.0
    %172 = vmatpush1.msra.mxu0 0.0
    %173 = vmatprep.subr.mxu0 0.0
    %174 = vmatpush1.msra.mxu0 0.0
    %175 = vmatprep.subr.mxu0 0.0
    %176 = vmatpush1.msra.mxu0 0.0
    %177 = vmatprep.subr.mxu0 0.0
    %178 = vmatpush1.msra.mxu0 0.0
    %179 = vmatprep.subr.mxu0 0.0
    %180 = vmatpush1.msra.mxu0 0.0
    %181 = vmatprep.mubr.f32.mxu0 0.0
    %182 = vmatmul.mubr.f32.gmra.mrb[0].mxu0 %v112
    %v183 = vpop.f32.mrb[0].mxu0
    %v184 = vadd.f32 0.0, %v183
    %v185 = vpop.f32.mrb[0].mxu0
    %186 = vmatprep.mubr.f32.mxu0 0.0
    %187 = vmatmul.mubr.f32.gmra.mrb[0].mxu0 %v115
    %v188 = vpop.f32.mrb[0].mxu0
    %v189 = vadd.f32 0.0, %v188
    %v190 = vpop.f32.mrb[0].mxu0
    %191 = vdwg.mxu0
    %v192 = vlaneseq
    %v193 = vshrl.u32 %v192, 7
    %v194 = vsub.s32 6, %v193
    %v195 = vrot.slane %v50, %v194
    %v196 = vadd.f32 %v184, %v195
    %v197 = vadd.f32 %v189, %v195
    %v198 = vmul.f32 %v196, 0.35355338
    %v199 = vmul.f32 %v197, 0.35355338
    %v200 = vlaneseq
    %v201 = vshrl.u32 %v200, 7
    %v202 = vsub.s32 7, %v201
    %v203 = vrot.slane %v50, %v202
    %205 = vrot.lane.b32.xlu0 %v203, 32
    %v206 = vpop.permute.xlu0 %205
    %v208 = vadd.f32 %v184, %v206
    %v209 = vadd.f32 %v189, %v206
    %v210 = vlaneseq
    %v211 = vshrl.u32 %v210, 7
    %v212 = vsub.s32 0, %v211
    %v213 = vrot.slane %v51, %v212
    %215 = vrot.lane.b32.xlu0 %v213, 64
    %v216 = vpop.permute.xlu0 %215
    %v218 = vadd.f32 %v184, %v216
    %v219 = vadd.f32 %v189, %v216
    %221 = vrot.lane.b32.xlu0 %v208, 96
    %v222 = vpop.permute.xlu0 %221
    %vm223 = vcmask 64512
    %v225 = vsel %vm223, %v198, 0
    %v227 = vsel %vm223, %v222, 0
    %229 = vmatprep.subr.mxu0 0.0
    %230 = vmatpush1.xpose.msra.mxu0 %v227
    %231 = vmatprep.subr.mxu0 0.0
    %232 = vmatpush1.xpose.msra.mxu0 0.0
    %233 = vmatprep.subr.mxu0 0.0
    %234 = vmatpush1.xpose.msra.mxu0 0.0
    %235 = vmatprep.subr.mxu0 0.0
    %236 = vmatpush1.xpose.msra.mxu0 0.0
    %237 = vmatprep.subr.mxu0 0.0
    %238 = vmatpush1.xpose.msra.mxu0 0.0
    %239 = vmatprep.subr.mxu0 0.0
    %240 = vmatpush1.xpose.msra.mxu0 0.0
    %241 = vmatprep.subr.mxu0 0.0
    %242 = vmatpush1.xpose.msra.mxu0 0.0
    %243 = vmatprep.subr.mxu0 0.0
    %244 = vmatpush1.xpose.msra.mxu0 0.0
    %245 = vmatprep.subr.mxu0 0.0
    %246 = vmatpush1.xpose.msra.mxu0 0.0
    %247 = vmatprep.subr.mxu0 0.0
    %248 = vmatpush1.xpose.msra.mxu0 0.0
    %249 = vmatprep.subr.mxu0 0.0
    %250 = vmatpush1.xpose.msra.mxu0 0.0
    %251 = vmatprep.subr.mxu0 0.0
    %252 = vmatpush1.xpose.msra.mxu0 0.0
    %253 = vmatprep.subr.mxu0 0.0
    %254 = vmatpush1.xpose.msra.mxu0 0.0
    %255 = vmatprep.subr.mxu0 0.0
    %256 = vmatpush1.xpose.msra.mxu0 0.0
    %257 = vmatprep.subr.mxu0 0.0
    %258 = vmatpush1.xpose.msra.mxu0 0.0
    %259 = vmatprep.subr.mxu0 0.0
    %260 = vmatpush1.xpose.msra.mxu0 0.0
    %261 = vmatprep.subr.mxu0 0.0
    %262 = vmatpush1.xpose.msra.mxu0 0.0
    %263 = vmatprep.subr.mxu0 0.0
    %264 = vmatpush1.xpose.msra.mxu0 0.0
    %265 = vmatprep.subr.mxu0 0.0
    %266 = vmatpush1.xpose.msra.mxu0 0.0
    %267 = vmatprep.subr.mxu0 0.0
    %268 = vmatpush1.xpose.msra.mxu0 0.0
    %269 = vmatprep.subr.mxu0 0.0
    %270 = vmatpush1.xpose.msra.mxu0 0.0
    %271 = vmatprep.subr.mxu0 0.0
    %272 = vmatpush1.xpose.msra.mxu0 0.0
    %273 = vmatprep.subr.mxu0 0.0
    %274 = vmatpush1.xpose.msra.mxu0 0.0
    %275 = vmatprep.subr.mxu0 0.0
    %276 = vmatpush1.xpose.msra.mxu0 0.0
    %277 = vmatprep.subr.mxu0 0.0
    %278 = vmatpush1.xpose.msra.mxu0 0.0
    %279 = vmatprep.subr.mxu0 0.0
    %280 = vmatpush1.xpose.msra.mxu0 0.0
    %281 = vmatprep.subr.mxu0 0.0
    %282 = vmatpush1.xpose.msra.mxu0 0.0
    %283 = vmatprep.subr.mxu0 0.0
    %284 = vmatpush1.xpose.msra.mxu0 0.0
    %285 = vmatprep.subr.mxu0 0.0
    %286 = vmatpush1.xpose.msra.mxu0 0.0
    %287 = vmatprep.subr.mxu0 0.0
    %288 = vmatpush1.xpose.msra.mxu0 0.0
    %289 = vmatprep.subr.mxu0 0.0
    %290 = vmatpush1.xpose.msra.mxu0 0.0
    %291 = vmatprep.subr.mxu0 0.0
    %292 = vmatpush1.xpose.msra.mxu0 0.0
    %293 = vmatprep.mubr.f32.mxu0 0.0
    %294 = vmatmul.mubr.f32.gmra.mrb[0].mxu0 %v225
    %v295 = vpop.f32.mrb[0].mxu0
    %v296 = vadd.f32 0.0, %v295
    %v297 = vpop.f32.mrb[0].mxu0
    %298 = vdwg.mxu0
    %vm299 = vcmp.gt.f32.partialorder %v46, 0.0
    %v300 = vsel %vm299, %v296, -1e+09
    %v301 = vsel %vm223, %v300, -inf
    %302 = vmax.xlane.f32.xlu0 %v301
    %v303 = vpop.xlane.xlu0 %302
    %v304 = vsub.f32 %v300, %v303
    %v305 = vmul.f32 %v304, 1.442695
    %v306 = vpow.pop %v305
    %v307 = vsel %vm223, %v306, 0.0
    %308 = vadd.xlane.f32.xlu0 %v307
    %v309 = vpop.xlane.xlu0 %308
    %v310 = vrcp.pop %v309
    %v311 = vmul.f32 %v306, %v310
    %313 = vrot.lane.b32.xlu0 %v218, 64
    %v314 = vpop.permute.xlu0 %313
    %v317 = vsel %vm223, %v311, 0
    %319 = vmatprep.subr.mxu0 0.0
    %320 = vmatpush1.msra.mxu0 %v314
    %321 = vmatprep.subr.mxu0 0.0
    %322 = vmatpush1.msra.mxu0 0.0
    %323 = vmatprep.subr.mxu0 0.0
    %324 = vmatpush1.msra.mxu0 0.0
    %325 = vmatprep.subr.mxu0 0.0
    %326 = vmatpush1.msra.mxu0 0.0
    %327 = vmatprep.subr.mxu0 0.0
    %328 = vmatpush1.msra.mxu0 0.0
    %329 = vmatprep.subr.mxu0 0.0
    %330 = vmatpush1.msra.mxu0 0.0
    %331 = vmatprep.subr.mxu0 0.0
    %332 = vmatpush1.msra.mxu0 0.0
    %333 = vmatprep.subr.mxu0 0.0
    %334 = vmatpush1.msra.mxu0 0.0
    %335 = vmatprep.subr.mxu0 0.0
    %336 = vmatpush1.msra.mxu0 0.0
    %337 = vmatprep.subr.mxu0 0.0
    %338 = vmatpush1.msra.mxu0 0.0
    %339 = vmatprep.subr.mxu0 0.0
    %340 = vmatpush1.msra.mxu0 0.0
    %341 = vmatprep.subr.mxu0 0.0
    %342 = vmatpush1.msra.mxu0 0.0
    %343 = vmatprep.subr.mxu0 0.0
    %344 = vmatpush1.msra.mxu0 0.0
    %345 = vmatprep.subr.mxu0 0.0
    %346 = vmatpush1.msra.mxu0 0.0
    %347 = vmatprep.subr.mxu0 0.0
    %348 = vmatpush1.msra.mxu0 0.0
    %349 = vmatprep.subr.mxu0 0.0
    %350 = vmatpush1.msra.mxu0 0.0
    %351 = vmatprep.subr.mxu0 0.0
    %352 = vmatpush1.msra.mxu0 0.0
    %353 = vmatprep.subr.mxu0 0.0
    %354 = vmatpush1.msra.mxu0 0.0
    %355 = vmatprep.subr.mxu0 0.0
    %356 = vmatpush1.msra.mxu0 0.0
    %357 = vmatprep.subr.mxu0 0.0
    %358 = vmatpush1.msra.mxu0 0.0
    %359 = vmatprep.subr.mxu0 0.0
    %360 = vmatpush1.msra.mxu0 0.0
    %361 = vmatprep.subr.mxu0 0.0
    %362 = vmatpush1.msra.mxu0 0.0
    %363 = vmatprep.subr.mxu0 0.0
    %364 = vmatpush1.msra.mxu0 0.0
    %365 = vmatprep.subr.mxu0 0.0
    %366 = vmatpush1.msra.mxu0 0.0
    %367 = vmatprep.subr.mxu0 0.0
    %368 = vmatpush1.msra.mxu0 0.0
    %369 = vmatprep.subr.mxu0 0.0
    %370 = vmatpush1.msra.mxu0 0.0
    %371 = vmatprep.subr.mxu0 0.0
    %372 = vmatpush1.msra.mxu0 0.0
    %373 = vmatprep.subr.mxu0 0.0
    %374 = vmatpush1.msra.mxu0 0.0
    %375 = vmatprep.subr.mxu0 0.0
    %376 = vmatpush1.msra.mxu0 0.0
    %377 = vmatprep.subr.mxu0 0.0
    %378 = vmatpush1.msra.mxu0 0.0
    %379 = vmatprep.subr.mxu0 0.0
    %380 = vmatpush1.msra.mxu0 0.0
    %381 = vmatprep.subr.mxu0 0.0
    %382 = vmatpush1.msra.mxu0 0.0
    %383 = vmatprep.mubr.f32.mxu0 0.0
    %384 = vmatmul.mubr.f32.gmra.mrb[0].mxu0 %v317
    %v385 = vpop.f32.mrb[0].mxu0
    %v386 = vadd.f32 0.0, %v385
    %v387 = vpop.f32.mrb[0].mxu0
    %388 = vdwg.mxu0
    %389 = vrot.lane.b32.xlu0 %v198, 120
    %v390 = vpop.permute.xlu0 %389
    %391 = vrot.lane.b32.xlu0 %v208, 88
    %v392 = vpop.permute.xlu0 %391
    %v393 = vsel %vm223, %v390, 0
    %v395 = vsel %vm223, %v392, 0
    %397 = vmatprep.subr.mxu0 0.0
    %398 = vmatpush1.xpose.msra.mxu0 %v395
    %399 = vmatprep.subr.mxu0 0.0
    %400 = vmatpush1.xpose.msra.mxu0 0.0
    %401 = vmatprep.subr.mxu0 0.0
    %402 = vmatpush1.xpose.msra.mxu0 0.0
    %403 = vmatprep.subr.mxu0 0.0
    %404 = vmatpush1.xpose.msra.mxu0 0.0
    %405 = vmatprep.subr.mxu0 0.0
    %406 = vmatpush1.xpose.msra.mxu0 0.0
    %407 = vmatprep.subr.mxu0 0.0
    %408 = vmatpush1.xpose.msra.mxu0 0.0
    %409 = vmatprep.subr.mxu0 0.0
    %410 = vmatpush1.xpose.msra.mxu0 0.0
    %411 = vmatprep.subr.mxu0 0.0
    %412 = vmatpush1.xpose.msra.mxu0 0.0
    %413 = vmatprep.subr.mxu0 0.0
    %414 = vmatpush1.xpose.msra.mxu0 0.0
    %415 = vmatprep.subr.mxu0 0.0
    %416 = vmatpush1.xpose.msra.mxu0 0.0
    %417 = vmatprep.subr.mxu0 0.0
    %418 = vmatpush1.xpose.msra.mxu0 0.0
    %419 = vmatprep.subr.mxu0 0.0
    %420 = vmatpush1.xpose.msra.mxu0 0.0
    %421 = vmatprep.subr.mxu0 0.0
    %422 = vmatpush1.xpose.msra.mxu0 0.0
    %423 = vmatprep.subr.mxu0 0.0
    %424 = vmatpush1.xpose.msra.mxu0 0.0
    %425 = vmatprep.subr.mxu0 0.0
    %426 = vmatpush1.xpose.msra.mxu0 0.0
    %427 = vmatprep.subr.mxu0 0.0
    %428 = vmatpush1.xpose.msra.mxu0 0.0
    %429 = vmatprep.subr.mxu0 0.0
    %430 = vmatpush1.xpose.msra.mxu0 0.0
    %431 = vmatprep.subr.mxu0 0.0
    %432 = vmatpush1.xpose.msra.mxu0 0.0
    %433 = vmatprep.subr.mxu0 0.0
    %434 = vmatpush1.xpose.msra.mxu0 0.0
    %435 = vmatprep.subr.mxu0 0.0
    %436 = vmatpush1.xpose.msra.mxu0 0.0
    %437 = vmatprep.subr.mxu0 0.0
    %438 = vmatpush1.xpose.msra.mxu0 0.0
    %439 = vmatprep.subr.mxu0 0.0
    %440 = vmatpush1.xpose.msra.mxu0 0.0
    %441 = vmatprep.subr.mxu0 0.0
    %442 = vmatpush1.xpose.msra.mxu0 0.0
    %443 = vmatprep.subr.mxu0 0.0
    %444 = vmatpush1.xpose.msra.mxu0 0.0
    %445 = vmatprep.subr.mxu0 0.0
    %446 = vmatpush1.xpose.msra.mxu0 0.0
    %447 = vmatprep.subr.mxu0 0.0
    %448 = vmatpush1.xpose.msra.mxu0 0.0
    %449 = vmatprep.subr.mxu0 0.0
    %450 = vmatpush1.xpose.msra.mxu0 0.0
    %451 = vmatprep.subr.mxu0 0.0
    %452 = vmatpush1.xpose.msra.mxu0 0.0
    %453 = vmatprep.subr.mxu0 0.0
    %454 = vmatpush1.xpose.msra.mxu0 0.0
    %455 = vmatprep.subr.mxu0 0.0
    %456 = vmatpush1.xpose.msra.mxu0 0.0
    %457 = vmatprep.subr.mxu0 0.0
    %458 = vmatpush1.xpose.msra.mxu0 0.0
    %459 = vmatprep.subr.mxu0 0.0
    %460 = vmatpush1.xpose.msra.mxu0 0.0
    %461 = vmatprep.mubr.f32.mxu0 0.0
    %462 = vmatmul.mubr.f32.gmra.mrb[0].mxu0 %v393
    %v463 = vpop.f32.mrb[0].mxu0
    %v464 = vadd.f32 0.0, %v463
    %v465 = vpop.f32.mrb[0].mxu0
    %466 = vdwg.mxu0
    %v467 = vsel %vm299, %v464, -1e+09
    %v468 = vsel %vm223, %v467, -inf
    %469 = vmax.xlane.f32.xlu0 %v468
    %v470 = vpop.xlane.xlu0 %469
    %v471 = vsub.f32 %v467, %v470
    %v472 = vmul.f32 %v471, 1.442695
    %v473 = vpow.pop %v472
    %v474 = vsel %vm223, %v473, 0.0
    %475 = vadd.xlane.f32.xlu0 %v474
    %v476 = vpop.xlane.xlu0 %475
    %v477 = vrcp.pop %v476
    %v478 = vmul.f32 %v473, %v477
    %479 = vrot.lane.b32.xlu0 %v218, 56
    %v480 = vpop.permute.xlu0 %479
    %v483 = vsel %vm223, %v478, 0
    %485 = vmatprep.subr.mxu0 0.0
    %486 = vmatpush1.msra.mxu0 %v480
    %487 = vmatprep.subr.mxu0 0.0
    %488 = vmatpush1.msra.mxu0 0.0
    %489 = vmatprep.subr.mxu0 0.0
    %490 = vmatpush1.msra.mxu0 0.0
    %491 = vmatprep.subr.mxu0 0.0
    %492 = vmatpush1.msra.mxu0 0.0
    %493 = vmatprep.subr.mxu0 0.0
    %494 = vmatpush1.msra.mxu0 0.0
    %495 = vmatprep.subr.mxu0 0.0
    %496 = vmatpush1.msra.mxu0 0.0
    %497 = vmatprep.subr.mxu0 0.0
    %498 = vmatpush1.msra.mxu0 0.0
    %499 = vmatprep.subr.mxu0 0.0
    %500 = vmatpush1.msra.mxu0 0.0
    %501 = vmatprep.subr.mxu0 0.0
    %502 = vmatpush1.msra.mxu0 0.0
    %503 = vmatprep.subr.mxu0 0.0
    %504 = vmatpush1.msra.mxu0 0.0
    %505 = vmatprep.subr.mxu0 0.0
    %506 = vmatpush1.msra.mxu0 0.0
    %507 = vmatprep.subr.mxu0 0.0
    %508 = vmatpush1.msra.mxu0 0.0
    %509 = vmatprep.subr.mxu0 0.0
    %510 = vmatpush1.msra.mxu0 0.0
    %511 = vmatprep.subr.mxu0 0.0
    %512 = vmatpush1.msra.mxu0 0.0
    %513 = vmatprep.subr.mxu0 0.0
    %514 = vmatpush1.msra.mxu0 0.0
    %515 = vmatprep.subr.mxu0 0.0
    %516 = vmatpush1.msra.mxu0 0.0
    %517 = vmatprep.subr.mxu0 0.0
    %518 = vmatpush1.msra.mxu0 0.0
    %519 = vmatprep.subr.mxu0 0.0
    %520 = vmatpush1.msra.mxu0 0.0
    %521 = vmatprep.subr.mxu0 0.0
    %522 = vmatpush1.msra.mxu0 0.0
    %523 = vmatprep.subr.mxu0 0.0
    %524 = vmatpush1.msra.mxu0 0.0
    %525 = vmatprep.subr.mxu0 0.0
    %526 = vmatpush1.msra.mxu0 0.0
    %527 = vmatprep.subr.mxu0 0.0
    %528 = vmatpush1.msra.mxu0 0.0
    %529 = vmatprep.subr.mxu0 0.0
    %530 = vmatpush1.msra.mxu0 0.0
    %531 = vmatprep.subr.mxu0 0.0
    %532 = vmatpush1.msra.mxu0 0.0
    %533 = vmatprep.subr.mxu0 0.0
    %534 = vmatpush1.msra.mxu0 0.0
    %535 = vmatprep.subr.mxu0 0.0
    %536 = vmatpush1.msra.mxu0 0.0
    %537 = vmatprep.subr.mxu0 0.0
    %538 = vmatpush1.msra.mxu0 0.0
    %539 = vmatprep.subr.mxu0 0.0
    %540 = vmatpush1.msra.mxu0 0.0
    %541 = vmatprep.subr.mxu0 0.0
    %542 = vmatpush1.msra.mxu0 0.0
    %543 = vmatprep.subr.mxu0 0.0
    %544 = vmatpush1.msra.mxu0 0.0
    %545 = vmatprep.subr.mxu0 0.0
    %546 = vmatpush1.msra.mxu0 0.0
    %547 = vmatprep.subr.mxu0 0.0
    %548 = vmatpush1.msra.mxu0 0.0
    %549 = vmatprep.mubr.f32.mxu0 0.0
    %550 = vmatmul.mubr.f32.gmra.mrb[0].mxu0 %v483
    %v551 = vpop.f32.mrb[0].mxu0
    %v552 = vadd.f32 0.0, %v551
    %v553 = vpop.f32.mrb[0].mxu0
    %554 = vdwg.mxu0
    %555 = vrot.lane.b32.xlu0 %v198, 112
    %v556 = vpop.permute.xlu0 %555
    %557 = vrot.lane.b32.xlu0 %v208, 80
    %v558 = vpop.permute.xlu0 %557
    %v559 = vsel %vm223, %v556, 0
    %v561 = vsel %vm223, %v558, 0
    %563 = vmatprep.subr.mxu0 0.0
    %564 = vmatpush1.xpose.msra.mxu0 %v561
    %565 = vmatprep.subr.mxu0 0.0
    %566 = vmatpush1.xpose.msra.mxu0 0.0
    %567 = vmatprep.subr.mxu0 0.0
    %568 = vmatpush1.xpose.msra.mxu0 0.0
    %569 = vmatprep.subr.mxu0 0.0
    %570 = vmatpush1.xpose.msra.mxu0 0.0
    %571 = vmatprep.subr.mxu0 0.0
    %572 = vmatpush1.xpose.msra.mxu0 0.0
    %573 = vmatprep.subr.mxu0 0.0
    %574 = vmatpush1.xpose.msra.mxu0 0.0
    %575 = vmatprep.subr.mxu0 0.0
    %576 = vmatpush1.xpose.msra.mxu0 0.0
    %577 = vmatprep.subr.mxu0 0.0
    %578 = vmatpush1.xpose.msra.mxu0 0.0
    %579 = vmatprep.subr.mxu0 0.0
    %580 = vmatpush1.xpose.msra.mxu0 0.0
    %581 = vmatprep.subr.mxu0 0.0
    %582 = vmatpush1.xpose.msra.mxu0 0.0
    %583 = vmatprep.subr.mxu0 0.0
    %584 = vmatpush1.xpose.msra.mxu0 0.0
    %585 = vmatprep.subr.mxu0 0.0
    %586 = vmatpush1.xpose.msra.mxu0 0.0
    %587 = vmatprep.subr.mxu0 0.0
    %588 = vmatpush1.xpose.msra.mxu0 0.0
    %589 = vmatprep.subr.mxu0 0.0
    %590 = vmatpush1.xpose.msra.mxu0 0.0
    %591 = vmatprep.subr.mxu0 0.0
    %592 = vmatpush1.xpose.msra.mxu0 0.0
    %593 = vmatprep.subr.mxu0 0.0
    %594 = vmatpush1.xpose.msra.mxu0 0.0
    %595 = vmatprep.subr.mxu0 0.0
    %596 = vmatpush1.xpose.msra.mxu0 0.0
    %597 = vmatprep.subr.mxu0 0.0
    %598 = vmatpush1.xpose.msra.mxu0 0.0
    %599 = vmatprep.subr.mxu0 0.0
    %600 = vmatpush1.xpose.msra.mxu0 0.0
    %601 = vmatprep.subr.mxu0 0.0
    %602 = vmatpush1.xpose.msra.mxu0 0.0
    %603 = vmatprep.subr.mxu0 0.0
    %604 = vmatpush1.xpose.msra.mxu0 0.0
    %605 = vmatprep.subr.mxu0 0.0
    %606 = vmatpush1.xpose.msra.mxu0 0.0
    %607 = vmatprep.subr.mxu0 0.0
    %608 = vmatpush1.xpose.msra.mxu0 0.0
    %609 = vmatprep.subr.mxu0 0.0
    %610 = vmatpush1.xpose.msra.mxu0 0.0
    %611 = vmatprep.subr.mxu0 0.0
    %612 = vmatpush1.xpose.msra.mxu0 0.0
    %613 = vmatprep.subr.mxu0 0.0
    %614 = vmatpush1.xpose.msra.mxu0 0.0
    %615 = vmatprep.subr.mxu0 0.0
    %616 = vmatpush1.xpose.msra.mxu0 0.0
    %617 = vmatprep.subr.mxu0 0.0
    %618 = vmatpush1.xpose.msra.mxu0 0.0
    %619 = vmatprep.subr.mxu0 0.0
    %620 = vmatpush1.xpose.msra.mxu0 0.0
    %621 = vmatprep.subr.mxu0 0.0
    %622 = vmatpush1.xpose.msra.mxu0 0.0
    %623 = vmatprep.subr.mxu0 0.0
    %624 = vmatpush1.xpose.msra.mxu0 0.0
    %625 = vmatprep.subr.mxu0 0.0
    %626 = vmatpush1.xpose.msra.mxu0 0.0
    %627 = vmatprep.mubr.f32.mxu0 0.0
    %628 = vmatmul.mubr.f32.gmra.mrb[0].mxu0 %v559
    %v629 = vpop.f32.mrb[0].mxu0
    %v630 = vadd.f32 0.0, %v629
    %v631 = vpop.f32.mrb[0].mxu0
    %632 = vdwg.mxu0
    %v633 = vsel %vm299, %v630, -1e+09
    %v634 = vsel %vm223, %v633, -inf
    %635 = vmax.xlane.f32.xlu0 %v634
    %v636 = vpop.xlane.xlu0 %635
    %v637 = vsub.f32 %v633, %v636
    %v638 = vmul.f32 %v637, 1.442695
    %v639 = vpow.pop %v638
    %v640 = vsel %vm223, %v639, 0.0
    %641 = vadd.xlane.f32.xlu0 %v640
    %v642 = vpop.xlane.xlu0 %641
    %v643 = vrcp.pop %v642
    %v644 = vmul.f32 %v639, %v643
    %645 = vrot.lane.b32.xlu0 %v218, 48
    %v646 = vpop.permute.xlu0 %645
    %v649 = vsel %vm223, %v644, 0
    %651 = vmatprep.subr.mxu0 0.0
    %652 = vmatpush1.msra.mxu0 %v646
    %653 = vmatprep.subr.mxu0 0.0
    %654 = vmatpush1.msra.mxu0 0.0
    %655 = vmatprep.subr.mxu0 0.0
    %656 = vmatpush1.msra.mxu0 0.0
    %657 = vmatprep.subr.mxu0 0.0
    %658 = vmatpush1.msra.mxu0 0.0
    %659 = vmatprep.subr.mxu0 0.0
    %660 = vmatpush1.msra.mxu0 0.0
    %661 = vmatprep.subr.mxu0 0.0
    %662 = vmatpush1.msra.mxu0 0.0
    %663 = vmatprep.subr.mxu0 0.0
    %664 = vmatpush1.msra.mxu0 0.0
    %665 = vmatprep.subr.mxu0 0.0
    %666 = vmatpush1.msra.mxu0 0.0
    %667 = vmatprep.subr.mxu0 0.0
    %668 = vmatpush1.msra.mxu0 0.0
    %669 = vmatprep.subr.mxu0 0.0
    %670 = vmatpush1.msra.mxu0 0.0
    %671 = vmatprep.subr.mxu0 0.0
    %672 = vmatpush1.msra.mxu0 0.0
    %673 = vmatprep.subr.mxu0 0.0
    %674 = vmatpush1.msra.mxu0 0.0
    %675 = vmatprep.subr.mxu0 0.0
    %676 = vmatpush1.msra.mxu0 0.0
    %677 = vmatprep.subr.mxu0 0.0
    %678 = vmatpush1.msra.mxu0 0.0
    %679 = vmatprep.subr.mxu0 0.0
    %680 = vmatpush1.msra.mxu0 0.0
    %681 = vmatprep.subr.mxu0 0.0
    %682 = vmatpush1.msra.mxu0 0.0
    %683 = vmatprep.subr.mxu0 0.0
    %684 = vmatpush1.msra.mxu0 0.0
    %685 = vmatprep.subr.mxu0 0.0
    %686 = vmatpush1.msra.mxu0 0.0
    %687 = vmatprep.subr.mxu0 0.0
    %688 = vmatpush1.msra.mxu0 0.0
    %689 = vmatprep.subr.mxu0 0.0
    %690 = vmatpush1.msra.mxu0 0.0
    %691 = vmatprep.subr.mxu0 0.0
    %692 = vmatpush1.msra.mxu0 0.0
    %693 = vmatprep.subr.mxu0 0.0
    %694 = vmatpush1.msra.mxu0 0.0
    %695 = vmatprep.subr.mxu0 0.0
    %696 = vmatpush1.msra.mxu0 0.0
    %697 = vmatprep.subr.mxu0 0.0
    %698 = vmatpush1.msra.mxu0 0.0
    %699 = vmatprep.subr.mxu0 0.0
    %700 = vmatpush1.msra.mxu0 0.0
    %701 = vmatprep.subr.mxu0 0.0
    %702 = vmatpush1.msra.mxu0 0.0
    %703 = vmatprep.subr.mxu0 0.0
    %704 = vmatpush1.msra.mxu0 0.0
    %705 = vmatprep.subr.mxu0 0.0
    %706 = vmatpush1.msra.mxu0 0.0
    %707 = vmatprep.subr.mxu0 0.0
    %708 = vmatpush1.msra.mxu0 0.0
    %709 = vmatprep.subr.mxu0 0.0
    %710 = vmatpush1.msra.mxu0 0.0
    %711 = vmatprep.subr.mxu0 0.0
    %712 = vmatpush1.msra.mxu0 0.0
    %713 = vmatprep.subr.mxu0 0.0
    %714 = vmatpush1.msra.mxu0 0.0
    %715 = vmatprep.mubr.f32.mxu0 0.0
    %716 = vmatmul.mubr.f32.gmra.mrb[0].mxu0 %v649
    %v717 = vpop.f32.mrb[0].mxu0
    %v718 = vadd.f32 0.0, %v717
    %v719 = vpop.f32.mrb[0].mxu0
    %720 = vdwg.mxu0
    %721 = vrot.lane.b32.xlu0 %v198, 104
    %v722 = vpop.permute.xlu0 %721
    %723 = vrot.lane.b32.xlu0 %v208, 72
    %v724 = vpop.permute.xlu0 %723
    %v725 = vsel %vm223, %v722, 0
    %v727 = vsel %vm223, %v724, 0
    %729 = vmatprep.subr.mxu0 0.0
    %730 = vmatpush1.xpose.msra.mxu0 %v727
    %731 = vmatprep.subr.mxu0 0.0
    %732 = vmatpush1.xpose.msra.mxu0 0.0
    %733 = vmatprep.subr.mxu0 0.0
    %734 = vmatpush1.xpose.msra.mxu0 0.0
    %735 = vmatprep.subr.mxu0 0.0
    %736 = vmatpush1.xpose.msra.mxu0 0.0
    %737 = vmatprep.subr.mxu0 0.0
    %738 = vmatpush1.xpose.msra.mxu0 0.0
    %739 = vmatprep.subr.mxu0 0.0
    %740 = vmatpush1.xpose.msra.mxu0 0.0
    %741 = vmatprep.subr.mxu0 0.0
    %742 = vmatpush1.xpose.msra.mxu0 0.0
    %743 = vmatprep.subr.mxu0 0.0
    %744 = vmatpush1.xpose.msra.mxu0 0.0
    %745 = vmatprep.subr.mxu0 0.0
    %746 = vmatpush1.xpose.msra.mxu0 0.0
    %747 = vmatprep.subr.mxu0 0.0
    %748 = vmatpush1.xpose.msra.mxu0 0.0
    %749 = vmatprep.subr.mxu0 0.0
    %750 = vmatpush1.xpose.msra.mxu0 0.0
    %751 = vmatprep.subr.mxu0 0.0
    %752 = vmatpush1.xpose.msra.mxu0 0.0
    %753 = vmatprep.subr.mxu0 0.0
    %754 = vmatpush1.xpose.msra.mxu0 0.0
    %755 = vmatprep.subr.mxu0 0.0
    %756 = vmatpush1.xpose.msra.mxu0 0.0
    %757 = vmatprep.subr.mxu0 0.0
    %758 = vmatpush1.xpose.msra.mxu0 0.0
    %759 = vmatprep.subr.mxu0 0.0
    %760 = vmatpush1.xpose.msra.mxu0 0.0
    %761 = vmatprep.subr.mxu0 0.0
    %762 = vmatpush1.xpose.msra.mxu0 0.0
    %763 = vmatprep.subr.mxu0 0.0
    %764 = vmatpush1.xpose.msra.mxu0 0.0
    %765 = vmatprep.subr.mxu0 0.0
    %766 = vmatpush1.xpose.msra.mxu0 0.0
    %767 = vmatprep.subr.mxu0 0.0
    %768 = vmatpush1.xpose.msra.mxu0 0.0
    %769 = vmatprep.subr.mxu0 0.0
    %770 = vmatpush1.xpose.msra.mxu0 0.0
    %771 = vmatprep.subr.mxu0 0.0
    %772 = vmatpush1.xpose.msra.mxu0 0.0
    %773 = vmatprep.subr.mxu0 0.0
    %774 = vmatpush1.xpose.msra.mxu0 0.0
    %775 = vmatprep.subr.mxu0 0.0
    %776 = vmatpush1.xpose.msra.mxu0 0.0
    %777 = vmatprep.subr.mxu0 0.0
    %778 = vmatpush1.xpose.msra.mxu0 0.0
    %779 = vmatprep.subr.mxu0 0.0
    %780 = vmatpush1.xpose.msra.mxu0 0.0
    %781 = vmatprep.subr.mxu0 0.0
    %782 = vmatpush1.xpose.msra.mxu0 0.0
    %783 = vmatprep.subr.mxu0 0.0
    %784 = vmatpush1.xpose.msra.mxu0 0.0
    %785 = vmatprep.subr.mxu0 0.0
    %786 = vmatpush1.xpose.msra.mxu0 0.0
    %787 = vmatprep.subr.mxu0 0.0
    %788 = vmatpush1.xpose.msra.mxu0 0.0
    %789 = vmatprep.subr.mxu0 0.0
    %790 = vmatpush1.xpose.msra.mxu0 0.0
    %791 = vmatprep.subr.mxu0 0.0
    %792 = vmatpush1.xpose.msra.mxu0 0.0
    %793 = vmatprep.mubr.f32.mxu0 0.0
    %794 = vmatmul.mubr.f32.gmra.mrb[0].mxu0 %v725
    %v795 = vpop.f32.mrb[0].mxu0
    %v796 = vadd.f32 0.0, %v795
    %v797 = vpop.f32.mrb[0].mxu0
    %798 = vdwg.mxu0
    %v799 = vsel %vm299, %v796, -1e+09
    %v800 = vsel %vm223, %v799, -inf
    %801 = vmax.xlane.f32.xlu0 %v800
    %v802 = vpop.xlane.xlu0 %801
    %v803 = vsub.f32 %v799, %v802
    %v804 = vmul.f32 %v803, 1.442695
    %v805 = vpow.pop %v804
    %v806 = vsel %vm223, %v805, 0.0
    %807 = vadd.xlane.f32.xlu0 %v806
    %v808 = vpop.xlane.xlu0 %807
    %v809 = vrcp.pop %v808
    %v810 = vmul.f32 %v805, %v809
    %811 = vrot.lane.b32.xlu0 %v218, 40
    %v812 = vpop.permute.xlu0 %811
    %v815 = vsel %vm223, %v810, 0
    %817 = vmatprep.subr.mxu0 0.0
    %818 = vmatpush1.msra.mxu0 %v812
    %819 = vmatprep.subr.mxu0 0.0
    %820 = vmatpush1.msra.mxu0 0.0
    %821 = vmatprep.subr.mxu0 0.0
    %822 = vmatpush1.msra.mxu0 0.0
    %823 = vmatprep.subr.mxu0 0.0
    %824 = vmatpush1.msra.mxu0 0.0
    %825 = vmatprep.subr.mxu0 0.0
    %826 = vmatpush1.msra.mxu0 0.0
    %827 = vmatprep.subr.mxu0 0.0
    %828 = vmatpush1.msra.mxu0 0.0
    %829 = vmatprep.subr.mxu0 0.0
    %830 = vmatpush1.msra.mxu0 0.0
    %831 = vmatprep.subr.mxu0 0.0
    %832 = vmatpush1.msra.mxu0 0.0
    %833 = vmatprep.subr.mxu0 0.0
    %834 = vmatpush1.msra.mxu0 0.0
    %835 = vmatprep.subr.mxu0 0.0
    %836 = vmatpush1.msra.mxu0 0.0
    %837 = vmatprep.subr.mxu0 0.0
    %838 = vmatpush1.msra.mxu0 0.0
    %839 = vmatprep.subr.mxu0 0.0
    %840 = vmatpush1.msra.mxu0 0.0
    %841 = vmatprep.subr.mxu0 0.0
    %842 = vmatpush1.msra.mxu0 0.0
    %843 = vmatprep.subr.mxu0 0.0
    %844 = vmatpush1.msra.mxu0 0.0
    %845 = vmatprep.subr.mxu0 0.0
    %846 = vmatpush1.msra.mxu0 0.0
    %847 = vmatprep.subr.mxu0 0.0
    %848 = vmatpush1.msra.mxu0 0.0
    %849 = vmatprep.subr.mxu0 0.0
    %850 = vmatpush1.msra.mxu0 0.0
    %851 = vmatprep.subr.mxu0 0.0
    %852 = vmatpush1.msra.mxu0 0.0
    %853 = vmatprep.subr.mxu0 0.0
    %854 = vmatpush1.msra.mxu0 0.0
    %855 = vmatprep.subr.mxu0 0.0
    %856 = vmatpush1.msra.mxu0 0.0
    %857 = vmatprep.subr.mxu0 0.0
    %858 = vmatpush1.msra.mxu0 0.0
    %859 = vmatprep.subr.mxu0 0.0
    %860 = vmatpush1.msra.mxu0 0.0
    %861 = vmatprep.subr.mxu0 0.0
    %862 = vmatpush1.msra.mxu0 0.0
    %863 = vmatprep.subr.mxu0 0.0
    %864 = vmatpush1.msra.mxu0 0.0
    %865 = vmatprep.subr.mxu0 0.0
    %866 = vmatpush1.msra.mxu0 0.0
    %867 = vmatprep.subr.mxu0 0.0
    %868 = vmatpush1.msra.mxu0 0.0
    %869 = vmatprep.subr.mxu0 0.0
    %870 = vmatpush1.msra.mxu0 0.0
    %871 = vmatprep.subr.mxu0 0.0
    %872 = vmatpush1.msra.mxu0 0.0
    %873 = vmatprep.subr.mxu0 0.0
    %874 = vmatpush1.msra.mxu0 0.0
    %875 = vmatprep.subr.mxu0 0.0
    %876 = vmatpush1.msra.mxu0 0.0
    %877 = vmatprep.subr.mxu0 0.0
    %878 = vmatpush1.msra.mxu0 0.0
    %879 = vmatprep.subr.mxu0 0.0
    %880 = vmatpush1.msra.mxu0 0.0
    %881 = vmatprep.mubr.f32.mxu0 0.0
    %882 = vmatmul.mubr.f32.gmra.mrb[0].mxu0 %v815
    %v883 = vpop.f32.mrb[0].mxu0
    %v884 = vadd.f32 0.0, %v883
    %v885 = vpop.f32.mrb[0].mxu0
    %886 = vdwg.mxu0
    %888 = vrot.lane.b32.xlu0 %v552, 8
    %v889 = vpop.permute.xlu0 %888
    %892 = vrot.lane.b32.xlu0 %v718, 16
    %v893 = vpop.permute.xlu0 %892
    %896 = vrot.lane.b32.xlu0 %v884, 24
    %v897 = vpop.permute.xlu0 %896
    %v899 = vsel %vm223, %v386, %v889
    %vm900 = vcmask 130048
    %v901 = vsel %vm900, %v899, %v893
    %vm902 = vcmask 195584
    %v903 = vsel %vm902, %v901, %v897
    %905 = vrot.lane.b32.xlu0 %v209, 96
    %v906 = vpop.permute.xlu0 %905
    %v908 = vsel %vm223, %v199, 0
    %v910 = vsel %vm223, %v906, 0
    %912 = vmatprep.subr.mxu0 0.0
    %913 = vmatpush1.xpose.msra.mxu0 %v910
    %914 = vmatprep.subr.mxu0 0.0
    %915 = vmatpush1.xpose.msra.mxu0 0.0
    %916 = vmatprep.subr.mxu0 0.0
    %917 = vmatpush1.xpose.msra.mxu0 0.0
    %918 = vmatprep.subr.mxu0 0.0
    %919 = vmatpush1.xpose.msra.mxu0 0.0
    %920 = vmatprep.subr.mxu0 0.0
    %921 = vmatpush1.xpose.msra.mxu0 0.0
    %922 = vmatprep.subr.mxu0 0.0
    %923 = vmatpush1.xpose.msra.mxu0 0.0
    %924 = vmatprep.subr.mxu0 0.0
    %925 = vmatpush1.xpose.msra.mxu0 0.0
    %926 = vmatprep.subr.mxu0 0.0
    %927 = vmatpush1.xpose.msra.mxu0 0.0
    %928 = vmatprep.subr.mxu0 0.0
    %929 = vmatpush1.xpose.msra.mxu0 0.0
    %930 = vmatprep.subr.mxu0 0.0
    %931 = vmatpush1.xpose.msra.mxu0 0.0
    %932 = vmatprep.subr.mxu0 0.0
    %933 = vmatpush1.xpose.msra.mxu0 0.0
    %934 = vmatprep.subr.mxu0 0.0
    %935 = vmatpush1.xpose.msra.mxu0 0.0
    %936 = vmatprep.subr.mxu0 0.0
    %937 = vmatpush1.xpose.msra.mxu0 0.0
    %938 = vmatprep.subr.mxu0 0.0
    %939 = vmatpush1.xpose.msra.mxu0 0.0
    %940 = vmatprep.subr.mxu0 0.0
    %941 = vmatpush1.xpose.msra.mxu0 0.0
    %942 = vmatprep.subr.mxu0 0.0
    %943 = vmatpush1.xpose.msra.mxu0 0.0
    %944 = vmatprep.subr.mxu0 0.0
    %945 = vmatpush1.xpose.msra.mxu0 0.0
    %946 = vmatprep.subr.mxu0 0.0
    %947 = vmatpush1.xpose.msra.mxu0 0.0
    %948 = vmatprep.subr.mxu0 0.0
    %949 = vmatpush1.xpose.msra.mxu0 0.0
    %950 = vmatprep.subr.mxu0 0.0
    %951 = vmatpush1.xpose.msra.mxu0 0.0
    %952 = vmatprep.subr.mxu0 0.0
    %953 = vmatpush1.xpose.msra.mxu0 0.0
    %954 = vmatprep.subr.mxu0 0.0
    %955 = vmatpush1.xpose.msra.mxu0 0.0
    %956 = vmatprep.subr.mxu0 0.0
    %957 = vmatpush1.xpose.msra.mxu0 0.0
    %958 = vmatprep.subr.mxu0 0.0
    %959 = vmatpush1.xpose.msra.mxu0 0.0
    %960 = vmatprep.subr.mxu0 0.0
    %961 = vmatpush1.xpose.msra.mxu0 0.0
    %962 = vmatprep.subr.mxu0 0.0
    %963 = vmatpush1.xpose.msra.mxu0 0.0
    %964 = vmatprep.subr.mxu0 0.0
    %965 = vmatpush1.xpose.msra.mxu0 0.0
    %966 = vmatprep.subr.mxu0 0.0
    %967 = vmatpush1.xpose.msra.mxu0 0.0
    %968 = vmatprep.subr.mxu0 0.0
    %969 = vmatpush1.xpose.msra.mxu0 0.0
    %970 = vmatprep.subr.mxu0 0.0
    %971 = vmatpush1.xpose.msra.mxu0 0.0
    %972 = vmatprep.subr.mxu0 0.0
    %973 = vmatpush1.xpose.msra.mxu0 0.0
    %974 = vmatprep.subr.mxu0 0.0
    %975 = vmatpush1.xpose.msra.mxu0 0.0
    %976 = vmatprep.mubr.f32.mxu0 0.0
    %977 = vmatmul.mubr.f32.gmra.mrb[0].mxu0 %v908
    %v978 = vpop.f32.mrb[0].mxu0
    %v979 = vadd.f32 0.0, %v978
    %v980 = vpop.f32.mrb[0].mxu0
    %981 = vdwg.mxu0
    %vm982 = vcmp.gt.f32.partialorder %v47, 0.0
    %v983 = vsel %vm982, %v979, -1e+09
    %v984 = vsel %vm223, %v983, -inf
    %985 = vmax.xlane.f32.xlu0 %v984
    %v986 = vpop.xlane.xlu0 %985
    %v987 = vsub.f32 %v983, %v986
    %v988 = vmul.f32 %v987, 1.442695
    %v989 = vpow.pop %v988
    %v990 = vsel %vm223, %v989, 0.0
    %991 = vadd.xlane.f32.xlu0 %v990
    %v992 = vpop.xlane.xlu0 %991
    %v993 = vrcp.pop %v992
    %v994 = vmul.f32 %v989, %v993
    %996 = vrot.lane.b32.xlu0 %v219, 64
    %v997 = vpop.permute.xlu0 %996
    %v1000 = vsel %vm223, %v994, 0
    %1002 = vmatprep.subr.mxu0 0.0
    %1003 = vmatpush1.msra.mxu0 %v997
    %1004 = vmatprep.subr.mxu0 0.0
    %1005 = vmatpush1.msra.mxu0 0.0
    %1006 = vmatprep.subr.mxu0 0.0
    %1007 = vmatpush1.msra.mxu0 0.0
    %1008 = vmatprep.subr.mxu0 0.0
    %1009 = vmatpush1.msra.mxu0 0.0
    %1010 = vmatprep.subr.mxu0 0.0
    %1011 = vmatpush1.msra.mxu0 0.0
    %1012 = vmatprep.subr.mxu0 0.0
    %1013 = vmatpush1.msra.mxu0 0.0
    %1014 = vmatprep.subr.mxu0 0.0
    %1015 = vmatpush1.msra.mxu0 0.0
    %1016 = vmatprep.subr.mxu0 0.0
    %1017 = vmatpush1.msra.mxu0 0.0
    %1018 = vmatprep.subr.mxu0 0.0
    %1019 = vmatpush1.msra.mxu0 0.0
    %1020 = vmatprep.subr.mxu0 0.0
    %1021 = vmatpush1.msra.mxu0 0.0
    %1022 = vmatprep.subr.mxu0 0.0
    %1023 = vmatpush1.msra.mxu0 0.0
    %1024 = vmatprep.subr.mxu0 0.0
    %1025 = vmatpush1.msra.mxu0 0.0
    %1026 = vmatprep.subr.mxu0 0.0
    %1027 = vmatpush1.msra.mxu0 0.0
    %1028 = vmatprep.subr.mxu0 0.0
    %1029 = vmatpush1.msra.mxu0 0.0
    %1030 = vmatprep.subr.mxu0 0.0
    %1031 = vmatpush1.msra.mxu0 0.0
    %1032 = vmatprep.subr.mxu0 0.0
    %1033 = vmatpush1.msra.mxu0 0.0
    %1034 = vmatprep.subr.mxu0 0.0
    %1035 = vmatpush1.msra.mxu0 0.0
    %1036 = vmatprep.subr.mxu0 0.0
    %1037 = vmatpush1.msra.mxu0 0.0
    %1038 = vmatprep.subr.mxu0 0.0
    %1039 = vmatpush1.msra.mxu0 0.0
    %1040 = vmatprep.subr.mxu0 0.0
    %1041 = vmatpush1.msra.mxu0 0.0
    %1042 = vmatprep.subr.mxu0 0.0
    %1043 = vmatpush1.msra.mxu0 0.0
    %1044 = vmatprep.subr.mxu0 0.0
    %1045 = vmatpush1.msra.mxu0 0.0
    %1046 = vmatprep.subr.mxu0 0.0
    %1047 = vmatpush1.msra.mxu0 0.0
    %1048 = vmatprep.subr.mxu0 0.0
    %1049 = vmatpush1.msra.mxu0 0.0
    %1050 = vmatprep.subr.mxu0 0.0
    %1051 = vmatpush1.msra.mxu0 0.0
    %1052 = vmatprep.subr.mxu0 0.0
    %1053 = vmatpush1.msra.mxu0 0.0
    %1054 = vmatprep.subr.mxu0 0.0
    %1055 = vmatpush1.msra.mxu0 0.0
    %1056 = vmatprep.subr.mxu0 0.0
    %1057 = vmatpush1.msra.mxu0 0.0
    %1058 = vmatprep.subr.mxu0 0.0
    %1059 = vmatpush1.msra.mxu0 0.0
    %1060 = vmatprep.subr.mxu0 0.0
    %1061 = vmatpush1.msra.mxu0 0.0
    %1062 = vmatprep.subr.mxu0 0.0
    %1063 = vmatpush1.msra.mxu0 0.0
    %1064 = vmatprep.subr.mxu0 0.0
    %1065 = vmatpush1.msra.mxu0 0.0
    %1066 = vmatprep.mubr.f32.mxu0 0.0
    %1067 = vmatmul.mubr.f32.gmra.mrb[0].mxu0 %v1000
    %v1068 = vpop.f32.mrb[0].mxu0
    %v1069 = vadd.f32 0.0, %v1068
    %v1070 = vpop.f32.mrb[0].mxu0
    %1071 = vdwg.mxu0
    %1072 = vrot.lane.b32.xlu0 %v199, 120
    %v1073 = vpop.permute.xlu0 %1072
    %1074 = vrot.lane.b32.xlu0 %v209, 88
    %v1075 = vpop.permute.xlu0 %1074
    %v1076 = vsel %vm223, %v1073, 0
    %v1078 = vsel %vm223, %v1075, 0
    %1080 = vmatprep.subr.mxu0 0.0
    %1081 = vmatpush1.xpose.msra.mxu0 %v1078
    %1082 = vmatprep.subr.mxu0 0.0
    %1083 = vmatpush1.xpose.msra.mxu0 0.0
    %1084 = vmatprep.subr.mxu0 0.0
    %1085 = vmatpush1.xpose.msra.mxu0 0.0
    %1086 = vmatprep.subr.mxu0 0.0
    %1087 = vmatpush1.xpose.msra.mxu0 0.0
    %1088 = vmatprep.subr.mxu0 0.0
    %1089 = vmatpush1.xpose.msra.mxu0 0.0
    %1090 = vmatprep.subr.mxu0 0.0
    %1091 = vmatpush1.xpose.msra.mxu0 0.0
    %1092 = vmatprep.subr.mxu0 0.0
    %1093 = vmatpush1.xpose.msra.mxu0 0.0
    %1094 = vmatprep.subr.mxu0 0.0
    %1095 = vmatpush1.xpose.msra.mxu0 0.0
    %1096 = vmatprep.subr.mxu0 0.0
    %1097 = vmatpush1.xpose.msra.mxu0 0.0
    %1098 = vmatprep.subr.mxu0 0.0
    %1099 = vmatpush1.xpose.msra.mxu0 0.0
    %1100 = vmatprep.subr.mxu0 0.0
    %1101 = vmatpush1.xpose.msra.mxu0 0.0
    %1102 = vmatprep.subr.mxu0 0.0
    %1103 = vmatpush1.xpose.msra.mxu0 0.0
    %1104 = vmatprep.subr.mxu0 0.0
    %1105 = vmatpush1.xpose.msra.mxu0 0.0
    %1106 = vmatprep.subr.mxu0 0.0
    %1107 = vmatpush1.xpose.msra.mxu0 0.0
    %1108 = vmatprep.subr.mxu0 0.0
    %1109 = vmatpush1.xpose.msra.mxu0 0.0
    %1110 = vmatprep.subr.mxu0 0.0
    %1111 = vmatpush1.xpose.msra.mxu0 0.0
    %1112 = vmatprep.subr.mxu0 0.0
    %1113 = vmatpush1.xpose.msra.mxu0 0.0
    %1114 = vmatprep.subr.mxu0 0.0
    %1115 = vmatpush1.xpose.msra.mxu0 0.0
    %1116 = vmatprep.subr.mxu0 0.0
    %1117 = vmatpush1.xpose.msra.mxu0 0.0
    %1118 = vmatprep.subr.mxu0 0.0
    %1119 = vmatpush1.xpose.msra.mxu0 0.0
    %1120 = vmatprep.subr.mxu0 0.0
    %1121 = vmatpush1.xpose.msra.mxu0 0.0
    %1122 = vmatprep.subr.mxu0 0.0
    %1123 = vmatpush1.xpose.msra.mxu0 0.0
    %1124 = vmatprep.subr.mxu0 0.0
    %1125 = vmatpush1.xpose.msra.mxu0 0.0
    %1126 = vmatprep.subr.mxu0 0.0
    %1127 = vmatpush1.xpose.msra.mxu0 0.0
    %1128 = vmatprep.subr.mxu0 0.0
    %1129 = vmatpush1.xpose.msra.mxu0 0.0
    %1130 = vmatprep.subr.mxu0 0.0
    %1131 = vmatpush1.xpose.msra.mxu0 0.0
    %1132 = vmatprep.subr.mxu0 0.0
    %1133 = vmatpush1.xpose.msra.mxu0 0.0
    %1134 = vmatprep.subr.mxu0 0.0
    %1135 = vmatpush1.xpose.msra.mxu0 0.0
    %1136 = vmatprep.subr.mxu0 0.0
    %1137 = vmatpush1.xpose.msra.mxu0 0.0
    %1138 = vmatprep.subr.mxu0 0.0
    %1139 = vmatpush1.xpose.msra.mxu0 0.0
    %1140 = vmatprep.subr.mxu0 0.0
    %1141 = vmatpush1.xpose.msra.mxu0 0.0
    %1142 = vmatprep.subr.mxu0 0.0
    %1143 = vmatpush1.xpose.msra.mxu0 0.0
    %1144 = vmatprep.mubr.f32.mxu0 0.0
    %1145 = vmatmul.mubr.f32.gmra.mrb[0].mxu0 %v1076
    %v1146 = vpop.f32.mrb[0].mxu0
    %v1147 = vadd.f32 0.0, %v1146
    %v1148 = vpop.f32.mrb[0].mxu0
    %1149 = vdwg.mxu0
    %v1150 = vsel %vm982, %v1147, -1e+09
    %v1151 = vsel %vm223, %v1150, -inf
    %1152 = vmax.xlane.f32.xlu0 %v1151
    %v1153 = vpop.xlane.xlu0 %1152
    %v1154 = vsub.f32 %v1150, %v1153
    %v1155 = vmul.f32 %v1154, 1.442695
    %v1156 = vpow.pop %v1155
    %v1157 = vsel %vm223, %v1156, 0.0
    %1158 = vadd.xlane.f32.xlu0 %v1157
    %v1159 = vpop.xlane.xlu0 %1158
    %v1160 = vrcp.pop %v1159
    %v1161 = vmul.f32 %v1156, %v1160
    %1162 = vrot.lane.b32.xlu0 %v219, 56
    %v1163 = vpop.permute.xlu0 %1162
    %v1166 = vsel %vm223, %v1161, 0
    %1168 = vmatprep.subr.mxu0 0.0
    %1169 = vmatpush1.msra.mxu0 %v1163
    %1170 = vmatprep.subr.mxu0 0.0
    %1171 = vmatpush1.msra.mxu0 0.0
    %1172 = vmatprep.subr.mxu0 0.0
    %1173 = vmatpush1.msra.mxu0 0.0
    %1174 = vmatprep.subr.mxu0 0.0
    %1175 = vmatpush1.msra.mxu0 0.0
    %1176 = vmatprep.subr.mxu0 0.0
    %1177 = vmatpush1.msra.mxu0 0.0
    %1178 = vmatprep.subr.mxu0 0.0
    %1179 = vmatpush1.msra.mxu0 0.0
    %1180 = vmatprep.subr.mxu0 0.0
    %1181 = vmatpush1.msra.mxu0 0.0
    %1182 = vmatprep.subr.mxu0 0.0
    %1183 = vmatpush1.msra.mxu0 0.0
    %1184 = vmatprep.subr.mxu0 0.0
    %1185 = vmatpush1.msra.mxu0 0.0
    %1186 = vmatprep.subr.mxu0 0.0
    %1187 = vmatpush1.msra.mxu0 0.0
    %1188 = vmatprep.subr.mxu0 0.0
    %1189 = vmatpush1.msra.mxu0 0.0
    %1190 = vmatprep.subr.mxu0 0.0
    %1191 = vmatpush1.msra.mxu0 0.0
    %1192 = vmatprep.subr.mxu0 0.0
    %1193 = vmatpush1.msra.mxu0 0.0
    %1194 = vmatprep.subr.mxu0 0.0
    %1195 = vmatpush1.msra.mxu0 0.0
    %1196 = vmatprep.subr.mxu0 0.0
    %1197 = vmatpush1.msra.mxu0 0.0
    %1198 = vmatprep.subr.mxu0 0.0
    %1199 = vmatpush1.msra.mxu0 0.0
    %1200 = vmatprep.subr.mxu0 0.0
    %1201 = vmatpush1.msra.mxu0 0.0
    %1202 = vmatprep.subr.mxu0 0.0
    %1203 = vmatpush1.msra.mxu0 0.0
    %1204 = vmatprep.subr.mxu0 0.0
    %1205 = vmatpush1.msra.mxu0 0.0
    %1206 = vmatprep.subr.mxu0 0.0
    %1207 = vmatpush1.msra.mxu0 0.0
    %1208 = vmatprep.subr.mxu0 0.0
    %1209 = vmatpush1.msra.mxu0 0.0
    %1210 = vmatprep.subr.mxu0 0.0
    %1211 = vmatpush1.msra.mxu0 0.0
    %1212 = vmatprep.subr.mxu0 0.0
    %1213 = vmatpush1.msra.mxu0 0.0
    %1214 = vmatprep.subr.mxu0 0.0
    %1215 = vmatpush1.msra.mxu0 0.0
    %1216 = vmatprep.subr.mxu0 0.0
    %1217 = vmatpush1.msra.mxu0 0.0
    %1218 = vmatprep.subr.mxu0 0.0
    %1219 = vmatpush1.msra.mxu0 0.0
    %1220 = vmatprep.subr.mxu0 0.0
    %1221 = vmatpush1.msra.mxu0 0.0
    %1222 = vmatprep.subr.mxu0 0.0
    %1223 = vmatpush1.msra.mxu0 0.0
    %1224 = vmatprep.subr.mxu0 0.0
    %1225 = vmatpush1.msra.mxu0 0.0
    %1226 = vmatprep.subr.mxu0 0.0
    %1227 = vmatpush1.msra.mxu0 0.0
    %1228 = vmatprep.subr.mxu0 0.0
    %1229 = vmatpush1.msra.mxu0 0.0
    %1230 = vmatprep.subr.mxu0 0.0
    %1231 = vmatpush1.msra.mxu0 0.0
    %1232 = vmatprep.mubr.f32.mxu0 0.0
    %1233 = vmatmul.mubr.f32.gmra.mrb[0].mxu0 %v1166
    %v1234 = vpop.f32.mrb[0].mxu0
    %v1235 = vadd.f32 0.0, %v1234
    %v1236 = vpop.f32.mrb[0].mxu0
    %1237 = vdwg.mxu0
    %1238 = vrot.lane.b32.xlu0 %v199, 112
    %v1239 = vpop.permute.xlu0 %1238
    %1240 = vrot.lane.b32.xlu0 %v209, 80
    %v1241 = vpop.permute.xlu0 %1240
    %v1242 = vsel %vm223, %v1239, 0
    %v1244 = vsel %vm223, %v1241, 0
    %1246 = vmatprep.subr.mxu0 0.0
    %1247 = vmatpush1.xpose.msra.mxu0 %v1244
    %1248 = vmatprep.subr.mxu0 0.0
    %1249 = vmatpush1.xpose.msra.mxu0 0.0
    %1250 = vmatprep.subr.mxu0 0.0
    %1251 = vmatpush1.xpose.msra.mxu0 0.0
    %1252 = vmatprep.subr.mxu0 0.0
    %1253 = vmatpush1.xpose.msra.mxu0 0.0
    %1254 = vmatprep.subr.mxu0 0.0
    %1255 = vmatpush1.xpose.msra.mxu0 0.0
    %1256 = vmatprep.subr.mxu0 0.0
    %1257 = vmatpush1.xpose.msra.mxu0 0.0
    %1258 = vmatprep.subr.mxu0 0.0
    %1259 = vmatpush1.xpose.msra.mxu0 0.0
    %1260 = vmatprep.subr.mxu0 0.0
    %1261 = vmatpush1.xpose.msra.mxu0 0.0
    %1262 = vmatprep.subr.mxu0 0.0
    %1263 = vmatpush1.xpose.msra.mxu0 0.0
    %1264 = vmatprep.subr.mxu0 0.0
    %1265 = vmatpush1.xpose.msra.mxu0 0.0
    %1266 = vmatprep.subr.mxu0 0.0
    %1267 = vmatpush1.xpose.msra.mxu0 0.0
    %1268 = vmatprep.subr.mxu0 0.0
    %1269 = vmatpush1.xpose.msra.mxu0 0.0
    %1270 = vmatprep.subr.mxu0 0.0
    %1271 = vmatpush1.xpose.msra.mxu0 0.0
    %1272 = vmatprep.subr.mxu0 0.0
    %1273 = vmatpush1.xpose.msra.mxu0 0.0
    %1274 = vmatprep.subr.mxu0 0.0
    %1275 = vmatpush1.xpose.msra.mxu0 0.0
    %1276 = vmatprep.subr.mxu0 0.0
    %1277 = vmatpush1.xpose.msra.mxu0 0.0
    %1278 = vmatprep.subr.mxu0 0.0
    %1279 = vmatpush1.xpose.msra.mxu0 0.0
    %1280 = vmatprep.subr.mxu0 0.0
    %1281 = vmatpush1.xpose.msra.mxu0 0.0
    %1282 = vmatprep.subr.mxu0 0.0
    %1283 = vmatpush1.xpose.msra.mxu0 0.0
    %1284 = vmatprep.subr.mxu0 0.0
    %1285 = vmatpush1.xpose.msra.mxu0 0.0
    %1286 = vmatprep.subr.mxu0 0.0
    %1287 = vmatpush1.xpose.msra.mxu0 0.0
    %1288 = vmatprep.subr.mxu0 0.0
    %1289 = vmatpush1.xpose.msra.mxu0 0.0
    %1290 = vmatprep.subr.mxu0 0.0
    %1291 = vmatpush1.xpose.msra.mxu0 0.0
    %1292 = vmatprep.subr.mxu0 0.0
    %1293 = vmatpush1.xpose.msra.mxu0 0.0
    %1294 = vmatprep.subr.mxu0 0.0
    %1295 = vmatpush1.xpose.msra.mxu0 0.0
    %1296 = vmatprep.subr.mxu0 0.0
    %1297 = vmatpush1.xpose.msra.mxu0 0.0
    %1298 = vmatprep.subr.mxu0 0.0
    %1299 = vmatpush1.xpose.msra.mxu0 0.0
    %1300 = vmatprep.subr.mxu0 0.0
    %1301 = vmatpush1.xpose.msra.mxu0 0.0
    %1302 = vmatprep.subr.mxu0 0.0
    %1303 = vmatpush1.xpose.msra.mxu0 0.0
    %1304 = vmatprep.subr.mxu0 0.0
    %1305 = vmatpush1.xpose.msra.mxu0 0.0
    %1306 = vmatprep.subr.mxu0 0.0
    %1307 = vmatpush1.xpose.msra.mxu0 0.0
    %1308 = vmatprep.subr.mxu0 0.0
    %1309 = vmatpush1.xpose.msra.mxu0 0.0
    %1310 = vmatprep.mubr.f32.mxu0 0.0
    %1311 = vmatmul.mubr.f32.gmra.mrb[0].mxu0 %v1242
    %v1312 = vpop.f32.mrb[0].mxu0
    %v1313 = vadd.f32 0.0, %v1312
    %v1314 = vpop.f32.mrb[0].mxu0
    %1315 = vdwg.mxu0
    %v1316 = vsel %vm982, %v1313, -1e+09
    %v1317 = vsel %vm223, %v1316, -inf
    %1318 = vmax.xlane.f32.xlu0 %v1317
    %v1319 = vpop.xlane.xlu0 %1318
    %v1320 = vsub.f32 %v1316, %v1319
    %v1321 = vmul.f32 %v1320, 1.442695
    %v1322 = vpow.pop %v1321
    %v1323 = vsel %vm223, %v1322, 0.0
    %1324 = vadd.xlane.f32.xlu0 %v1323
    %v1325 = vpop.xlane.xlu0 %1324
    %v1326 = vrcp.pop %v1325
    %v1327 = vmul.f32 %v1322, %v1326
    %1328 = vrot.lane.b32.xlu0 %v219, 48
    %v1329 = vpop.permute.xlu0 %1328
    %v1332 = vsel %vm223, %v1327, 0
    %1334 = vmatprep.subr.mxu0 0.0
    %1335 = vmatpush1.msra.mxu0 %v1329
    %1336 = vmatprep.subr.mxu0 0.0
    %1337 = vmatpush1.msra.mxu0 0.0
    %1338 = vmatprep.subr.mxu0 0.0
    %1339 = vmatpush1.msra.mxu0 0.0
    %1340 = vmatprep.subr.mxu0 0.0
    %1341 = vmatpush1.msra.mxu0 0.0
    %1342 = vmatprep.subr.mxu0 0.0
    %1343 = vmatpush1.msra.mxu0 0.0
    %1344 = vmatprep.subr.mxu0 0.0
    %1345 = vmatpush1.msra.mxu0 0.0
    %1346 = vmatprep.subr.mxu0 0.0
    %1347 = vmatpush1.msra.mxu0 0.0
    %1348 = vmatprep.subr.mxu0 0.0
    %1349 = vmatpush1.msra.mxu0 0.0
    %1350 = vmatprep.subr.mxu0 0.0
    %1351 = vmatpush1.msra.mxu0 0.0
    %1352 = vmatprep.subr.mxu0 0.0
    %1353 = vmatpush1.msra.mxu0 0.0
    %1354 = vmatprep.subr.mxu0 0.0
    %1355 = vmatpush1.msra.mxu0 0.0
    %1356 = vmatprep.subr.mxu0 0.0
    %1357 = vmatpush1.msra.mxu0 0.0
    %1358 = vmatprep.subr.mxu0 0.0
    %1359 = vmatpush1.msra.mxu0 0.0
    %1360 = vmatprep.subr.mxu0 0.0
    %1361 = vmatpush1.msra.mxu0 0.0
    %1362 = vmatprep.subr.mxu0 0.0
    %1363 = vmatpush1.msra.mxu0 0.0
    %1364 = vmatprep.subr.mxu0 0.0
    %1365 = vmatpush1.msra.mxu0 0.0
    %1366 = vmatprep.subr.mxu0 0.0
    %1367 = vmatpush1.msra.mxu0 0.0
    %1368 = vmatprep.subr.mxu0 0.0
    %1369 = vmatpush1.msra.mxu0 0.0
    %1370 = vmatprep.subr.mxu0 0.0
    %1371 = vmatpush1.msra.mxu0 0.0
    %1372 = vmatprep.subr.mxu0 0.0
    %1373 = vmatpush1.msra.mxu0 0.0
    %1374 = vmatprep.subr.mxu0 0.0
    %1375 = vmatpush1.msra.mxu0 0.0
    %1376 = vmatprep.subr.mxu0 0.0
    %1377 = vmatpush1.msra.mxu0 0.0
    %1378 = vmatprep.subr.mxu0 0.0
    %1379 = vmatpush1.msra.mxu0 0.0
    %1380 = vmatprep.subr.mxu0 0.0
    %1381 = vmatpush1.msra.mxu0 0.0
    %1382 = vmatprep.subr.mxu0 0.0
    %1383 = vmatpush1.msra.mxu0 0.0
    %1384 = vmatprep.subr.mxu0 0.0
    %1385 = vmatpush1.msra.mxu0 0.0
    %1386 = vmatprep.subr.mxu0 0.0
    %1387 = vmatpush1.msra.mxu0 0.0
    %1388 = vmatprep.subr.mxu0 0.0
    %1389 = vmatpush1.msra.mxu0 0.0
    %1390 = vmatprep.subr.mxu0 0.0
    %1391 = vmatpush1.msra.mxu0 0.0
    %1392 = vmatprep.subr.mxu0 0.0
    %1393 = vmatpush1.msra.mxu0 0.0
    %1394 = vmatprep.subr.mxu0 0.0
    %1395 = vmatpush1.msra.mxu0 0.0
    %1396 = vmatprep.subr.mxu0 0.0
    %1397 = vmatpush1.msra.mxu0 0.0
    %1398 = vmatprep.mubr.f32.mxu0 0.0
    %1399 = vmatmul.mubr.f32.gmra.mrb[0].mxu0 %v1332
    %v1400 = vpop.f32.mrb[0].mxu0
    %v1401 = vadd.f32 0.0, %v1400
    %v1402 = vpop.f32.mrb[0].mxu0
    %1403 = vdwg.mxu0
    %1404 = vrot.lane.b32.xlu0 %v199, 104
    %v1405 = vpop.permute.xlu0 %1404
    %1406 = vrot.lane.b32.xlu0 %v209, 72
    %v1407 = vpop.permute.xlu0 %1406
    %v1408 = vsel %vm223, %v1405, 0
    %v1410 = vsel %vm223, %v1407, 0
    %1412 = vmatprep.subr.mxu0 0.0
    %1413 = vmatpush1.xpose.msra.mxu0 %v1410
    %1414 = vmatprep.subr.mxu0 0.0
    %1415 = vmatpush1.xpose.msra.mxu0 0.0
    %1416 = vmatprep.subr.mxu0 0.0
    %1417 = vmatpush1.xpose.msra.mxu0 0.0
    %1418 = vmatprep.subr.mxu0 0.0
    %1419 = vmatpush1.xpose.msra.mxu0 0.0
    %1420 = vmatprep.subr.mxu0 0.0
    %1421 = vmatpush1.xpose.msra.mxu0 0.0
    %1422 = vmatprep.subr.mxu0 0.0
    %1423 = vmatpush1.xpose.msra.mxu0 0.0
    %1424 = vmatprep.subr.mxu0 0.0
    %1425 = vmatpush1.xpose.msra.mxu0 0.0
    %1426 = vmatprep.subr.mxu0 0.0
    %1427 = vmatpush1.xpose.msra.mxu0 0.0
    %1428 = vmatprep.subr.mxu0 0.0
    %1429 = vmatpush1.xpose.msra.mxu0 0.0
    %1430 = vmatprep.subr.mxu0 0.0
    %1431 = vmatpush1.xpose.msra.mxu0 0.0
    %1432 = vmatprep.subr.mxu0 0.0
    %1433 = vmatpush1.xpose.msra.mxu0 0.0
    %1434 = vmatprep.subr.mxu0 0.0
    %1435 = vmatpush1.xpose.msra.mxu0 0.0
    %1436 = vmatprep.subr.mxu0 0.0
    %1437 = vmatpush1.xpose.msra.mxu0 0.0
    %1438 = vmatprep.subr.mxu0 0.0
    %1439 = vmatpush1.xpose.msra.mxu0 0.0
    %1440 = vmatprep.subr.mxu0 0.0
    %1441 = vmatpush1.xpose.msra.mxu0 0.0
    %1442 = vmatprep.subr.mxu0 0.0
    %1443 = vmatpush1.xpose.msra.mxu0 0.0
    %1444 = vmatprep.subr.mxu0 0.0
    %1445 = vmatpush1.xpose.msra.mxu0 0.0
    %1446 = vmatprep.subr.mxu0 0.0
    %1447 = vmatpush1.xpose.msra.mxu0 0.0
    %1448 = vmatprep.subr.mxu0 0.0
    %1449 = vmatpush1.xpose.msra.mxu0 0.0
    %1450 = vmatprep.subr.mxu0 0.0
    %1451 = vmatpush1.xpose.msra.mxu0 0.0
    %1452 = vmatprep.subr.mxu0 0.0
    %1453 = vmatpush1.xpose.msra.mxu0 0.0
    %1454 = vmatprep.subr.mxu0 0.0
    %1455 = vmatpush1.xpose.msra.mxu0 0.0
    %1456 = vmatprep.subr.mxu0 0.0
    %1457 = vmatpush1.xpose.msra.mxu0 0.0
    %1458 = vmatprep.subr.mxu0 0.0
    %1459 = vmatpush1.xpose.msra.mxu0 0.0
    %1460 = vmatprep.subr.mxu0 0.0
    %1461 = vmatpush1.xpose.msra.mxu0 0.0
    %1462 = vmatprep.subr.mxu0 0.0
    %1463 = vmatpush1.xpose.msra.mxu0 0.0
    %1464 = vmatprep.subr.mxu0 0.0
    %1465 = vmatpush1.xpose.msra.mxu0 0.0
    %1466 = vmatprep.subr.mxu0 0.0
    %1467 = vmatpush1.xpose.msra.mxu0 0.0
    %1468 = vmatprep.subr.mxu0 0.0
    %1469 = vmatpush1.xpose.msra.mxu0 0.0
    %1470 = vmatprep.subr.mxu0 0.0
    %1471 = vmatpush1.xpose.msra.mxu0 0.0
    %1472 = vmatprep.subr.mxu0 0.0
    %1473 = vmatpush1.xpose.msra.mxu0 0.0
    %1474 = vmatprep.subr.mxu0 0.0
    %1475 = vmatpush1.xpose.msra.mxu0 0.0
    %1476 = vmatprep.mubr.f32.mxu0 0.0
    %1477 = vmatmul.mubr.f32.gmra.mrb[0].mxu0 %v1408
    %v1478 = vpop.f32.mrb[0].mxu0
    %v1479 = vadd.f32 0.0, %v1478
    %v1480 = vpop.f32.mrb[0].mxu0
    %1481 = vdwg.mxu0
    %v1482 = vsel %vm982, %v1479, -1e+09
    %v1483 = vsel %vm223, %v1482, -inf
    %1484 = vmax.xlane.f32.xlu0 %v1483
    %v1485 = vpop.xlane.xlu0 %1484
    %v1486 = vsub.f32 %v1482, %v1485
    %v1487 = vmul.f32 %v1486, 1.442695
    %v1488 = vpow.pop %v1487
    %v1489 = vsel %vm223, %v1488, 0.0
    %1490 = vadd.xlane.f32.xlu0 %v1489
    %v1491 = vpop.xlane.xlu0 %1490
    %v1492 = vrcp.pop %v1491
    %v1493 = vmul.f32 %v1488, %v1492
    %1494 = vrot.lane.b32.xlu0 %v219, 40
    %v1495 = vpop.permute.xlu0 %1494
    %v1498 = vsel %vm223, %v1493, 0
    %1500 = vmatprep.subr.mxu0 0.0
    %1501 = vmatpush1.msra.mxu0 %v1495
    %1502 = vmatprep.subr.mxu0 0.0
    %1503 = vmatpush1.msra.mxu0 0.0
    %1504 = vmatprep.subr.mxu0 0.0
    %1505 = vmatpush1.msra.mxu0 0.0
    %1506 = vmatprep.subr.mxu0 0.0
    %1507 = vmatpush1.msra.mxu0 0.0
    %1508 = vmatprep.subr.mxu0 0.0
    %1509 = vmatpush1.msra.mxu0 0.0
    %1510 = vmatprep.subr.mxu0 0.0
    %1511 = vmatpush1.msra.mxu0 0.0
    %1512 = vmatprep.subr.mxu0 0.0
    %1513 = vmatpush1.msra.mxu0 0.0
    %1514 = vmatprep.subr.mxu0 0.0
    %1515 = vmatpush1.msra.mxu0 0.0
    %1516 = vmatprep.subr.mxu0 0.0
    %1517 = vmatpush1.msra.mxu0 0.0
    %1518 = vmatprep.subr.mxu0 0.0
    %1519 = vmatpush1.msra.mxu0 0.0
    %1520 = vmatprep.subr.mxu0 0.0
    %1521 = vmatpush1.msra.mxu0 0.0
    %1522 = vmatprep.subr.mxu0 0.0
    %1523 = vmatpush1.msra.mxu0 0.0
    %1524 = vmatprep.subr.mxu0 0.0
    %1525 = vmatpush1.msra.mxu0 0.0
    %1526 = vmatprep.subr.mxu0 0.0
    %1527 = vmatpush1.msra.mxu0 0.0
    %1528 = vmatprep.subr.mxu0 0.0
    %1529 = vmatpush1.msra.mxu0 0.0
    %1530 = vmatprep.subr.mxu0 0.0
    %1531 = vmatpush1.msra.mxu0 0.0
    %1532 = vmatprep.subr.mxu0 0.0
    %1533 = vmatpush1.msra.mxu0 0.0
    %1534 = vmatprep.subr.mxu0 0.0
    %1535 = vmatpush1.msra.mxu0 0.0
    %1536 = vmatprep.subr.mxu0 0.0
    %1537 = vmatpush1.msra.mxu0 0.0
    %1538 = vmatprep.subr.mxu0 0.0
    %1539 = vmatpush1.msra.mxu0 0.0
    %1540 = vmatprep.subr.mxu0 0.0
    %1541 = vmatpush1.msra.mxu0 0.0
    %1542 = vmatprep.subr.mxu0 0.0
    %1543 = vmatpush1.msra.mxu0 0.0
    %1544 = vmatprep.subr.mxu0 0.0
    %1545 = vmatpush1.msra.mxu0 0.0
    %1546 = vmatprep.subr.mxu0 0.0
    %1547 = vmatpush1.msra.mxu0 0.0
    %1548 = vmatprep.subr.mxu0 0.0
    %1549 = vmatpush1.msra.mxu0 0.0
    %1550 = vmatprep.subr.mxu0 0.0
    %1551 = vmatpush1.msra.mxu0 0.0
    %1552 = vmatprep.subr.mxu0 0.0
    %1553 = vmatpush1.msra.mxu0 0.0
    %1554 = vmatprep.subr.mxu0 0.0
    %1555 = vmatpush1.msra.mxu0 0.0
    %1556 = vmatprep.subr.mxu0 0.0
    %1557 = vmatpush1.msra.mxu0 0.0
    %1558 = vmatprep.subr.mxu0 0.0
    %1559 = vmatpush1.msra.mxu0 0.0
    %1560 = vmatprep.subr.mxu0 0.0
    %1561 = vmatpush1.msra.mxu0 0.0
    %1562 = vmatprep.subr.mxu0 0.0
    %1563 = vmatpush1.msra.mxu0 0.0
    %1564 = vmatprep.mubr.f32.mxu0 0.0
    %1565 = vmatmul.mubr.f32.gmra.mrb[0].mxu0 %v1498
    %v1566 = vpop.f32.mrb[0].mxu0
    %v1567 = vadd.f32 0.0, %v1566
    %v1568 = vpop.f32.mrb[0].mxu0
    %1569 = vdwg.mxu0
    %1571 = vrot.lane.b32.xlu0 %v1235, 8
    %v1572 = vpop.permute.xlu0 %1571
    %1575 = vrot.lane.b32.xlu0 %v1401, 16
    %v1576 = vpop.permute.xlu0 %1575
    %1579 = vrot.lane.b32.xlu0 %v1567, 24
    %v1580 = vpop.permute.xlu0 %1579
    %v1582 = vsel %vm223, %v1069, %v1572
    %v1583 = vsel %vm900, %v1582, %v1576
    %v1584 = vsel %vm902, %v1583, %v1580
    %v1585 = vld [vmem:[%s6] sm:$0xff]
    %v1586 = vld [vmem:[%s6 + $0x8] sm:$0xff]
    %v1587 = vld [vmem:[%s6 + $0x10] sm:$0xff]
    %v1588 = vld [vmem:[%s6 + $0x18] sm:$0xff]
    %v1590 = vsel %vm52, %v903, 0
    %v1593 = vsel %vm52, %v1584, 0
    %1595 = vmatprep.subr.mxu0 0.0
    %1596 = vmatpush1.msra.mxu0 %v1585
    %1597 = vmatprep.subr.mxu0 0.0
    %1598 = vmatpush1.msra.mxu0 %v1586
    %1599 = vmatprep.subr.mxu0 0.0
    %1600 = vmatpush1.msra.mxu0 %v1587
    %1601 = vmatprep.subr.mxu0 0.0
    %1602 = vmatpush1.msra.mxu0 %v1588
    %1603 = vmatprep.subr.mxu0 0.0
    %1604 = vmatpush1.msra.mxu0 0.0
    %1605 = vmatprep.subr.mxu0 0.0
    %1606 = vmatpush1.msra.mxu0 0.0
    %1607 = vmatprep.subr.mxu0 0.0
    %1608 = vmatpush1.msra.mxu0 0.0
    %1609 = vmatprep.subr.mxu0 0.0
    %1610 = vmatpush1.msra.mxu0 0.0
    %1611 = vmatprep.subr.mxu0 0.0
    %1612 = vmatpush1.msra.mxu0 0.0
    %1613 = vmatprep.subr.mxu0 0.0
    %1614 = vmatpush1.msra.mxu0 0.0
    %1615 = vmatprep.subr.mxu0 0.0
    %1616 = vmatpush1.msra.mxu0 0.0
    %1617 = vmatprep.subr.mxu0 0.0
    %1618 = vmatpush1.msra.mxu0 0.0
    %1619 = vmatprep.subr.mxu0 0.0
    %1620 = vmatpush1.msra.mxu0 0.0
    %1621 = vmatprep.subr.mxu0 0.0
    %1622 = vmatpush1.msra.mxu0 0.0
    %1623 = vmatprep.subr.mxu0 0.0
    %1624 = vmatpush1.msra.mxu0 0.0
    %1625 = vmatprep.subr.mxu0 0.0
    %1626 = vmatpush1.msra.mxu0 0.0
    %1627 = vmatprep.subr.mxu0 0.0
    %1628 = vmatpush1.msra.mxu0 0.0
    %1629 = vmatprep.subr.mxu0 0.0
    %1630 = vmatpush1.msra.mxu0 0.0
    %1631 = vmatprep.subr.mxu0 0.0
    %1632 = vmatpush1.msra.mxu0 0.0
    %1633 = vmatprep.subr.mxu0 0.0
    %1634 = vmatpush1.msra.mxu0 0.0
    %1635 = vmatprep.subr.mxu0 0.0
    %1636 = vmatpush1.msra.mxu0 0.0
    %1637 = vmatprep.subr.mxu0 0.0
    %1638 = vmatpush1.msra.mxu0 0.0
    %1639 = vmatprep.subr.mxu0 0.0
    %1640 = vmatpush1.msra.mxu0 0.0
    %1641 = vmatprep.subr.mxu0 0.0
    %1642 = vmatpush1.msra.mxu0 0.0
    %1643 = vmatprep.subr.mxu0 0.0
    %1644 = vmatpush1.msra.mxu0 0.0
    %1645 = vmatprep.subr.mxu0 0.0
    %1646 = vmatpush1.msra.mxu0 0.0
    %1647 = vmatprep.subr.mxu0 0.0
    %1648 = vmatpush1.msra.mxu0 0.0
    %1649 = vmatprep.subr.mxu0 0.0
    %1650 = vmatpush1.msra.mxu0 0.0
    %1651 = vmatprep.subr.mxu0 0.0
    %1652 = vmatpush1.msra.mxu0 0.0
    %1653 = vmatprep.subr.mxu0 0.0
    %1654 = vmatpush1.msra.mxu0 0.0
    %1655 = vmatprep.subr.mxu0 0.0
    %1656 = vmatpush1.msra.mxu0 0.0
    %1657 = vmatprep.subr.mxu0 0.0
    %1658 = vmatpush1.msra.mxu0 0.0
    %1659 = vmatprep.mubr.f32.mxu0 0.0
    %1660 = vmatmul.mubr.f32.gmra.mrb[0].mxu0 %v1590
    %v1661 = vpop.f32.mrb[0].mxu0
    %v1662 = vadd.f32 0.0, %v1661
    %v1663 = vpop.f32.mrb[0].mxu0
    %1664 = vmatprep.mubr.f32.mxu0 0.0
    %1665 = vmatmul.mubr.f32.gmra.mrb[0].mxu0 %v1593
    %v1666 = vpop.f32.mrb[0].mxu0
    %v1667 = vadd.f32 0.0, %v1666
    %v1668 = vpop.f32.mrb[0].mxu0
    %1669 = vdwg.mxu0
    %v1670 = vadd.f32 %v42, %v1662
    %v1671 = vadd.f32 %v43, %v1667
    %v1672 = vlaneseq
    %v1673 = vshrl.u32 %v1672, 7
    %v1674 = vsub.s32 1, %v1673
    %v1675 = vrot.slane %v51, %v1674
    %v1676 = vadd.f32 %v1670, %v1675
    %v1677 = vadd.f32 %v1671, %v1675
    %v1678 = vsel %vm52, %v1676, 0.0
    %1679 = vadd.xlane.f32.xlu0 %v1678
    %v1680 = vpop.xlane.xlu0 %1679
    %v1681 = vsel %vm52, %v1677, 0.0
    %1682 = vadd.xlane.f32.xlu0 %v1681
    %v1683 = vpop.xlane.xlu0 %1682
    %v1684 = vmul.f32 %v1680, %v59
    %v1685 = vmul.f32 %v1683, %v59
    %v1686 = vsub.f32 %v1676, %v1684
    %v1687 = vsub.f32 %v1677, %v1685
    %v1688 = vmul.f32 %v1686, %v1686
    %v1689 = vmul.f32 %v1687, %v1687
    %v1690 = vsel %vm52, %v1688, 0.0
    %1691 = vadd.xlane.f32.xlu0 %v1690
    %v1692 = vpop.xlane.xlu0 %1691
    %v1693 = vsel %vm52, %v1689, 0.0
    %1694 = vadd.xlane.f32.xlu0 %v1693
    %v1695 = vpop.xlane.xlu0 %1694
    %v1696 = vmul.f32 %v1692, %v72
    %v1697 = vmul.f32 %v1695, %v72
    %v1698 = vrsqrt.pop %v1696
    %v1699 = vmul.f32 %v1696, %v1698
    %vm1700 = vcmp.eq.f32.partialorder %v1696, inf
    %v1701 = vsel %vm1700, %v1696, %v1699
    %vm1702 = vcmp.eq.f32.partialorder %v1696, 0.0
    %v1703 = vand.u32 %v1696, 2147483648
    %v1704 = vsel %vm1702, %v1703, %v1701
    %v1705 = vrsqrt.pop %v1697
    %v1706 = vmul.f32 %v1697, %v1705
    %vm1707 = vcmp.eq.f32.partialorder %v1697, inf
    %v1708 = vsel %vm1707, %v1697, %v1706
    %vm1709 = vcmp.eq.f32.partialorder %v1697, 0.0
    %v1710 = vand.u32 %v1697, 2147483648
    %v1711 = vsel %vm1709, %v1710, %v1708
    %v1712 = vlaneseq
    %v1713 = vshrl.u32 %v1712, 7
    %v1714 = vsub.s32 2, %v1713
    %v1715 = vrot.slane %v50, %v1714
    %v1716 = vmul.f32 %v1715, %v1686
    %v1717 = vmul.f32 %v1715, %v1687
    %v1718 = vadd.f32 %v1704, 1e-06
    %v1719 = vadd.f32 %v1711, 1e-06
    %v1720 = vrcp.pop %v1718
    %v1721 = vmul.f32 %v1716, %v1720
    %v1722 = vrcp.pop %v1719
    %v1723 = vmul.f32 %v1717, %v1722
    %v1724 = vlaneseq
    %v1725 = vshrl.u32 %v1724, 7
    %v1726 = vsub.s32 3, %v1725
    %v1727 = vrot.slane %v50, %v1726
    %v1728 = vadd.f32 %v1721, %v1727
    %v1729 = vadd.f32 %v1723, %v1727
    %v1730 = vld [vmem:[%s7] sm:$0xff]
    %v1731 = vld [vmem:[%s7 + $0x8] sm:$0xff]
    %v1732 = vld [vmem:[%s7 + $0x10] sm:$0xff]
    %v1733 = vld [vmem:[%s7 + $0x18] sm:$0xff]
    %v1734 = vlaneseq
    %v1735 = vshrl.u32 %v1734, 7
    %v1736 = vsub.s32 2, %v1735
    %v1737 = vrot.slane %v51, %v1736
    %v1739 = vsel %vm52, %v1728, 0
    %v1742 = vsel %vm52, %v1729, 0
    %1744 = vmatprep.subr.mxu0 0.0
    %1745 = vmatpush1.msra.mxu0 %v1730
    %1746 = vmatprep.subr.mxu0 0.0
    %1747 = vmatpush1.msra.mxu0 %v1731
    %1748 = vmatprep.subr.mxu0 0.0
    %1749 = vmatpush1.msra.mxu0 %v1732
    %1750 = vmatprep.subr.mxu0 0.0
    %1751 = vmatpush1.msra.mxu0 %v1733
    %1752 = vmatprep.subr.mxu0 0.0
    %1753 = vmatpush1.msra.mxu0 0.0
    %1754 = vmatprep.subr.mxu0 0.0
    %1755 = vmatpush1.msra.mxu0 0.0
    %1756 = vmatprep.subr.mxu0 0.0
    %1757 = vmatpush1.msra.mxu0 0.0
    %1758 = vmatprep.subr.mxu0 0.0
    %1759 = vmatpush1.msra.mxu0 0.0
    %1760 = vmatprep.subr.mxu0 0.0
    %1761 = vmatpush1.msra.mxu0 0.0
    %1762 = vmatprep.subr.mxu0 0.0
    %1763 = vmatpush1.msra.mxu0 0.0
    %1764 = vmatprep.subr.mxu0 0.0
    %1765 = vmatpush1.msra.mxu0 0.0
    %1766 = vmatprep.subr.mxu0 0.0
    %1767 = vmatpush1.msra.mxu0 0.0
    %1768 = vmatprep.subr.mxu0 0.0
    %1769 = vmatpush1.msra.mxu0 0.0
    %1770 = vmatprep.subr.mxu0 0.0
    %1771 = vmatpush1.msra.mxu0 0.0
    %1772 = vmatprep.subr.mxu0 0.0
    %1773 = vmatpush1.msra.mxu0 0.0
    %1774 = vmatprep.subr.mxu0 0.0
    %1775 = vmatpush1.msra.mxu0 0.0
    %1776 = vmatprep.subr.mxu0 0.0
    %1777 = vmatpush1.msra.mxu0 0.0
    %1778 = vmatprep.subr.mxu0 0.0
    %1779 = vmatpush1.msra.mxu0 0.0
    %1780 = vmatprep.subr.mxu0 0.0
    %1781 = vmatpush1.msra.mxu0 0.0
    %1782 = vmatprep.subr.mxu0 0.0
    %1783 = vmatpush1.msra.mxu0 0.0
    %1784 = vmatprep.subr.mxu0 0.0
    %1785 = vmatpush1.msra.mxu0 0.0
    %1786 = vmatprep.subr.mxu0 0.0
    %1787 = vmatpush1.msra.mxu0 0.0
    %1788 = vmatprep.subr.mxu0 0.0
    %1789 = vmatpush1.msra.mxu0 0.0
    %1790 = vmatprep.subr.mxu0 0.0
    %1791 = vmatpush1.msra.mxu0 0.0
    %1792 = vmatprep.subr.mxu0 0.0
    %1793 = vmatpush1.msra.mxu0 0.0
    %1794 = vmatprep.subr.mxu0 0.0
    %1795 = vmatpush1.msra.mxu0 0.0
    %1796 = vmatprep.subr.mxu0 0.0
    %1797 = vmatpush1.msra.mxu0 0.0
    %1798 = vmatprep.subr.mxu0 0.0
    %1799 = vmatpush1.msra.mxu0 0.0
    %1800 = vmatprep.subr.mxu0 0.0
    %1801 = vmatpush1.msra.mxu0 0.0
    %1802 = vmatprep.subr.mxu0 0.0
    %1803 = vmatpush1.msra.mxu0 0.0
    %1804 = vmatprep.subr.mxu0 0.0
    %1805 = vmatpush1.msra.mxu0 0.0
    %1806 = vmatprep.subr.mxu0 0.0
    %1807 = vmatpush1.msra.mxu0 0.0
    %1808 = vmatprep.mubr.f32.mxu0 0.0
    %1809 = vmatmul.mubr.f32.gmra.mrb[0].mxu0 %v1739
    %v1810 = vpop.f32.mrb[0].mxu0
    %v1811 = vadd.f32 %v1737, %v1810
    %v1812 = vpop.f32.mrb[0].mxu0
    %1813 = vmatprep.mubr.f32.mxu0 0.0
    %1814 = vmatmul.mubr.f32.gmra.mrb[0].mxu0 %v1742
    %v1815 = vpop.f32.mrb[0].mxu0
    %v1816 = vadd.f32 %v1737, %v1815
    %v1817 = vpop.f32.mrb[0].mxu0
    %1818 = vdwg.mxu0
    %v1819 = vmul.f32 %v1811, 0.35355338
    %v1820 = vmul.f32 %v1816, 0.35355338
    %v1821 = vld [vmem:[%s8] sm:$0xff]
    %v1822 = vld [vmem:[%s8 + $0x8] sm:$0xff]
    %v1823 = vld [vmem:[%s8 + $0x10] sm:$0xff]
    %v1824 = vld [vmem:[%s8 + $0x18] sm:$0xff]
    %v1826 = vsel %vm52, %v44, 0
    %v1829 = vsel %vm52, %v45, 0
    %1831 = vmatprep.subr.mxu0 0.0
    %1832 = vmatpush1.msra.mxu0 %v1821
    %1833 = vmatprep.subr.mxu0 0.0
    %1834 = vmatpush1.msra.mxu0 %v1822
    %1835 = vmatprep.subr.mxu0 0.0
    %1836 = vmatpush1.msra.mxu0 %v1823
    %1837 = vmatprep.subr.mxu0 0.0
    %1838 = vmatpush1.msra.mxu0 %v1824
    %1839 = vmatprep.subr.mxu0 0.0
    %1840 = vmatpush1.msra.mxu0 0.0
    %1841 = vmatprep.subr.mxu0 0.0
    %1842 = vmatpush1.msra.mxu0 0.0
    %1843 = vmatprep.subr.mxu0 0.0
    %1844 = vmatpush1.msra.mxu0 0.0
    %1845 = vmatprep.subr.mxu0 0.0
    %1846 = vmatpush1.msra.mxu0 0.0
    %1847 = vmatprep.subr.mxu0 0.0
    %1848 = vmatpush1.msra.mxu0 0.0
    %1849 = vmatprep.subr.mxu0 0.0
    %1850 = vmatpush1.msra.mxu0 0.0
    %1851 = vmatprep.subr.mxu0 0.0
    %1852 = vmatpush1.msra.mxu0 0.0
    %1853 = vmatprep.subr.mxu0 0.0
    %1854 = vmatpush1.msra.mxu0 0.0
    %1855 = vmatprep.subr.mxu0 0.0
    %1856 = vmatpush1.msra.mxu0 0.0
    %1857 = vmatprep.subr.mxu0 0.0
    %1858 = vmatpush1.msra.mxu0 0.0
    %1859 = vmatprep.subr.mxu0 0.0
    %1860 = vmatpush1.msra.mxu0 0.0
    %1861 = vmatprep.subr.mxu0 0.0
    %1862 = vmatpush1.msra.mxu0 0.0
    %1863 = vmatprep.subr.mxu0 0.0
    %1864 = vmatpush1.msra.mxu0 0.0
    %1865 = vmatprep.subr.mxu0 0.0
    %1866 = vmatpush1.msra.mxu0 0.0
    %1867 = vmatprep.subr.mxu0 0.0
    %1868 = vmatpush1.msra.mxu0 0.0
    %1869 = vmatprep.subr.mxu0 0.0
    %1870 = vmatpush1.msra.mxu0 0.0
    %1871 = vmatprep.subr.mxu0 0.0
    %1872 = vmatpush1.msra.mxu0 0.0
    %1873 = vmatprep.subr.mxu0 0.0
    %1874 = vmatpush1.msra.mxu0 0.0
    %1875 = vmatprep.subr.mxu0 0.0
    %1876 = vmatpush1.msra.mxu0 0.0
    %1877 = vmatprep.subr.mxu0 0.0
    %1878 = vmatpush1.msra.mxu0 0.0
    %1879 = vmatprep.subr.mxu0 0.0
    %1880 = vmatpush1.msra.mxu0 0.0
    %1881 = vmatprep.subr.mxu0 0.0
    %1882 = vmatpush1.msra.mxu0 0.0
    %1883 = vmatprep.subr.mxu0 0.0
    %1884 = vmatpush1.msra.mxu0 0.0
    %1885 = vmatprep.subr.mxu0 0.0
    %1886 = vmatpush1.msra.mxu0 0.0
    %1887 = vmatprep.subr.mxu0 0.0
    %1888 = vmatpush1.msra.mxu0 0.0
    %1889 = vmatprep.subr.mxu0 0.0
    %1890 = vmatpush1.msra.mxu0 0.0
    %1891 = vmatprep.subr.mxu0 0.0
    %1892 = vmatpush1.msra.mxu0 0.0
    %1893 = vmatprep.subr.mxu0 0.0
    %1894 = vmatpush1.msra.mxu0 0.0
    %1895 = vmatprep.mubr.f32.mxu0 0.0
    %1896 = vmatmul.mubr.f32.gmra.mrb[0].mxu0 %v1826
    %v1897 = vpop.f32.mrb[0].mxu0
    %v1898 = vadd.f32 0.0, %v1897
    %v1899 = vpop.f32.mrb[0].mxu0
    %1900 = vmatprep.mubr.f32.mxu0 0.0
    %1901 = vmatmul.mubr.f32.gmra.mrb[0].mxu0 %v1829
    %v1902 = vpop.f32.mrb[0].mxu0
    %v1903 = vadd.f32 0.0, %v1902
    %v1904 = vpop.f32.mrb[0].mxu0
    %1905 = vdwg.mxu0
    %v1906 = vlaneseq
    %v1907 = vshrl.u32 %v1906, 7
    %v1908 = vsub.s32 3, %v1907
    %v1909 = vrot.slane %v51, %v1908
    %v1910 = vadd.f32 %v1898, %v1909
    %v1911 = vadd.f32 %v1903, %v1909
    %v1912 = vlaneseq
    %v1913 = vshrl.u32 %v1912, 7
    %v1914 = vsub.s32 4, %v1913
    %v1915 = vrot.slane %v51, %v1914
    %1917 = vrot.lane.b32.xlu0 %v1915, 32
    %v1918 = vpop.permute.xlu0 %1917
    %v1920 = vadd.f32 %v1898, %v1918
    %v1921 = vadd.f32 %v1903, %v1918
    %v1923 = vsel %vm223, %v1819, 0
    %v1926 = vsel %vm223, %v1910, 0
    %1928 = vmatprep.subr.mxu0 0.0
    %1929 = vmatpush1.xpose.msra.mxu0 %v1926
    %1930 = vmatprep.subr.mxu0 0.0
    %1931 = vmatpush1.xpose.msra.mxu0 0.0
    %1932 = vmatprep.subr.mxu0 0.0
    %1933 = vmatpush1.xpose.msra.mxu0 0.0
    %1934 = vmatprep.subr.mxu0 0.0
    %1935 = vmatpush1.xpose.msra.mxu0 0.0
    %1936 = vmatprep.subr.mxu0 0.0
    %1937 = vmatpush1.xpose.msra.mxu0 0.0
    %1938 = vmatprep.subr.mxu0 0.0
    %1939 = vmatpush1.xpose.msra.mxu0 0.0
    %1940 = vmatprep.subr.mxu0 0.0
    %1941 = vmatpush1.xpose.msra.mxu0 0.0
    %1942 = vmatprep.subr.mxu0 0.0
    %1943 = vmatpush1.xpose.msra.mxu0 0.0
    %1944 = vmatprep.subr.mxu0 0.0
    %1945 = vmatpush1.xpose.msra.mxu0 0.0
    %1946 = vmatprep.subr.mxu0 0.0
    %1947 = vmatpush1.xpose.msra.mxu0 0.0
    %1948 = vmatprep.subr.mxu0 0.0
    %1949 = vmatpush1.xpose.msra.mxu0 0.0
    %1950 = vmatprep.subr.mxu0 0.0
    %1951 = vmatpush1.xpose.msra.mxu0 0.0
    %1952 = vmatprep.subr.mxu0 0.0
    %1953 = vmatpush1.xpose.msra.mxu0 0.0
    %1954 = vmatprep.subr.mxu0 0.0
    %1955 = vmatpush1.xpose.msra.mxu0 0.0
    %1956 = vmatprep.subr.mxu0 0.0
    %1957 = vmatpush1.xpose.msra.mxu0 0.0
    %1958 = vmatprep.subr.mxu0 0.0
    %1959 = vmatpush1.xpose.msra.mxu0 0.0
    %1960 = vmatprep.subr.mxu0 0.0
    %1961 = vmatpush1.xpose.msra.mxu0 0.0
    %1962 = vmatprep.subr.mxu0 0.0
    %1963 = vmatpush1.xpose.msra.mxu0 0.0
    %1964 = vmatprep.subr.mxu0 0.0
    %1965 = vmatpush1.xpose.msra.mxu0 0.0
    %1966 = vmatprep.subr.mxu0 0.0
    %1967 = vmatpush1.xpose.msra.mxu0 0.0
    %1968 = vmatprep.subr.mxu0 0.0
    %1969 = vmatpush1.xpose.msra.mxu0 0.0
    %1970 = vmatprep.subr.mxu0 0.0
    %1971 = vmatpush1.xpose.msra.mxu0 0.0
    %1972 = vmatprep.subr.mxu0 0.0
    %1973 = vmatpush1.xpose.msra.mxu0 0.0
    %1974 = vmatprep.subr.mxu0 0.0
    %1975 = vmatpush1.xpose.msra.mxu0 0.0
    %1976 = vmatprep.subr.mxu0 0.0
    %1977 = vmatpush1.xpose.msra.mxu0 0.0
    %1978 = vmatprep.subr.mxu0 0.0
    %1979 = vmatpush1.xpose.msra.mxu0 0.0
    %1980 = vmatprep.subr.mxu0 0.0
    %1981 = vmatpush1.xpose.msra.mxu0 0.0
    %1982 = vmatprep.subr.mxu0 0.0
    %1983 = vmatpush1.xpose.msra.mxu0 0.0
    %1984 = vmatprep.subr.mxu0 0.0
    %1985 = vmatpush1.xpose.msra.mxu0 0.0
    %1986 = vmatprep.subr.mxu0 0.0
    %1987 = vmatpush1.xpose.msra.mxu0 0.0
    %1988 = vmatprep.subr.mxu0 0.0
    %1989 = vmatpush1.xpose.msra.mxu0 0.0
    %1990 = vmatprep.subr.mxu0 0.0
    %1991 = vmatpush1.xpose.msra.mxu0 0.0
    %1992 = vmatprep.mubr.f32.mxu0 0.0
    %1993 = vmatmul.mubr.f32.gmra.mrb[0].mxu0 %v1923
    %v1994 = vpop.f32.mrb[0].mxu0
    %v1995 = vadd.f32 0.0, %v1994
    %v1996 = vpop.f32.mrb[0].mxu0
    %1997 = vdwg.mxu0
    %vm1998 = vcmp.gt.f32.partialorder %v48, 0.0
    %v1999 = vsel %vm1998, %v1995, -1e+09
    %v2000 = vsel %vm223, %v1999, -inf
    %2001 = vmax.xlane.f32.xlu0 %v2000
    %v2002 = vpop.xlane.xlu0 %2001
    %v2003 = vsub.f32 %v1999, %v2002
    %v2004 = vmul.f32 %v2003, 1.442695
    %v2005 = vpow.pop %v2004
    %v2006 = vsel %vm223, %v2005, 0.0
    %2007 = vadd.xlane.f32.xlu0 %v2006
    %v2008 = vpop.xlane.xlu0 %2007
    %v2009 = vrcp.pop %v2008
    %v2010 = vmul.f32 %v2005, %v2009
    %2012 = vrot.lane.b32.xlu0 %v1920, 96
    %v2013 = vpop.permute.xlu0 %2012
    %v2016 = vsel %vm223, %v2010, 0
    %2018 = vmatprep.subr.mxu0 0.0
    %2019 = vmatpush1.msra.mxu0 %v2013
    %2020 = vmatprep.subr.mxu0 0.0
    %2021 = vmatpush1.msra.mxu0 0.0
    %2022 = vmatprep.subr.mxu0 0.0
    %2023 = vmatpush1.msra.mxu0 0.0
    %2024 = vmatprep.subr.mxu0 0.0
    %2025 = vmatpush1.msra.mxu0 0.0
    %2026 = vmatprep.subr.mxu0 0.0
    %2027 = vmatpush1.msra.mxu0 0.0
    %2028 = vmatprep.subr.mxu0 0.0
    %2029 = vmatpush1.msra.mxu0 0.0
    %2030 = vmatprep.subr.mxu0 0.0
    %2031 = vmatpush1.msra.mxu0 0.0
    %2032 = vmatprep.subr.mxu0 0.0
    %2033 = vmatpush1.msra.mxu0 0.0
    %2034 = vmatprep.subr.mxu0 0.0
    %2035 = vmatpush1.msra.mxu0 0.0
    %2036 = vmatprep.subr.mxu0 0.0
    %2037 = vmatpush1.msra.mxu0 0.0
    %2038 = vmatprep.subr.mxu0 0.0
    %2039 = vmatpush1.msra.mxu0 0.0
    %2040 = vmatprep.subr.mxu0 0.0
    %2041 = vmatpush1.msra.mxu0 0.0
    %2042 = vmatprep.subr.mxu0 0.0
    %2043 = vmatpush1.msra.mxu0 0.0
    %2044 = vmatprep.subr.mxu0 0.0
    %2045 = vmatpush1.msra.mxu0 0.0
    %2046 = vmatprep.subr.mxu0 0.0
    %2047 = vmatpush1.msra.mxu0 0.0
    %2048 = vmatprep.subr.mxu0 0.0
    %2049 = vmatpush1.msra.mxu0 0.0
    %2050 = vmatprep.subr.mxu0 0.0
    %2051 = vmatpush1.msra.mxu0 0.0
    %2052 = vmatprep.subr.mxu0 0.0
    %2053 = vmatpush1.msra.mxu0 0.0
    %2054 = vmatprep.subr.mxu0 0.0
    %2055 = vmatpush1.msra.mxu0 0.0
    %2056 = vmatprep.subr.mxu0 0.0
    %2057 = vmatpush1.msra.mxu0 0.0
    %2058 = vmatprep.subr.mxu0 0.0
    %2059 = vmatpush1.msra.mxu0 0.0
    %2060 = vmatprep.subr.mxu0 0.0
    %2061 = vmatpush1.msra.mxu0 0.0
    %2062 = vmatprep.subr.mxu0 0.0
    %2063 = vmatpush1.msra.mxu0 0.0
    %2064 = vmatprep.subr.mxu0 0.0
    %2065 = vmatpush1.msra.mxu0 0.0
    %2066 = vmatprep.subr.mxu0 0.0
    %2067 = vmatpush1.msra.mxu0 0.0
    %2068 = vmatprep.subr.mxu0 0.0
    %2069 = vmatpush1.msra.mxu0 0.0
    %2070 = vmatprep.subr.mxu0 0.0
    %2071 = vmatpush1.msra.mxu0 0.0
    %2072 = vmatprep.subr.mxu0 0.0
    %2073 = vmatpush1.msra.mxu0 0.0
    %2074 = vmatprep.subr.mxu0 0.0
    %2075 = vmatpush1.msra.mxu0 0.0
    %2076 = vmatprep.subr.mxu0 0.0
    %2077 = vmatpush1.msra.mxu0 0.0
    %2078 = vmatprep.subr.mxu0 0.0
    %2079 = vmatpush1.msra.mxu0 0.0
    %2080 = vmatprep.subr.mxu0 0.0
    %2081 = vmatpush1.msra.mxu0 0.0
    %2082 = vmatprep.mubr.f32.mxu0 0.0
    %2083 = vmatmul.mubr.f32.gmra.mrb[0].mxu0 %v2016
    %v2084 = vpop.f32.mrb[0].mxu0
    %v2085 = vadd.f32 0.0, %v2084
    %v2086 = vpop.f32.mrb[0].mxu0
    %2087 = vdwg.mxu0
    %2088 = vrot.lane.b32.xlu0 %v1819, 120
    %v2089 = vpop.permute.xlu0 %2088
    %2090 = vrot.lane.b32.xlu0 %v1910, 120
    %v2091 = vpop.permute.xlu0 %2090
    %v2092 = vsel %vm223, %v2089, 0
    %v2094 = vsel %vm223, %v2091, 0
    %2096 = vmatprep.subr.mxu0 0.0
    %2097 = vmatpush1.xpose.msra.mxu0 %v2094
    %2098 = vmatprep.subr.mxu0 0.0
    %2099 = vmatpush1.xpose.msra.mxu0 0.0
    %2100 = vmatprep.subr.mxu0 0.0
    %2101 = vmatpush1.xpose.msra.mxu0 0.0
    %2102 = vmatprep.subr.mxu0 0.0
    %2103 = vmatpush1.xpose.msra.mxu0 0.0
    %2104 = vmatprep.subr.mxu0 0.0
    %2105 = vmatpush1.xpose.msra.mxu0 0.0
    %2106 = vmatprep.subr.mxu0 0.0
    %2107 = vmatpush1.xpose.msra.mxu0 0.0
    %2108 = vmatprep.subr.mxu0 0.0
    %2109 = vmatpush1.xpose.msra.mxu0 0.0
    %2110 = vmatprep.subr.mxu0 0.0
    %2111 = vmatpush1.xpose.msra.mxu0 0.0
    %2112 = vmatprep.subr.mxu0 0.0
    %2113 = vmatpush1.xpose.msra.mxu0 0.0
    %2114 = vmatprep.subr.mxu0 0.0
    %2115 = vmatpush1.xpose.msra.mxu0 0.0
    %2116 = vmatprep.subr.mxu0 0.0
    %2117 = vmatpush1.xpose.msra.mxu0 0.0
    %2118 = vmatprep.subr.mxu0 0.0
    %2119 = vmatpush1.xpose.msra.mxu0 0.0
    %2120 = vmatprep.subr.mxu0 0.0
    %2121 = vmatpush1.xpose.msra.mxu0 0.0
    %2122 = vmatprep.subr.mxu0 0.0
    %2123 = vmatpush1.xpose.msra.mxu0 0.0
    %2124 = vmatprep.subr.mxu0 0.0
    %2125 = vmatpush1.xpose.msra.mxu0 0.0
    %2126 = vmatprep.subr.mxu0 0.0
    %2127 = vmatpush1.xpose.msra.mxu0 0.0
    %2128 = vmatprep.subr.mxu0 0.0
    %2129 = vmatpush1.xpose.msra.mxu0 0.0
    %2130 = vmatprep.subr.mxu0 0.0
    %2131 = vmatpush1.xpose.msra.mxu0 0.0
    %2132 = vmatprep.subr.mxu0 0.0
    %2133 = vmatpush1.xpose.msra.mxu0 0.0
    %2134 = vmatprep.subr.mxu0 0.0
    %2135 = vmatpush1.xpose.msra.mxu0 0.0
    %2136 = vmatprep.subr.mxu0 0.0
    %2137 = vmatpush1.xpose.msra.mxu0 0.0
    %2138 = vmatprep.subr.mxu0 0.0
    %2139 = vmatpush1.xpose.msra.mxu0 0.0
    %2140 = vmatprep.subr.mxu0 0.0
    %2141 = vmatpush1.xpose.msra.mxu0 0.0
    %2142 = vmatprep.subr.mxu0 0.0
    %2143 = vmatpush1.xpose.msra.mxu0 0.0
    %2144 = vmatprep.subr.mxu0 0.0
    %2145 = vmatpush1.xpose.msra.mxu0 0.0
    %2146 = vmatprep.subr.mxu0 0.0
    %2147 = vmatpush1.xpose.msra.mxu0 0.0
    %2148 = vmatprep.subr.mxu0 0.0
    %2149 = vmatpush1.xpose.msra.mxu0 0.0
    %2150 = vmatprep.subr.mxu0 0.0
    %2151 = vmatpush1.xpose.msra.mxu0 0.0
    %2152 = vmatprep.subr.mxu0 0.0
    %2153 = vmatpush1.xpose.msra.mxu0 0.0
    %2154 = vmatprep.subr.mxu0 0.0
    %2155 = vmatpush1.xpose.msra.mxu0 0.0
    %2156 = vmatprep.subr.mxu0 0.0
    %2157 = vmatpush1.xpose.msra.mxu0 0.0
    %2158 = vmatprep.subr.mxu0 0.0
    %2159 = vmatpush1.xpose.msra.mxu0 0.0
    %2160 = vmatprep.mubr.f32.mxu0 0.0
    %2161 = vmatmul.mubr.f32.gmra.mrb[0].mxu0 %v2092
    %v2162 = vpop.f32.mrb[0].mxu0
    %v2163 = vadd.f32 0.0, %v2162
    %v2164 = vpop.f32.mrb[0].mxu0
    %2165 = vdwg.mxu0
    %v2166 = vsel %vm1998, %v2163, -1e+09
    %v2167 = vsel %vm223, %v2166, -inf
    %2168 = vmax.xlane.f32.xlu0 %v2167
    %v2169 = vpop.xlane.xlu0 %2168
    %v2170 = vsub.f32 %v2166, %v2169
    %v2171 = vmul.f32 %v2170, 1.442695
    %v2172 = vpow.pop %v2171
    %v2173 = vsel %vm223, %v2172, 0.0
    %2174 = vadd.xlane.f32.xlu0 %v2173
    %v2175 = vpop.xlane.xlu0 %2174
    %v2176 = vrcp.pop %v2175
    %v2177 = vmul.f32 %v2172, %v2176
    %2178 = vrot.lane.b32.xlu0 %v1920, 88
    %v2179 = vpop.permute.xlu0 %2178
    %v2182 = vsel %vm223, %v2177, 0
    %2184 = vmatprep.subr.mxu0 0.0
    %2185 = vmatpush1.msra.mxu0 %v2179
    %2186 = vmatprep.subr.mxu0 0.0
    %2187 = vmatpush1.msra.mxu0 0.0
    %2188 = vmatprep.subr.mxu0 0.0
    %2189 = vmatpush1.msra.mxu0 0.0
    %2190 = vmatprep.subr.mxu0 0.0
    %2191 = vmatpush1.msra.mxu0 0.0
    %2192 = vmatprep.subr.mxu0 0.0
    %2193 = vmatpush1.msra.mxu0 0.0
    %2194 = vmatprep.subr.mxu0 0.0
    %2195 = vmatpush1.msra.mxu0 0.0
    %2196 = vmatprep.subr.mxu0 0.0
    %2197 = vmatpush1.msra.mxu0 0.0
    %2198 = vmatprep.subr.mxu0 0.0
    %2199 = vmatpush1.msra.mxu0 0.0
    %2200 = vmatprep.subr.mxu0 0.0
    %2201 = vmatpush1.msra.mxu0 0.0
    %2202 = vmatprep.subr.mxu0 0.0
    %2203 = vmatpush1.msra.mxu0 0.0
    %2204 = vmatprep.subr.mxu0 0.0
    %2205 = vmatpush1.msra.mxu0 0.0
    %2206 = vmatprep.subr.mxu0 0.0
    %2207 = vmatpush1.msra.mxu0 0.0
    %2208 = vmatprep.subr.mxu0 0.0
    %2209 = vmatpush1.msra.mxu0 0.0
    %2210 = vmatprep.subr.mxu0 0.0
    %2211 = vmatpush1.msra.mxu0 0.0
    %2212 = vmatprep.subr.mxu0 0.0
    %2213 = vmatpush1.msra.mxu0 0.0
    %2214 = vmatprep.subr.mxu0 0.0
    %2215 = vmatpush1.msra.mxu0 0.0
    %2216 = vmatprep.subr.mxu0 0.0
    %2217 = vmatpush1.msra.mxu0 0.0
    %2218 = vmatprep.subr.mxu0 0.0
    %2219 = vmatpush1.msra.mxu0 0.0
    %2220 = vmatprep.subr.mxu0 0.0
    %2221 = vmatpush1.msra.mxu0 0.0
    %2222 = vmatprep.subr.mxu0 0.0
    %2223 = vmatpush1.msra.mxu0 0.0
    %2224 = vmatprep.subr.mxu0 0.0
    %2225 = vmatpush1.msra.mxu0 0.0
    %2226 = vmatprep.subr.mxu0 0.0
    %2227 = vmatpush1.msra.mxu0 0.0
    %2228 = vmatprep.subr.mxu0 0.0
    %2229 = vmatpush1.msra.mxu0 0.0
    %2230 = vmatprep.subr.mxu0 0.0
    %2231 = vmatpush1.msra.mxu0 0.0
    %2232 = vmatprep.subr.mxu0 0.0
    %2233 = vmatpush1.msra.mxu0 0.0
    %2234 = vmatprep.subr.mxu0 0.0
    %2235 = vmatpush1.msra.mxu0 0.0
    %2236 = vmatprep.subr.mxu0 0.0
    %2237 = vmatpush1.msra.mxu0 0.0
    %2238 = vmatprep.subr.mxu0 0.0
    %2239 = vmatpush1.msra.mxu0 0.0
    %2240 = vmatprep.subr.mxu0 0.0
    %2241 = vmatpush1.msra.mxu0 0.0
    %2242 = vmatprep.subr.mxu0 0.0
    %2243 = vmatpush1.msra.mxu0 0.0
    %2244 = vmatprep.subr.mxu0 0.0
    %2245 = vmatpush1.msra.mxu0 0.0
    %2246 = vmatprep.subr.mxu0 0.0
    %2247 = vmatpush1.msra.mxu0 0.0
    %2248 = vmatprep.mubr.f32.mxu0 0.0
    %2249 = vmatmul.mubr.f32.gmra.mrb[0].mxu0 %v2182
    %v2250 = vpop.f32.mrb[0].mxu0
    %v2251 = vadd.f32 0.0, %v2250
    %v2252 = vpop.f32.mrb[0].mxu0
    %2253 = vdwg.mxu0
    %2254 = vrot.lane.b32.xlu0 %v1819, 112
    %v2255 = vpop.permute.xlu0 %2254
    %2256 = vrot.lane.b32.xlu0 %v1910, 112
    %v2257 = vpop.permute.xlu0 %2256
    %v2258 = vsel %vm223, %v2255, 0
    %v2260 = vsel %vm223, %v2257, 0
    %2262 = vmatprep.subr.mxu0 0.0
    %2263 = vmatpush1.xpose.msra.mxu0 %v2260
    %2264 = vmatprep.subr.mxu0 0.0
    %2265 = vmatpush1.xpose.msra.mxu0 0.0
    %2266 = vmatprep.subr.mxu0 0.0
    %2267 = vmatpush1.xpose.msra.mxu0 0.0
    %2268 = vmatprep.subr.mxu0 0.0
    %2269 = vmatpush1.xpose.msra.mxu0 0.0
    %2270 = vmatprep.subr.mxu0 0.0
    %2271 = vmatpush1.xpose.msra.mxu0 0.0
    %2272 = vmatprep.subr.mxu0 0.0
    %2273 = vmatpush1.xpose.msra.mxu0 0.0
    %2274 = vmatprep.subr.mxu0 0.0
    %2275 = vmatpush1.xpose.msra.mxu0 0.0
    %2276 = vmatprep.subr.mxu0 0.0
    %2277 = vmatpush1.xpose.msra.mxu0 0.0
    %2278 = vmatprep.subr.mxu0 0.0
    %2279 = vmatpush1.xpose.msra.mxu0 0.0
    %2280 = vmatprep.subr.mxu0 0.0
    %2281 = vmatpush1.xpose.msra.mxu0 0.0
    %2282 = vmatprep.subr.mxu0 0.0
    %2283 = vmatpush1.xpose.msra.mxu0 0.0
    %2284 = vmatprep.subr.mxu0 0.0
    %2285 = vmatpush1.xpose.msra.mxu0 0.0
    %2286 = vmatprep.subr.mxu0 0.0
    %2287 = vmatpush1.xpose.msra.mxu0 0.0
    %2288 = vmatprep.subr.mxu0 0.0
    %2289 = vmatpush1.xpose.msra.mxu0 0.0
    %2290 = vmatprep.subr.mxu0 0.0
    %2291 = vmatpush1.xpose.msra.mxu0 0.0
    %2292 = vmatprep.subr.mxu0 0.0
    %2293 = vmatpush1.xpose.msra.mxu0 0.0
    %2294 = vmatprep.subr.mxu0 0.0
    %2295 = vmatpush1.xpose.msra.mxu0 0.0
    %2296 = vmatprep.subr.mxu0 0.0
    %2297 = vmatpush1.xpose.msra.mxu0 0.0
    %2298 = vmatprep.subr.mxu0 0.0
    %2299 = vmatpush1.xpose.msra.mxu0 0.0
    %2300 = vmatprep.subr.mxu0 0.0
    %2301 = vmatpush1.xpose.msra.mxu0 0.0
    %2302 = vmatprep.subr.mxu0 0.0
    %2303 = vmatpush1.xpose.msra.mxu0 0.0
    %2304 = vmatprep.subr.mxu0 0.0
    %2305 = vmatpush1.xpose.msra.mxu0 0.0
    %2306 = vmatprep.subr.mxu0 0.0
    %2307 = vmatpush1.xpose.msra.mxu0 0.0
    %2308 = vmatprep.subr.mxu0 0.0
    %2309 = vmatpush1.xpose.msra.mxu0 0.0
    %2310 = vmatprep.subr.mxu0 0.0
    %2311 = vmatpush1.xpose.msra.mxu0 0.0
    %2312 = vmatprep.subr.mxu0 0.0
    %2313 = vmatpush1.xpose.msra.mxu0 0.0
    %2314 = vmatprep.subr.mxu0 0.0
    %2315 = vmatpush1.xpose.msra.mxu0 0.0
    %2316 = vmatprep.subr.mxu0 0.0
    %2317 = vmatpush1.xpose.msra.mxu0 0.0
    %2318 = vmatprep.subr.mxu0 0.0
    %2319 = vmatpush1.xpose.msra.mxu0 0.0
    %2320 = vmatprep.subr.mxu0 0.0
    %2321 = vmatpush1.xpose.msra.mxu0 0.0
    %2322 = vmatprep.subr.mxu0 0.0
    %2323 = vmatpush1.xpose.msra.mxu0 0.0
    %2324 = vmatprep.subr.mxu0 0.0
    %2325 = vmatpush1.xpose.msra.mxu0 0.0
    %2326 = vmatprep.mubr.f32.mxu0 0.0
    %2327 = vmatmul.mubr.f32.gmra.mrb[0].mxu0 %v2258
    %v2328 = vpop.f32.mrb[0].mxu0
    %v2329 = vadd.f32 0.0, %v2328
    %v2330 = vpop.f32.mrb[0].mxu0
    %2331 = vdwg.mxu0
    %v2332 = vsel %vm1998, %v2329, -1e+09
    %v2333 = vsel %vm223, %v2332, -inf
    %2334 = vmax.xlane.f32.xlu0 %v2333
    %v2335 = vpop.xlane.xlu0 %2334
    %v2336 = vsub.f32 %v2332, %v2335
    %v2337 = vmul.f32 %v2336, 1.442695
    %v2338 = vpow.pop %v2337
    %v2339 = vsel %vm223, %v2338, 0.0
    %2340 = vadd.xlane.f32.xlu0 %v2339
    %v2341 = vpop.xlane.xlu0 %2340
    %v2342 = vrcp.pop %v2341
    %v2343 = vmul.f32 %v2338, %v2342
    %2344 = vrot.lane.b32.xlu0 %v1920, 80
    %v2345 = vpop.permute.xlu0 %2344
    %v2348 = vsel %vm223, %v2343, 0
    %2350 = vmatprep.subr.mxu0 0.0
    %2351 = vmatpush1.msra.mxu0 %v2345
    %2352 = vmatprep.subr.mxu0 0.0
    %2353 = vmatpush1.msra.mxu0 0.0
    %2354 = vmatprep.subr.mxu0 0.0
    %2355 = vmatpush1.msra.mxu0 0.0
    %2356 = vmatprep.subr.mxu0 0.0
    %2357 = vmatpush1.msra.mxu0 0.0
    %2358 = vmatprep.subr.mxu0 0.0
    %2359 = vmatpush1.msra.mxu0 0.0
    %2360 = vmatprep.subr.mxu0 0.0
    %2361 = vmatpush1.msra.mxu0 0.0
    %2362 = vmatprep.subr.mxu0 0.0
    %2363 = vmatpush1.msra.mxu0 0.0
    %2364 = vmatprep.subr.mxu0 0.0
    %2365 = vmatpush1.msra.mxu0 0.0
    %2366 = vmatprep.subr.mxu0 0.0
    %2367 = vmatpush1.msra.mxu0 0.0
    %2368 = vmatprep.subr.mxu0 0.0
    %2369 = vmatpush1.msra.mxu0 0.0
    %2370 = vmatprep.subr.mxu0 0.0
    %2371 = vmatpush1.msra.mxu0 0.0
    %2372 = vmatprep.subr.mxu0 0.0
    %2373 = vmatpush1.msra.mxu0 0.0
    %2374 = vmatprep.subr.mxu0 0.0
    %2375 = vmatpush1.msra.mxu0 0.0
    %2376 = vmatprep.subr.mxu0 0.0
    %2377 = vmatpush1.msra.mxu0 0.0
    %2378 = vmatprep.subr.mxu0 0.0
    %2379 = vmatpush1.msra.mxu0 0.0
    %2380 = vmatprep.subr.mxu0 0.0
    %2381 = vmatpush1.msra.mxu0 0.0
    %2382 = vmatprep.subr.mxu0 0.0
    %2383 = vmatpush1.msra.mxu0 0.0
    %2384 = vmatprep.subr.mxu0 0.0
    %2385 = vmatpush1.msra.mxu0 0.0
    %2386 = vmatprep.subr.mxu0 0.0
    %2387 = vmatpush1.msra.mxu0 0.0
    %2388 = vmatprep.subr.mxu0 0.0
    %2389 = vmatpush1.msra.mxu0 0.0
    %2390 = vmatprep.subr.mxu0 0.0
    %2391 = vmatpush1.msra.mxu0 0.0
    %2392 = vmatprep.subr.mxu0 0.0
    %2393 = vmatpush1.msra.mxu0 0.0
    %2394 = vmatprep.subr.mxu0 0.0
    %2395 = vmatpush1.msra.mxu0 0.0
    %2396 = vmatprep.subr.mxu0 0.0
    %2397 = vmatpush1.msra.mxu0 0.0
    %2398 = vmatprep.subr.mxu0 0.0
    %2399 = vmatpush1.msra.mxu0 0.0
    %2400 = vmatprep.subr.mxu0 0.0
    %2401 = vmatpush1.msra.mxu0 0.0
    %2402 = vmatprep.subr.mxu0 0.0
    %2403 = vmatpush1.msra.mxu0 0.0
    %2404 = vmatprep.subr.mxu0 0.0
    %2405 = vmatpush1.msra.mxu0 0.0
    %2406 = vmatprep.subr.mxu0 0.0
    %2407 = vmatpush1.msra.mxu0 0.0
    %2408 = vmatprep.subr.mxu0 0.0
    %2409 = vmatpush1.msra.mxu0 0.0
    %2410 = vmatprep.subr.mxu0 0.0
    %2411 = vmatpush1.msra.mxu0 0.0
    %2412 = vmatprep.subr.mxu0 0.0
    %2413 = vmatpush1.msra.mxu0 0.0
    %2414 = vmatprep.mubr.f32.mxu0 0.0
    %2415 = vmatmul.mubr.f32.gmra.mrb[0].mxu0 %v2348
    %v2416 = vpop.f32.mrb[0].mxu0
    %v2417 = vadd.f32 0.0, %v2416
    %v2418 = vpop.f32.mrb[0].mxu0
    %2419 = vdwg.mxu0
    %2420 = vrot.lane.b32.xlu0 %v1819, 104
    %v2421 = vpop.permute.xlu0 %2420
    %2422 = vrot.lane.b32.xlu0 %v1910, 104
    %v2423 = vpop.permute.xlu0 %2422
    %v2424 = vsel %vm223, %v2421, 0
    %v2426 = vsel %vm223, %v2423, 0
    %2428 = vmatprep.subr.mxu0 0.0
    %2429 = vmatpush1.xpose.msra.mxu0 %v2426
    %2430 = vmatprep.subr.mxu0 0.0
    %2431 = vmatpush1.xpose.msra.mxu0 0.0
    %2432 = vmatprep.subr.mxu0 0.0
    %2433 = vmatpush1.xpose.msra.mxu0 0.0
    %2434 = vmatprep.subr.mxu0 0.0
    %2435 = vmatpush1.xpose.msra.mxu0 0.0
    %2436 = vmatprep.subr.mxu0 0.0
    %2437 = vmatpush1.xpose.msra.mxu0 0.0
    %2438 = vmatprep.subr.mxu0 0.0
    %2439 = vmatpush1.xpose.msra.mxu0 0.0
    %2440 = vmatprep.subr.mxu0 0.0
    %2441 = vmatpush1.xpose.msra.mxu0 0.0
    %2442 = vmatprep.subr.mxu0 0.0
    %2443 = vmatpush1.xpose.msra.mxu0 0.0
    %2444 = vmatprep.subr.mxu0 0.0
    %2445 = vmatpush1.xpose.msra.mxu0 0.0
    %2446 = vmatprep.subr.mxu0 0.0
    %2447 = vmatpush1.xpose.msra.mxu0 0.0
    %2448 = vmatprep.subr.mxu0 0.0
    %2449 = vmatpush1.xpose.msra.mxu0 0.0
    %2450 = vmatprep.subr.mxu0 0.0
    %2451 = vmatpush1.xpose.msra.mxu0 0.0
    %2452 = vmatprep.subr.mxu0 0.0
    %2453 = vmatpush1.xpose.msra.mxu0 0.0
    %2454 = vmatprep.subr.mxu0 0.0
    %2455 = vmatpush1.xpose.msra.mxu0 0.0
    %2456 = vmatprep.subr.mxu0 0.0
    %2457 = vmatpush1.xpose.msra.mxu0 0.0
    %2458 = vmatprep.subr.mxu0 0.0
    %2459 = vmatpush1.xpose.msra.mxu0 0.0
    %2460 = vmatprep.subr.mxu0 0.0
    %2461 = vmatpush1.xpose.msra.mxu0 0.0
    %2462 = vmatprep.subr.mxu0 0.0
    %2463 = vmatpush1.xpose.msra.mxu0 0.0
    %2464 = vmatprep.subr.mxu0 0.0
    %2465 = vmatpush1.xpose.msra.mxu0 0.0
    %2466 = vmatprep.subr.mxu0 0.0
    %2467 = vmatpush1.xpose.msra.mxu0 0.0
    %2468 = vmatprep.subr.mxu0 0.0
    %2469 = vmatpush1.xpose.msra.mxu0 0.0
    %2470 = vmatprep.subr.mxu0 0.0
    %2471 = vmatpush1.xpose.msra.mxu0 0.0
    %2472 = vmatprep.subr.mxu0 0.0
    %2473 = vmatpush1.xpose.msra.mxu0 0.0
    %2474 = vmatprep.subr.mxu0 0.0
    %2475 = vmatpush1.xpose.msra.mxu0 0.0
    %2476 = vmatprep.subr.mxu0 0.0
    %2477 = vmatpush1.xpose.msra.mxu0 0.0
    %2478 = vmatprep.subr.mxu0 0.0
    %2479 = vmatpush1.xpose.msra.mxu0 0.0
    %2480 = vmatprep.subr.mxu0 0.0
    %2481 = vmatpush1.xpose.msra.mxu0 0.0
    %2482 = vmatprep.subr.mxu0 0.0
    %2483 = vmatpush1.xpose.msra.mxu0 0.0
    %2484 = vmatprep.subr.mxu0 0.0
    %2485 = vmatpush1.xpose.msra.mxu0 0.0
    %2486 = vmatprep.subr.mxu0 0.0
    %2487 = vmatpush1.xpose.msra.mxu0 0.0
    %2488 = vmatprep.subr.mxu0 0.0
    %2489 = vmatpush1.xpose.msra.mxu0 0.0
    %2490 = vmatprep.subr.mxu0 0.0
    %2491 = vmatpush1.xpose.msra.mxu0 0.0
    %2492 = vmatprep.mubr.f32.mxu0 0.0
    %2493 = vmatmul.mubr.f32.gmra.mrb[0].mxu0 %v2424
    %v2494 = vpop.f32.mrb[0].mxu0
    %v2495 = vadd.f32 0.0, %v2494
    %v2496 = vpop.f32.mrb[0].mxu0
    %2497 = vdwg.mxu0
    %v2498 = vsel %vm1998, %v2495, -1e+09
    %v2499 = vsel %vm223, %v2498, -inf
    %2500 = vmax.xlane.f32.xlu0 %v2499
    %v2501 = vpop.xlane.xlu0 %2500
    %v2502 = vsub.f32 %v2498, %v2501
    %v2503 = vmul.f32 %v2502, 1.442695
    %v2504 = vpow.pop %v2503
    %v2505 = vsel %vm223, %v2504, 0.0
    %2506 = vadd.xlane.f32.xlu0 %v2505
    %v2507 = vpop.xlane.xlu0 %2506
    %v2508 = vrcp.pop %v2507
    %v2509 = vmul.f32 %v2504, %v2508
    %2510 = vrot.lane.b32.xlu0 %v1920, 72
    %v2511 = vpop.permute.xlu0 %2510
    %v2514 = vsel %vm223, %v2509, 0
    %2516 = vmatprep.subr.mxu0 0.0
    %2517 = vmatpush1.msra.mxu0 %v2511
    %2518 = vmatprep.subr.mxu0 0.0
    %2519 = vmatpush1.msra.mxu0 0.0
    %2520 = vmatprep.subr.mxu0 0.0
    %2521 = vmatpush1.msra.mxu0 0.0
    %2522 = vmatprep.subr.mxu0 0.0
    %2523 = vmatpush1.msra.mxu0 0.0
    %2524 = vmatprep.subr.mxu0 0.0
    %2525 = vmatpush1.msra.mxu0 0.0
    %2526 = vmatprep.subr.mxu0 0.0
    %2527 = vmatpush1.msra.mxu0 0.0
    %2528 = vmatprep.subr.mxu0 0.0
    %2529 = vmatpush1.msra.mxu0 0.0
    %2530 = vmatprep.subr.mxu0 0.0
    %2531 = vmatpush1.msra.mxu0 0.0
    %2532 = vmatprep.subr.mxu0 0.0
    %2533 = vmatpush1.msra.mxu0 0.0
    %2534 = vmatprep.subr.mxu0 0.0
    %2535 = vmatpush1.msra.mxu0 0.0
    %2536 = vmatprep.subr.mxu0 0.0
    %2537 = vmatpush1.msra.mxu0 0.0
    %2538 = vmatprep.subr.mxu0 0.0
    %2539 = vmatpush1.msra.mxu0 0.0
    %2540 = vmatprep.subr.mxu0 0.0
    %2541 = vmatpush1.msra.mxu0 0.0
    %2542 = vmatprep.subr.mxu0 0.0
    %2543 = vmatpush1.msra.mxu0 0.0
    %2544 = vmatprep.subr.mxu0 0.0
    %2545 = vmatpush1.msra.mxu0 0.0
    %2546 = vmatprep.subr.mxu0 0.0
    %2547 = vmatpush1.msra.mxu0 0.0
    %2548 = vmatprep.subr.mxu0 0.0
    %2549 = vmatpush1.msra.mxu0 0.0
    %2550 = vmatprep.subr.mxu0 0.0
    %2551 = vmatpush1.msra.mxu0 0.0
    %2552 = vmatprep.subr.mxu0 0.0
    %2553 = vmatpush1.msra.mxu0 0.0
    %2554 = vmatprep.subr.mxu0 0.0
    %2555 = vmatpush1.msra.mxu0 0.0
    %2556 = vmatprep.subr.mxu0 0.0
    %2557 = vmatpush1.msra.mxu0 0.0
    %2558 = vmatprep.subr.mxu0 0.0
    %2559 = vmatpush1.msra.mxu0 0.0
    %2560 = vmatprep.subr.mxu0 0.0
    %2561 = vmatpush1.msra.mxu0 0.0
    %2562 = vmatprep.subr.mxu0 0.0
    %2563 = vmatpush1.msra.mxu0 0.0
    %2564 = vmatprep.subr.mxu0 0.0
    %2565 = vmatpush1.msra.mxu0 0.0
    %2566 = vmatprep.subr.mxu0 0.0
    %2567 = vmatpush1.msra.mxu0 0.0
    %2568 = vmatprep.subr.mxu0 0.0
    %2569 = vmatpush1.msra.mxu0 0.0
    %2570 = vmatprep.subr.mxu0 0.0
    %2571 = vmatpush1.msra.mxu0 0.0
    %2572 = vmatprep.subr.mxu0 0.0
    %2573 = vmatpush1.msra.mxu0 0.0
    %2574 = vmatprep.subr.mxu0 0.0
    %2575 = vmatpush1.msra.mxu0 0.0
    %2576 = vmatprep.subr.mxu0 0.0
    %2577 = vmatpush1.msra.mxu0 0.0
    %2578 = vmatprep.subr.mxu0 0.0
    %2579 = vmatpush1.msra.mxu0 0.0
    %2580 = vmatprep.mubr.f32.mxu0 0.0
    %2581 = vmatmul.mubr.f32.gmra.mrb[0].mxu0 %v2514
    %v2582 = vpop.f32.mrb[0].mxu0
    %v2583 = vadd.f32 0.0, %v2582
    %v2584 = vpop.f32.mrb[0].mxu0
    %2585 = vdwg.mxu0
    %2587 = vrot.lane.b32.xlu0 %v2251, 8
    %v2588 = vpop.permute.xlu0 %2587
    %2591 = vrot.lane.b32.xlu0 %v2417, 16
    %v2592 = vpop.permute.xlu0 %2591
    %2595 = vrot.lane.b32.xlu0 %v2583, 24
    %v2596 = vpop.permute.xlu0 %2595
    %v2598 = vsel %vm223, %v2085, %v2588
    %v2599 = vsel %vm900, %v2598, %v2592
    %v2600 = vsel %vm902, %v2599, %v2596
    %v2602 = vsel %vm223, %v1820, 0
    %v2605 = vsel %vm223, %v1911, 0
    %2607 = vmatprep.subr.mxu0 0.0
    %2608 = vmatpush1.xpose.msra.mxu0 %v2605
    %2609 = vmatprep.subr.mxu0 0.0
    %2610 = vmatpush1.xpose.msra.mxu0 0.0
    %2611 = vmatprep.subr.mxu0 0.0
    %2612 = vmatpush1.xpose.msra.mxu0 0.0
    %2613 = vmatprep.subr.mxu0 0.0
    %2614 = vmatpush1.xpose.msra.mxu0 0.0
    %2615 = vmatprep.subr.mxu0 0.0
    %2616 = vmatpush1.xpose.msra.mxu0 0.0
    %2617 = vmatprep.subr.mxu0 0.0
    %2618 = vmatpush1.xpose.msra.mxu0 0.0
    %2619 = vmatprep.subr.mxu0 0.0
    %2620 = vmatpush1.xpose.msra.mxu0 0.0
    %2621 = vmatprep.subr.mxu0 0.0
    %2622 = vmatpush1.xpose.msra.mxu0 0.0
    %2623 = vmatprep.subr.mxu0 0.0
    %2624 = vmatpush1.xpose.msra.mxu0 0.0
    %2625 = vmatprep.subr.mxu0 0.0
    %2626 = vmatpush1.xpose.msra.mxu0 0.0
    %2627 = vmatprep.subr.mxu0 0.0
    %2628 = vmatpush1.xpose.msra.mxu0 0.0
    %2629 = vmatprep.subr.mxu0 0.0
    %2630 = vmatpush1.xpose.msra.mxu0 0.0
    %2631 = vmatprep.subr.mxu0 0.0
    %2632 = vmatpush1.xpose.msra.mxu0 0.0
    %2633 = vmatprep.subr.mxu0 0.0
    %2634 = vmatpush1.xpose.msra.mxu0 0.0
    %2635 = vmatprep.subr.mxu0 0.0
    %2636 = vmatpush1.xpose.msra.mxu0 0.0
    %2637 = vmatprep.subr.mxu0 0.0
    %2638 = vmatpush1.xpose.msra.mxu0 0.0
    %2639 = vmatprep.subr.mxu0 0.0
    %2640 = vmatpush1.xpose.msra.mxu0 0.0
    %2641 = vmatprep.subr.mxu0 0.0
    %2642 = vmatpush1.xpose.msra.mxu0 0.0
    %2643 = vmatprep.subr.mxu0 0.0
    %2644 = vmatpush1.xpose.msra.mxu0 0.0
    %2645 = vmatprep.subr.mxu0 0.0
    %2646 = vmatpush1.xpose.msra.mxu0 0.0
    %2647 = vmatprep.subr.mxu0 0.0
    %2648 = vmatpush1.xpose.msra.mxu0 0.0
    %2649 = vmatprep.subr.mxu0 0.0
    %2650 = vmatpush1.xpose.msra.mxu0 0.0
    %2651 = vmatprep.subr.mxu0 0.0
    %2652 = vmatpush1.xpose.msra.mxu0 0.0
    %2653 = vmatprep.subr.mxu0 0.0
    %2654 = vmatpush1.xpose.msra.mxu0 0.0
    %2655 = vmatprep.subr.mxu0 0.0
    %2656 = vmatpush1.xpose.msra.mxu0 0.0
    %2657 = vmatprep.subr.mxu0 0.0
    %2658 = vmatpush1.xpose.msra.mxu0 0.0
    %2659 = vmatprep.subr.mxu0 0.0
    %2660 = vmatpush1.xpose.msra.mxu0 0.0
    %2661 = vmatprep.subr.mxu0 0.0
    %2662 = vmatpush1.xpose.msra.mxu0 0.0
    %2663 = vmatprep.subr.mxu0 0.0
    %2664 = vmatpush1.xpose.msra.mxu0 0.0
    %2665 = vmatprep.subr.mxu0 0.0
    %2666 = vmatpush1.xpose.msra.mxu0 0.0
    %2667 = vmatprep.subr.mxu0 0.0
    %2668 = vmatpush1.xpose.msra.mxu0 0.0
    %2669 = vmatprep.subr.mxu0 0.0
    %2670 = vmatpush1.xpose.msra.mxu0 0.0
    %2671 = vmatprep.mubr.f32.mxu0 0.0
    %2672 = vmatmul.mubr.f32.gmra.mrb[0].mxu0 %v2602
    %v2673 = vpop.f32.mrb[0].mxu0
    %v2674 = vadd.f32 0.0, %v2673
    %v2675 = vpop.f32.mrb[0].mxu0
    %2676 = vdwg.mxu0
    %vm2677 = vcmp.gt.f32.partialorder %v49, 0.0
    %v2678 = vsel %vm2677, %v2674, -1e+09
    %v2679 = vsel %vm223, %v2678, -inf
    %2680 = vmax.xlane.f32.xlu0 %v2679
    %v2681 = vpop.xlane.xlu0 %2680
    %v2682 = vsub.f32 %v2678, %v2681
    %v2683 = vmul.f32 %v2682, 1.442695
    %v2684 = vpow.pop %v2683
    %v2685 = vsel %vm223, %v2684, 0.0
    %2686 = vadd.xlane.f32.xlu0 %v2685
    %v2687 = vpop.xlane.xlu0 %2686
    %v2688 = vrcp.pop %v2687
    %v2689 = vmul.f32 %v2684, %v2688
    %2691 = vrot.lane.b32.xlu0 %v1921, 96
    %v2692 = vpop.permute.xlu0 %2691
    %v2695 = vsel %vm223, %v2689, 0
    %2697 = vmatprep.subr.mxu0 0.0
    %2698 = vmatpush1.msra.mxu0 %v2692
    %2699 = vmatprep.subr.mxu0 0.0
    %2700 = vmatpush1.msra.mxu0 0.0
    %2701 = vmatprep.subr.mxu0 0.0
    %2702 = vmatpush1.msra.mxu0 0.0
    %2703 = vmatprep.subr.mxu0 0.0
    %2704 = vmatpush1.msra.mxu0 0.0
    %2705 = vmatprep.subr.mxu0 0.0
    %2706 = vmatpush1.msra.mxu0 0.0
    %2707 = vmatprep.subr.mxu0 0.0
    %2708 = vmatpush1.msra.mxu0 0.0
    %2709 = vmatprep.subr.mxu0 0.0
    %2710 = vmatpush1.msra.mxu0 0.0
    %2711 = vmatprep.subr.mxu0 0.0
    %2712 = vmatpush1.msra.mxu0 0.0
    %2713 = vmatprep.subr.mxu0 0.0
    %2714 = vmatpush1.msra.mxu0 0.0
    %2715 = vmatprep.subr.mxu0 0.0
    %2716 = vmatpush1.msra.mxu0 0.0
    %2717 = vmatprep.subr.mxu0 0.0
    %2718 = vmatpush1.msra.mxu0 0.0
    %2719 = vmatprep.subr.mxu0 0.0
    %2720 = vmatpush1.msra.mxu0 0.0
    %2721 = vmatprep.subr.mxu0 0.0
    %2722 = vmatpush1.msra.mxu0 0.0
    %2723 = vmatprep.subr.mxu0 0.0
    %2724 = vmatpush1.msra.mxu0 0.0
    %2725 = vmatprep.subr.mxu0 0.0
    %2726 = vmatpush1.msra.mxu0 0.0
    %2727 = vmatprep.subr.mxu0 0.0
    %2728 = vmatpush1.msra.mxu0 0.0
    %2729 = vmatprep.subr.mxu0 0.0
    %2730 = vmatpush1.msra.mxu0 0.0
    %2731 = vmatprep.subr.mxu0 0.0
    %2732 = vmatpush1.msra.mxu0 0.0
    %2733 = vmatprep.subr.mxu0 0.0
    %2734 = vmatpush1.msra.mxu0 0.0
    %2735 = vmatprep.subr.mxu0 0.0
    %2736 = vmatpush1.msra.mxu0 0.0
    %2737 = vmatprep.subr.mxu0 0.0
    %2738 = vmatpush1.msra.mxu0 0.0
    %2739 = vmatprep.subr.mxu0 0.0
    %2740 = vmatpush1.msra.mxu0 0.0
    %2741 = vmatprep.subr.mxu0 0.0
    %2742 = vmatpush1.msra.mxu0 0.0
    %2743 = vmatprep.subr.mxu0 0.0
    %2744 = vmatpush1.msra.mxu0 0.0
    %2745 = vmatprep.subr.mxu0 0.0
    %2746 = vmatpush1.msra.mxu0 0.0
    %2747 = vmatprep.subr.mxu0 0.0
    %2748 = vmatpush1.msra.mxu0 0.0
    %2749 = vmatprep.subr.mxu0 0.0
    %2750 = vmatpush1.msra.mxu0 0.0
    %2751 = vmatprep.subr.mxu0 0.0
    %2752 = vmatpush1.msra.mxu0 0.0
    %2753 = vmatprep.subr.mxu0 0.0
    %2754 = vmatpush1.msra.mxu0 0.0
    %2755 = vmatprep.subr.mxu0 0.0
    %2756 = vmatpush1.msra.mxu0 0.0
    %2757 = vmatprep.subr.mxu0 0.0
    %2758 = vmatpush1.msra.mxu0 0.0
    %2759 = vmatprep.subr.mxu0 0.0
    %2760 = vmatpush1.msra.mxu0 0.0
    %2761 = vmatprep.mubr.f32.mxu0 0.0
    %2762 = vmatmul.mubr.f32.gmra.mrb[0].mxu0 %v2695
    %v2763 = vpop.f32.mrb[0].mxu0
    %v2764 = vadd.f32 0.0, %v2763
    %v2765 = vpop.f32.mrb[0].mxu0
    %2766 = vdwg.mxu0
    %2767 = vrot.lane.b32.xlu0 %v1820, 120
    %v2768 = vpop.permute.xlu0 %2767
    %2769 = vrot.lane.b32.xlu0 %v1911, 120
    %v2770 = vpop.permute.xlu0 %2769
    %v2771 = vsel %vm223, %v2768, 0
    %v2773 = vsel %vm223, %v2770, 0
    %2775 = vmatprep.subr.mxu0 0.0
    %2776 = vmatpush1.xpose.msra.mxu0 %v2773
    %2777 = vmatprep.subr.mxu0 0.0
    %2778 = vmatpush1.xpose.msra.mxu0 0.0
    %2779 = vmatprep.subr.mxu0 0.0
    %2780 = vmatpush1.xpose.msra.mxu0 0.0
    %2781 = vmatprep.subr.mxu0 0.0
    %2782 = vmatpush1.xpose.msra.mxu0 0.0
    %2783 = vmatprep.subr.mxu0 0.0
    %2784 = vmatpush1.xpose.msra.mxu0 0.0
    %2785 = vmatprep.subr.mxu0 0.0
    %2786 = vmatpush1.xpose.msra.mxu0 0.0
    %2787 = vmatprep.subr.mxu0 0.0
    %2788 = vmatpush1.xpose.msra.mxu0 0.0
    %2789 = vmatprep.subr.mxu0 0.0
    %2790 = vmatpush1.xpose.msra.mxu0 0.0
    %2791 = vmatprep.subr.mxu0 0.0
    %2792 = vmatpush1.xpose.msra.mxu0 0.0
    %2793 = vmatprep.subr.mxu0 0.0
    %2794 = vmatpush1.xpose.msra.mxu0 0.0
    %2795 = vmatprep.subr.mxu0 0.0
    %2796 = vmatpush1.xpose.msra.mxu0 0.0
    %2797 = vmatprep.subr.mxu0 0.0
    %2798 = vmatpush1.xpose.msra.mxu0 0.0
    %2799 = vmatprep.subr.mxu0 0.0
    %2800 = vmatpush1.xpose.msra.mxu0 0.0
    %2801 = vmatprep.subr.mxu0 0.0
    %2802 = vmatpush1.xpose.msra.mxu0 0.0
    %2803 = vmatprep.subr.mxu0 0.0
    %2804 = vmatpush1.xpose.msra.mxu0 0.0
    %2805 = vmatprep.subr.mxu0 0.0
    %2806 = vmatpush1.xpose.msra.mxu0 0.0
    %2807 = vmatprep.subr.mxu0 0.0
    %2808 = vmatpush1.xpose.msra.mxu0 0.0
    %2809 = vmatprep.subr.mxu0 0.0
    %2810 = vmatpush1.xpose.msra.mxu0 0.0
    %2811 = vmatprep.subr.mxu0 0.0
    %2812 = vmatpush1.xpose.msra.mxu0 0.0
    %2813 = vmatprep.subr.mxu0 0.0
    %2814 = vmatpush1.xpose.msra.mxu0 0.0
    %2815 = vmatprep.subr.mxu0 0.0
    %2816 = vmatpush1.xpose.msra.mxu0 0.0
    %2817 = vmatprep.subr.mxu0 0.0
    %2818 = vmatpush1.xpose.msra.mxu0 0.0
    %2819 = vmatprep.subr.mxu0 0.0
    %2820 = vmatpush1.xpose.msra.mxu0 0.0
    %2821 = vmatprep.subr.mxu0 0.0
    %2822 = vmatpush1.xpose.msra.mxu0 0.0
    %2823 = vmatprep.subr.mxu0 0.0
    %2824 = vmatpush1.xpose.msra.mxu0 0.0
    %2825 = vmatprep.subr.mxu0 0.0
    %2826 = vmatpush1.xpose.msra.mxu0 0.0
    %2827 = vmatprep.subr.mxu0 0.0
    %2828 = vmatpush1.xpose.msra.mxu0 0.0
    %2829 = vmatprep.subr.mxu0 0.0
    %2830 = vmatpush1.xpose.msra.mxu0 0.0
    %2831 = vmatprep.subr.mxu0 0.0
    %2832 = vmatpush1.xpose.msra.mxu0 0.0
    %2833 = vmatprep.subr.mxu0 0.0
    %2834 = vmatpush1.xpose.msra.mxu0 0.0
    %2835 = vmatprep.subr.mxu0 0.0
    %2836 = vmatpush1.xpose.msra.mxu0 0.0
    %2837 = vmatprep.subr.mxu0 0.0
    %2838 = vmatpush1.xpose.msra.mxu0 0.0
    %2839 = vmatprep.mubr.f32.mxu0 0.0
    %2840 = vmatmul.mubr.f32.gmra.mrb[0].mxu0 %v2771
    %v2841 = vpop.f32.mrb[0].mxu0
    %v2842 = vadd.f32 0.0, %v2841
    %v2843 = vpop.f32.mrb[0].mxu0
    %2844 = vdwg.mxu0
    %v2845 = vsel %vm2677, %v2842, -1e+09
    %v2846 = vsel %vm223, %v2845, -inf
    %2847 = vmax.xlane.f32.xlu0 %v2846
    %v2848 = vpop.xlane.xlu0 %2847
    %v2849 = vsub.f32 %v2845, %v2848
    %v2850 = vmul.f32 %v2849, 1.442695
    %v2851 = vpow.pop %v2850
    %v2852 = vsel %vm223, %v2851, 0.0
    %2853 = vadd.xlane.f32.xlu0 %v2852
    %v2854 = vpop.xlane.xlu0 %2853
    %v2855 = vrcp.pop %v2854
    %v2856 = vmul.f32 %v2851, %v2855
    %2857 = vrot.lane.b32.xlu0 %v1921, 88
    %v2858 = vpop.permute.xlu0 %2857
    %v2861 = vsel %vm223, %v2856, 0
    %2863 = vmatprep.subr.mxu0 0.0
    %2864 = vmatpush1.msra.mxu0 %v2858
    %2865 = vmatprep.subr.mxu0 0.0
    %2866 = vmatpush1.msra.mxu0 0.0
    %2867 = vmatprep.subr.mxu0 0.0
    %2868 = vmatpush1.msra.mxu0 0.0
    %2869 = vmatprep.subr.mxu0 0.0
    %2870 = vmatpush1.msra.mxu0 0.0
    %2871 = vmatprep.subr.mxu0 0.0
    %2872 = vmatpush1.msra.mxu0 0.0
    %2873 = vmatprep.subr.mxu0 0.0
    %2874 = vmatpush1.msra.mxu0 0.0
    %2875 = vmatprep.subr.mxu0 0.0
    %2876 = vmatpush1.msra.mxu0 0.0
    %2877 = vmatprep.subr.mxu0 0.0
    %2878 = vmatpush1.msra.mxu0 0.0
    %2879 = vmatprep.subr.mxu0 0.0
    %2880 = vmatpush1.msra.mxu0 0.0
    %2881 = vmatprep.subr.mxu0 0.0
    %2882 = vmatpush1.msra.mxu0 0.0
    %2883 = vmatprep.subr.mxu0 0.0
    %2884 = vmatpush1.msra.mxu0 0.0
    %2885 = vmatprep.subr.mxu0 0.0
    %2886 = vmatpush1.msra.mxu0 0.0
    %2887 = vmatprep.subr.mxu0 0.0
    %2888 = vmatpush1.msra.mxu0 0.0
    %2889 = vmatprep.subr.mxu0 0.0
    %2890 = vmatpush1.msra.mxu0 0.0
    %2891 = vmatprep.subr.mxu0 0.0
    %2892 = vmatpush1.msra.mxu0 0.0
    %2893 = vmatprep.subr.mxu0 0.0
    %2894 = vmatpush1.msra.mxu0 0.0
    %2895 = vmatprep.subr.mxu0 0.0
    %2896 = vmatpush1.msra.mxu0 0.0
    %2897 = vmatprep.subr.mxu0 0.0
    %2898 = vmatpush1.msra.mxu0 0.0
    %2899 = vmatprep.subr.mxu0 0.0
    %2900 = vmatpush1.msra.mxu0 0.0
    %2901 = vmatprep.subr.mxu0 0.0
    %2902 = vmatpush1.msra.mxu0 0.0
    %2903 = vmatprep.subr.mxu0 0.0
    %2904 = vmatpush1.msra.mxu0 0.0
    %2905 = vmatprep.subr.mxu0 0.0
    %2906 = vmatpush1.msra.mxu0 0.0
    %2907 = vmatprep.subr.mxu0 0.0
    %2908 = vmatpush1.msra.mxu0 0.0
    %2909 = vmatprep.subr.mxu0 0.0
    %2910 = vmatpush1.msra.mxu0 0.0
    %2911 = vmatprep.subr.mxu0 0.0
    %2912 = vmatpush1.msra.mxu0 0.0
    %2913 = vmatprep.subr.mxu0 0.0
    %2914 = vmatpush1.msra.mxu0 0.0
    %2915 = vmatprep.subr.mxu0 0.0
    %2916 = vmatpush1.msra.mxu0 0.0
    %2917 = vmatprep.subr.mxu0 0.0
    %2918 = vmatpush1.msra.mxu0 0.0
    %2919 = vmatprep.subr.mxu0 0.0
    %2920 = vmatpush1.msra.mxu0 0.0
    %2921 = vmatprep.subr.mxu0 0.0
    %2922 = vmatpush1.msra.mxu0 0.0
    %2923 = vmatprep.subr.mxu0 0.0
    %2924 = vmatpush1.msra.mxu0 0.0
    %2925 = vmatprep.subr.mxu0 0.0
    %2926 = vmatpush1.msra.mxu0 0.0
    %2927 = vmatprep.mubr.f32.mxu0 0.0
    %2928 = vmatmul.mubr.f32.gmra.mrb[0].mxu0 %v2861
    %v2929 = vpop.f32.mrb[0].mxu0
    %v2930 = vadd.f32 0.0, %v2929
    %v2931 = vpop.f32.mrb[0].mxu0
    %2932 = vdwg.mxu0
    %2933 = vrot.lane.b32.xlu0 %v1820, 112
    %v2934 = vpop.permute.xlu0 %2933
    %2935 = vrot.lane.b32.xlu0 %v1911, 112
    %v2936 = vpop.permute.xlu0 %2935
    %v2937 = vsel %vm223, %v2934, 0
    %v2939 = vsel %vm223, %v2936, 0
    %2941 = vmatprep.subr.mxu0 0.0
    %2942 = vmatpush1.xpose.msra.mxu0 %v2939
    %2943 = vmatprep.subr.mxu0 0.0
    %2944 = vmatpush1.xpose.msra.mxu0 0.0
    %2945 = vmatprep.subr.mxu0 0.0
    %2946 = vmatpush1.xpose.msra.mxu0 0.0
    %2947 = vmatprep.subr.mxu0 0.0
    %2948 = vmatpush1.xpose.msra.mxu0 0.0
    %2949 = vmatprep.subr.mxu0 0.0
    %2950 = vmatpush1.xpose.msra.mxu0 0.0
    %2951 = vmatprep.subr.mxu0 0.0
    %2952 = vmatpush1.xpose.msra.mxu0 0.0
    %2953 = vmatprep.subr.mxu0 0.0
    %2954 = vmatpush1.xpose.msra.mxu0 0.0
    %2955 = vmatprep.subr.mxu0 0.0
    %2956 = vmatpush1.xpose.msra.mxu0 0.0
    %2957 = vmatprep.subr.mxu0 0.0
    %2958 = vmatpush1.xpose.msra.mxu0 0.0
    %2959 = vmatprep.subr.mxu0 0.0
    %2960 = vmatpush1.xpose.msra.mxu0 0.0
    %2961 = vmatprep.subr.mxu0 0.0
    %2962 = vmatpush1.xpose.msra.mxu0 0.0
    %2963 = vmatprep.subr.mxu0 0.0
    %2964 = vmatpush1.xpose.msra.mxu0 0.0
    %2965 = vmatprep.subr.mxu0 0.0
    %2966 = vmatpush1.xpose.msra.mxu0 0.0
    %2967 = vmatprep.subr.mxu0 0.0
    %2968 = vmatpush1.xpose.msra.mxu0 0.0
    %2969 = vmatprep.subr.mxu0 0.0
    %2970 = vmatpush1.xpose.msra.mxu0 0.0
    %2971 = vmatprep.subr.mxu0 0.0
    %2972 = vmatpush1.xpose.msra.mxu0 0.0
    %2973 = vmatprep.subr.mxu0 0.0
    %2974 = vmatpush1.xpose.msra.mxu0 0.0
    %2975 = vmatprep.subr.mxu0 0.0
    %2976 = vmatpush1.xpose.msra.mxu0 0.0
    %2977 = vmatprep.subr.mxu0 0.0
    %2978 = vmatpush1.xpose.msra.mxu0 0.0
    %2979 = vmatprep.subr.mxu0 0.0
    %2980 = vmatpush1.xpose.msra.mxu0 0.0
    %2981 = vmatprep.subr.mxu0 0.0
    %2982 = vmatpush1.xpose.msra.mxu0 0.0
    %2983 = vmatprep.subr.mxu0 0.0
    %2984 = vmatpush1.xpose.msra.mxu0 0.0
    %2985 = vmatprep.subr.mxu0 0.0
    %2986 = vmatpush1.xpose.msra.mxu0 0.0
    %2987 = vmatprep.subr.mxu0 0.0
    %2988 = vmatpush1.xpose.msra.mxu0 0.0
    %2989 = vmatprep.subr.mxu0 0.0
    %2990 = vmatpush1.xpose.msra.mxu0 0.0
    %2991 = vmatprep.subr.mxu0 0.0
    %2992 = vmatpush1.xpose.msra.mxu0 0.0
    %2993 = vmatprep.subr.mxu0 0.0
    %2994 = vmatpush1.xpose.msra.mxu0 0.0
    %2995 = vmatprep.subr.mxu0 0.0
    %2996 = vmatpush1.xpose.msra.mxu0 0.0
    %2997 = vmatprep.subr.mxu0 0.0
    %2998 = vmatpush1.xpose.msra.mxu0 0.0
    %2999 = vmatprep.subr.mxu0 0.0
    %3000 = vmatpush1.xpose.msra.mxu0 0.0
    %3001 = vmatprep.subr.mxu0 0.0
    %3002 = vmatpush1.xpose.msra.mxu0 0.0
    %3003 = vmatprep.subr.mxu0 0.0
    %3004 = vmatpush1.xpose.msra.mxu0 0.0
    %3005 = vmatprep.mubr.f32.mxu0 0.0
    %3006 = vmatmul.mubr.f32.gmra.mrb[0].mxu0 %v2937
    %v3007 = vpop.f32.mrb[0].mxu0
    %v3008 = vadd.f32 0.0, %v3007
    %v3009 = vpop.f32.mrb[0].mxu0
    %3010 = vdwg.mxu0
    %v3011 = vsel %vm2677, %v3008, -1e+09
    %v3012 = vsel %vm223, %v3011, -inf
    %3013 = vmax.xlane.f32.xlu0 %v3012
    %v3014 = vpop.xlane.xlu0 %3013
    %v3015 = vsub.f32 %v3011, %v3014
    %v3016 = vmul.f32 %v3015, 1.442695
    %v3017 = vpow.pop %v3016
    %v3018 = vsel %vm223, %v3017, 0.0
    %3019 = vadd.xlane.f32.xlu0 %v3018
    %v3020 = vpop.xlane.xlu0 %3019
    %v3021 = vrcp.pop %v3020
    %v3022 = vmul.f32 %v3017, %v3021
    %3023 = vrot.lane.b32.xlu0 %v1921, 80
    %v3024 = vpop.permute.xlu0 %3023
    %v3027 = vsel %vm223, %v3022, 0
    %3029 = vmatprep.subr.mxu0 0.0
    %3030 = vmatpush1.msra.mxu0 %v3024
    %3031 = vmatprep.subr.mxu0 0.0
    %3032 = vmatpush1.msra.mxu0 0.0
    %3033 = vmatprep.subr.mxu0 0.0
    %3034 = vmatpush1.msra.mxu0 0.0
    %3035 = vmatprep.subr.mxu0 0.0
    %3036 = vmatpush1.msra.mxu0 0.0
    %3037 = vmatprep.subr.mxu0 0.0
    %3038 = vmatpush1.msra.mxu0 0.0
    %3039 = vmatprep.subr.mxu0 0.0
    %3040 = vmatpush1.msra.mxu0 0.0
    %3041 = vmatprep.subr.mxu0 0.0
    %3042 = vmatpush1.msra.mxu0 0.0
    %3043 = vmatprep.subr.mxu0 0.0
    %3044 = vmatpush1.msra.mxu0 0.0
    %3045 = vmatprep.subr.mxu0 0.0
    %3046 = vmatpush1.msra.mxu0 0.0
    %3047 = vmatprep.subr.mxu0 0.0
    %3048 = vmatpush1.msra.mxu0 0.0
    %3049 = vmatprep.subr.mxu0 0.0
    %3050 = vmatpush1.msra.mxu0 0.0
    %3051 = vmatprep.subr.mxu0 0.0
    %3052 = vmatpush1.msra.mxu0 0.0
    %3053 = vmatprep.subr.mxu0 0.0
    %3054 = vmatpush1.msra.mxu0 0.0
    %3055 = vmatprep.subr.mxu0 0.0
    %3056 = vmatpush1.msra.mxu0 0.0
    %3057 = vmatprep.subr.mxu0 0.0
    %3058 = vmatpush1.msra.mxu0 0.0
    %3059 = vmatprep.subr.mxu0 0.0
    %3060 = vmatpush1.msra.mxu0 0.0
    %3061 = vmatprep.subr.mxu0 0.0
    %3062 = vmatpush1.msra.mxu0 0.0
    %3063 = vmatprep.subr.mxu0 0.0
    %3064 = vmatpush1.msra.mxu0 0.0
    %3065 = vmatprep.subr.mxu0 0.0
    %3066 = vmatpush1.msra.mxu0 0.0
    %3067 = vmatprep.subr.mxu0 0.0
    %3068 = vmatpush1.msra.mxu0 0.0
    %3069 = vmatprep.subr.mxu0 0.0
    %3070 = vmatpush1.msra.mxu0 0.0
    %3071 = vmatprep.subr.mxu0 0.0
    %3072 = vmatpush1.msra.mxu0 0.0
    %3073 = vmatprep.subr.mxu0 0.0
    %3074 = vmatpush1.msra.mxu0 0.0
    %3075 = vmatprep.subr.mxu0 0.0
    %3076 = vmatpush1.msra.mxu0 0.0
    %3077 = vmatprep.subr.mxu0 0.0
    %3078 = vmatpush1.msra.mxu0 0.0
    %3079 = vmatprep.subr.mxu0 0.0
    %3080 = vmatpush1.msra.mxu0 0.0
    %3081 = vmatprep.subr.mxu0 0.0
    %3082 = vmatpush1.msra.mxu0 0.0
    %3083 = vmatprep.subr.mxu0 0.0
    %3084 = vmatpush1.msra.mxu0 0.0
    %3085 = vmatprep.subr.mxu0 0.0
    %3086 = vmatpush1.msra.mxu0 0.0
    %3087 = vmatprep.subr.mxu0 0.0
    %3088 = vmatpush1.msra.mxu0 0.0
    %3089 = vmatprep.subr.mxu0 0.0
    %3090 = vmatpush1.msra.mxu0 0.0
    %3091 = vmatprep.subr.mxu0 0.0
    %3092 = vmatpush1.msra.mxu0 0.0
    %3093 = vmatprep.mubr.f32.mxu0 0.0
    %3094 = vmatmul.mubr.f32.gmra.mrb[0].mxu0 %v3027
    %v3095 = vpop.f32.mrb[0].mxu0
    %v3096 = vadd.f32 0.0, %v3095
    %v3097 = vpop.f32.mrb[0].mxu0
    %3098 = vdwg.mxu0
    %3099 = vrot.lane.b32.xlu0 %v1820, 104
    %v3100 = vpop.permute.xlu0 %3099
    %3101 = vrot.lane.b32.xlu0 %v1911, 104
    %v3102 = vpop.permute.xlu0 %3101
    %v3103 = vsel %vm223, %v3100, 0
    %v3105 = vsel %vm223, %v3102, 0
    %3107 = vmatprep.subr.mxu0 0.0
    %3108 = vmatpush1.xpose.msra.mxu0 %v3105
    %3109 = vmatprep.subr.mxu0 0.0
    %3110 = vmatpush1.xpose.msra.mxu0 0.0
    %3111 = vmatprep.subr.mxu0 0.0
    %3112 = vmatpush1.xpose.msra.mxu0 0.0
    %3113 = vmatprep.subr.mxu0 0.0
    %3114 = vmatpush1.xpose.msra.mxu0 0.0
    %3115 = vmatprep.subr.mxu0 0.0
    %3116 = vmatpush1.xpose.msra.mxu0 0.0
    %3117 = vmatprep.subr.mxu0 0.0
    %3118 = vmatpush1.xpose.msra.mxu0 0.0
    %3119 = vmatprep.subr.mxu0 0.0
    %3120 = vmatpush1.xpose.msra.mxu0 0.0
    %3121 = vmatprep.subr.mxu0 0.0
    %3122 = vmatpush1.xpose.msra.mxu0 0.0
    %3123 = vmatprep.subr.mxu0 0.0
    %3124 = vmatpush1.xpose.msra.mxu0 0.0
    %3125 = vmatprep.subr.mxu0 0.0
    %3126 = vmatpush1.xpose.msra.mxu0 0.0
    %3127 = vmatprep.subr.mxu0 0.0
    %3128 = vmatpush1.xpose.msra.mxu0 0.0
    %3129 = vmatprep.subr.mxu0 0.0
    %3130 = vmatpush1.xpose.msra.mxu0 0.0
    %3131 = vmatprep.subr.mxu0 0.0
    %3132 = vmatpush1.xpose.msra.mxu0 0.0
    %3133 = vmatprep.subr.mxu0 0.0
    %3134 = vmatpush1.xpose.msra.mxu0 0.0
    %3135 = vmatprep.subr.mxu0 0.0
    %3136 = vmatpush1.xpose.msra.mxu0 0.0
    %3137 = vmatprep.subr.mxu0 0.0
    %3138 = vmatpush1.xpose.msra.mxu0 0.0
    %3139 = vmatprep.subr.mxu0 0.0
    %3140 = vmatpush1.xpose.msra.mxu0 0.0
    %3141 = vmatprep.subr.mxu0 0.0
    %3142 = vmatpush1.xpose.msra.mxu0 0.0
    %3143 = vmatprep.subr.mxu0 0.0
    %3144 = vmatpush1.xpose.msra.mxu0 0.0
    %3145 = vmatprep.subr.mxu0 0.0
    %3146 = vmatpush1.xpose.msra.mxu0 0.0
    %3147 = vmatprep.subr.mxu0 0.0
    %3148 = vmatpush1.xpose.msra.mxu0 0.0
    %3149 = vmatprep.subr.mxu0 0.0
    %3150 = vmatpush1.xpose.msra.mxu0 0.0
    %3151 = vmatprep.subr.mxu0 0.0
    %3152 = vmatpush1.xpose.msra.mxu0 0.0
    %3153 = vmatprep.subr.mxu0 0.0
    %3154 = vmatpush1.xpose.msra.mxu0 0.0
    %3155 = vmatprep.subr.mxu0 0.0
    %3156 = vmatpush1.xpose.msra.mxu0 0.0
    %3157 = vmatprep.subr.mxu0 0.0
    %3158 = vmatpush1.xpose.msra.mxu0 0.0
    %3159 = vmatprep.subr.mxu0 0.0
    %3160 = vmatpush1.xpose.msra.mxu0 0.0
    %3161 = vmatprep.subr.mxu0 0.0
    %3162 = vmatpush1.xpose.msra.mxu0 0.0
    %3163 = vmatprep.subr.mxu0 0.0
    %3164 = vmatpush1.xpose.msra.mxu0 0.0
    %3165 = vmatprep.subr.mxu0 0.0
    %3166 = vmatpush1.xpose.msra.mxu0 0.0
    %3167 = vmatprep.subr.mxu0 0.0
    %3168 = vmatpush1.xpose.msra.mxu0 0.0
    %3169 = vmatprep.subr.mxu0 0.0
    %3170 = vmatpush1.xpose.msra.mxu0 0.0
    %3171 = vmatprep.mubr.f32.mxu0 0.0
    %3172 = vmatmul.mubr.f32.gmra.mrb[0].mxu0 %v3103
    %v3173 = vpop.f32.mrb[0].mxu0
    %v3174 = vadd.f32 0.0, %v3173
    %v3175 = vpop.f32.mrb[0].mxu0
    %3176 = vdwg.mxu0
    %v3177 = vsel %vm2677, %v3174, -1e+09
    %v3178 = vsel %vm223, %v3177, -inf
    %3179 = vmax.xlane.f32.xlu0 %v3178
    %v3180 = vpop.xlane.xlu0 %3179
    %v3181 = vsub.f32 %v3177, %v3180
    %v3182 = vmul.f32 %v3181, 1.442695
    %v3183 = vpow.pop %v3182
    %v3184 = vsel %vm223, %v3183, 0.0
    %3185 = vadd.xlane.f32.xlu0 %v3184
    %v3186 = vpop.xlane.xlu0 %3185
    %v3187 = vrcp.pop %v3186
    %v3188 = vmul.f32 %v3183, %v3187
    %3189 = vrot.lane.b32.xlu0 %v1921, 72
    %v3190 = vpop.permute.xlu0 %3189
    %v3193 = vsel %vm223, %v3188, 0
    %3195 = vmatprep.subr.mxu0 0.0
    %3196 = vmatpush1.msra.mxu0 %v3190
    %3197 = vmatprep.subr.mxu0 0.0
    %3198 = vmatpush1.msra.mxu0 0.0
    %3199 = vmatprep.subr.mxu0 0.0
    %3200 = vmatpush1.msra.mxu0 0.0
    %3201 = vmatprep.subr.mxu0 0.0
    %3202 = vmatpush1.msra.mxu0 0.0
    %3203 = vmatprep.subr.mxu0 0.0
    %3204 = vmatpush1.msra.mxu0 0.0
    %3205 = vmatprep.subr.mxu0 0.0
    %3206 = vmatpush1.msra.mxu0 0.0
    %3207 = vmatprep.subr.mxu0 0.0
    %3208 = vmatpush1.msra.mxu0 0.0
    %3209 = vmatprep.subr.mxu0 0.0
    %3210 = vmatpush1.msra.mxu0 0.0
    %3211 = vmatprep.subr.mxu0 0.0
    %3212 = vmatpush1.msra.mxu0 0.0
    %3213 = vmatprep.subr.mxu0 0.0
    %3214 = vmatpush1.msra.mxu0 0.0
    %3215 = vmatprep.subr.mxu0 0.0
    %3216 = vmatpush1.msra.mxu0 0.0
    %3217 = vmatprep.subr.mxu0 0.0
    %3218 = vmatpush1.msra.mxu0 0.0
    %3219 = vmatprep.subr.mxu0 0.0
    %3220 = vmatpush1.msra.mxu0 0.0
    %3221 = vmatprep.subr.mxu0 0.0
    %3222 = vmatpush1.msra.mxu0 0.0
    %3223 = vmatprep.subr.mxu0 0.0
    %3224 = vmatpush1.msra.mxu0 0.0
    %3225 = vmatprep.subr.mxu0 0.0
    %3226 = vmatpush1.msra.mxu0 0.0
    %3227 = vmatprep.subr.mxu0 0.0
    %3228 = vmatpush1.msra.mxu0 0.0
    %3229 = vmatprep.subr.mxu0 0.0
    %3230 = vmatpush1.msra.mxu0 0.0
    %3231 = vmatprep.subr.mxu0 0.0
    %3232 = vmatpush1.msra.mxu0 0.0
    %3233 = vmatprep.subr.mxu0 0.0
    %3234 = vmatpush1.msra.mxu0 0.0
    %3235 = vmatprep.subr.mxu0 0.0
    %3236 = vmatpush1.msra.mxu0 0.0
    %3237 = vmatprep.subr.mxu0 0.0
    %3238 = vmatpush1.msra.mxu0 0.0
    %3239 = vmatprep.subr.mxu0 0.0
    %3240 = vmatpush1.msra.mxu0 0.0
    %3241 = vmatprep.subr.mxu0 0.0
    %3242 = vmatpush1.msra.mxu0 0.0
    %3243 = vmatprep.subr.mxu0 0.0
    %3244 = vmatpush1.msra.mxu0 0.0
    %3245 = vmatprep.subr.mxu0 0.0
    %3246 = vmatpush1.msra.mxu0 0.0
    %3247 = vmatprep.subr.mxu0 0.0
    %3248 = vmatpush1.msra.mxu0 0.0
    %3249 = vmatprep.subr.mxu0 0.0
    %3250 = vmatpush1.msra.mxu0 0.0
    %3251 = vmatprep.subr.mxu0 0.0
    %3252 = vmatpush1.msra.mxu0 0.0
    %3253 = vmatprep.subr.mxu0 0.0
    %3254 = vmatpush1.msra.mxu0 0.0
    %3255 = vmatprep.subr.mxu0 0.0
    %3256 = vmatpush1.msra.mxu0 0.0
    %3257 = vmatprep.subr.mxu0 0.0
    %3258 = vmatpush1.msra.mxu0 0.0
    %3259 = vmatprep.mubr.f32.mxu0 0.0
    %3260 = vmatmul.mubr.f32.gmra.mrb[0].mxu0 %v3193
    %v3261 = vpop.f32.mrb[0].mxu0
    %v3262 = vadd.f32 0.0, %v3261
    %v3263 = vpop.f32.mrb[0].mxu0
    %3264 = vdwg.mxu0
    %3266 = vrot.lane.b32.xlu0 %v2930, 8
    %v3267 = vpop.permute.xlu0 %3266
    %3270 = vrot.lane.b32.xlu0 %v3096, 16
    %v3271 = vpop.permute.xlu0 %3270
    %3274 = vrot.lane.b32.xlu0 %v3262, 24
    %v3275 = vpop.permute.xlu0 %3274
    %v3277 = vsel %vm223, %v2764, %v3267
    %v3278 = vsel %vm900, %v3277, %v3271
    %v3279 = vsel %vm902, %v3278, %v3275
    %v3280 = vld [vmem:[%s9] sm:$0xff]
    %v3281 = vld [vmem:[%s9 + $0x8] sm:$0xff]
    %v3282 = vld [vmem:[%s9 + $0x10] sm:$0xff]
    %v3283 = vld [vmem:[%s9 + $0x18] sm:$0xff]
    %v3285 = vsel %vm52, %v2600, 0
    %v3288 = vsel %vm52, %v3279, 0
    %3290 = vmatprep.subr.mxu0 0.0
    %3291 = vmatpush1.msra.mxu0 %v3280
    %3292 = vmatprep.subr.mxu0 0.0
    %3293 = vmatpush1.msra.mxu0 %v3281
    %3294 = vmatprep.subr.mxu0 0.0
    %3295 = vmatpush1.msra.mxu0 %v3282
    %3296 = vmatprep.subr.mxu0 0.0
    %3297 = vmatpush1.msra.mxu0 %v3283
    %3298 = vmatprep.subr.mxu0 0.0
    %3299 = vmatpush1.msra.mxu0 0.0
    %3300 = vmatprep.subr.mxu0 0.0
    %3301 = vmatpush1.msra.mxu0 0.0
    %3302 = vmatprep.subr.mxu0 0.0
    %3303 = vmatpush1.msra.mxu0 0.0
    %3304 = vmatprep.subr.mxu0 0.0
    %3305 = vmatpush1.msra.mxu0 0.0
    %3306 = vmatprep.subr.mxu0 0.0
    %3307 = vmatpush1.msra.mxu0 0.0
    %3308 = vmatprep.subr.mxu0 0.0
    %3309 = vmatpush1.msra.mxu0 0.0
    %3310 = vmatprep.subr.mxu0 0.0
    %3311 = vmatpush1.msra.mxu0 0.0
    %3312 = vmatprep.subr.mxu0 0.0
    %3313 = vmatpush1.msra.mxu0 0.0
    %3314 = vmatprep.subr.mxu0 0.0
    %3315 = vmatpush1.msra.mxu0 0.0
    %3316 = vmatprep.subr.mxu0 0.0
    %3317 = vmatpush1.msra.mxu0 0.0
    %3318 = vmatprep.subr.mxu0 0.0
    %3319 = vmatpush1.msra.mxu0 0.0
    %3320 = vmatprep.subr.mxu0 0.0
    %3321 = vmatpush1.msra.mxu0 0.0
    %3322 = vmatprep.subr.mxu0 0.0
    %3323 = vmatpush1.msra.mxu0 0.0
    %3324 = vmatprep.subr.mxu0 0.0
    %3325 = vmatpush1.msra.mxu0 0.0
    %3326 = vmatprep.subr.mxu0 0.0
    %3327 = vmatpush1.msra.mxu0 0.0
    %3328 = vmatprep.subr.mxu0 0.0
    %3329 = vmatpush1.msra.mxu0 0.0
    %3330 = vmatprep.subr.mxu0 0.0
    %3331 = vmatpush1.msra.mxu0 0.0
    %3332 = vmatprep.subr.mxu0 0.0
    %3333 = vmatpush1.msra.mxu0 0.0
    %3334 = vmatprep.subr.mxu0 0.0
    %3335 = vmatpush1.msra.mxu0 0.0
    %3336 = vmatprep.subr.mxu0 0.0
    %3337 = vmatpush1.msra.mxu0 0.0
    %3338 = vmatprep.subr.mxu0 0.0
    %3339 = vmatpush1.msra.mxu0 0.0
    %3340 = vmatprep.subr.mxu0 0.0
    %3341 = vmatpush1.msra.mxu0 0.0
    %3342 = vmatprep.subr.mxu0 0.0
    %3343 = vmatpush1.msra.mxu0 0.0
    %3344 = vmatprep.subr.mxu0 0.0
    %3345 = vmatpush1.msra.mxu0 0.0
    %3346 = vmatprep.subr.mxu0 0.0
    %3347 = vmatpush1.msra.mxu0 0.0
    %3348 = vmatprep.subr.mxu0 0.0
    %3349 = vmatpush1.msra.mxu0 0.0
    %3350 = vmatprep.subr.mxu0 0.0
    %3351 = vmatpush1.msra.mxu0 0.0
    %3352 = vmatprep.subr.mxu0 0.0
    %3353 = vmatpush1.msra.mxu0 0.0
    %3354 = vmatprep.mubr.f32.mxu0 0.0
    %3355 = vmatmul.mubr.f32.gmra.mrb[0].mxu0 %v3285
    %v3356 = vpop.f32.mrb[0].mxu0
    %v3357 = vadd.f32 0.0, %v3356
    %v3358 = vpop.f32.mrb[0].mxu0
    %3359 = vmatprep.mubr.f32.mxu0 0.0
    %3360 = vmatmul.mubr.f32.gmra.mrb[0].mxu0 %v3288
    %v3361 = vpop.f32.mrb[0].mxu0
    %v3362 = vadd.f32 0.0, %v3361
    %v3363 = vpop.f32.mrb[0].mxu0
    %3364 = vdwg.mxu0
    %v3365 = vadd.f32 %v1676, %v3357
    %v3366 = vadd.f32 %v1677, %v3362
    %v3367 = vlaneseq
    %v3368 = vshrl.u32 %v3367, 7
    %v3369 = vsub.s32 5, %v3368
    %v3370 = vrot.slane %v51, %v3369
    %v3371 = vadd.f32 %v3365, %v3370
    %v3372 = vadd.f32 %v3366, %v3370
    %v3373 = vsel %vm52, %v3371, 0.0
    %3374 = vadd.xlane.f32.xlu0 %v3373
    %v3375 = vpop.xlane.xlu0 %3374
    %v3376 = vsel %vm52, %v3372, 0.0
    %3377 = vadd.xlane.f32.xlu0 %v3376
    %v3378 = vpop.xlane.xlu0 %3377
    %v3379 = vmul.f32 %v3375, %v59
    %v3380 = vmul.f32 %v3378, %v59
    %v3381 = vsub.f32 %v3371, %v3379
    %v3382 = vsub.f32 %v3372, %v3380
    %v3383 = vmul.f32 %v3381, %v3381
    %v3384 = vmul.f32 %v3382, %v3382
    %v3385 = vsel %vm52, %v3383, 0.0
    %3386 = vadd.xlane.f32.xlu0 %v3385
    %v3387 = vpop.xlane.xlu0 %3386
    %v3388 = vsel %vm52, %v3384, 0.0
    %3389 = vadd.xlane.f32.xlu0 %v3388
    %v3390 = vpop.xlane.xlu0 %3389
    %v3391 = vmul.f32 %v3387, %v72
    %v3392 = vmul.f32 %v3390, %v72
    %v3393 = vrsqrt.pop %v3391
    %v3394 = vmul.f32 %v3391, %v3393
    %vm3395 = vcmp.eq.f32.partialorder %v3391, inf
    %v3396 = vsel %vm3395, %v3391, %v3394
    %vm3397 = vcmp.eq.f32.partialorder %v3391, 0.0
    %v3398 = vand.u32 %v3391, 2147483648
    %v3399 = vsel %vm3397, %v3398, %v3396
    %v3400 = vrsqrt.pop %v3392
    %v3401 = vmul.f32 %v3392, %v3400
    %vm3402 = vcmp.eq.f32.partialorder %v3392, inf
    %v3403 = vsel %vm3402, %v3392, %v3401
    %vm3404 = vcmp.eq.f32.partialorder %v3392, 0.0
    %v3405 = vand.u32 %v3392, 2147483648
    %v3406 = vsel %vm3404, %v3405, %v3403
    %v3407 = vlaneseq
    %v3408 = vshrl.u32 %v3407, 7
    %v3409 = vsub.s32 4, %v3408
    %v3410 = vrot.slane %v50, %v3409
    %v3411 = vmul.f32 %v3410, %v3381
    %v3412 = vmul.f32 %v3410, %v3382
    %v3413 = vadd.f32 %v3399, 1e-06
    %v3414 = vadd.f32 %v3406, 1e-06
    %v3415 = vrcp.pop %v3413
    %v3416 = vmul.f32 %v3411, %v3415
    %v3417 = vrcp.pop %v3414
    %v3418 = vmul.f32 %v3412, %v3417
    %v3419 = vlaneseq
    %v3420 = vshrl.u32 %v3419, 7
    %v3421 = vsub.s32 5, %v3420
    %v3422 = vrot.slane %v50, %v3421
    %v3423 = vadd.f32 %v3416, %v3422
    %v3424 = vadd.f32 %v3418, %v3422
    %v3425 = vld [vmem:[%s10] sm:$0xff]
    %v3426 = vld [vmem:[%s10 + $0x8] sm:$0xff]
    %v3427 = vld [vmem:[%s10 + $0x10] sm:$0xff]
    %v3428 = vld [vmem:[%s10 + $0x18] sm:$0xff]
    %v3429 = vlaneseq
    %v3430 = vshrl.u32 %v3429, 7
    %v3431 = vsub.s32 7, %v3430
    %v3432 = vrot.slane %v51, %v3431
    %v3434 = vsel %vm52, %v3423, 0
    %v3437 = vsel %vm52, %v3424, 0
    %3439 = vmatprep.subr.mxu0 0.0
    %3440 = vmatpush1.msra.mxu0 %v3425
    %3441 = vmatprep.subr.mxu0 0.0
    %3442 = vmatpush1.msra.mxu0 %v3426
    %3443 = vmatprep.subr.mxu0 0.0
    %3444 = vmatpush1.msra.mxu0 %v3427
    %3445 = vmatprep.subr.mxu0 0.0
    %3446 = vmatpush1.msra.mxu0 %v3428
    %3447 = vmatprep.subr.mxu0 0.0
    %3448 = vmatpush1.msra.mxu0 0.0
    %3449 = vmatprep.subr.mxu0 0.0
    %3450 = vmatpush1.msra.mxu0 0.0
    %3451 = vmatprep.subr.mxu0 0.0
    %3452 = vmatpush1.msra.mxu0 0.0
    %3453 = vmatprep.subr.mxu0 0.0
    %3454 = vmatpush1.msra.mxu0 0.0
    %3455 = vmatprep.subr.mxu0 0.0
    %3456 = vmatpush1.msra.mxu0 0.0
    %3457 = vmatprep.subr.mxu0 0.0
    %3458 = vmatpush1.msra.mxu0 0.0
    %3459 = vmatprep.subr.mxu0 0.0
    %3460 = vmatpush1.msra.mxu0 0.0
    %3461 = vmatprep.subr.mxu0 0.0
    %3462 = vmatpush1.msra.mxu0 0.0
    %3463 = vmatprep.subr.mxu0 0.0
    %3464 = vmatpush1.msra.mxu0 0.0
    %3465 = vmatprep.subr.mxu0 0.0
    %3466 = vmatpush1.msra.mxu0 0.0
    %3467 = vmatprep.subr.mxu0 0.0
    %3468 = vmatpush1.msra.mxu0 0.0
    %3469 = vmatprep.subr.mxu0 0.0
    %3470 = vmatpush1.msra.mxu0 0.0
    %3471 = vmatprep.subr.mxu0 0.0
    %3472 = vmatpush1.msra.mxu0 0.0
    %3473 = vmatprep.subr.mxu0 0.0
    %3474 = vmatpush1.msra.mxu0 0.0
    %3475 = vmatprep.subr.mxu0 0.0
    %3476 = vmatpush1.msra.mxu0 0.0
    %3477 = vmatprep.subr.mxu0 0.0
    %3478 = vmatpush1.msra.mxu0 0.0
    %3479 = vmatprep.subr.mxu0 0.0
    %3480 = vmatpush1.msra.mxu0 0.0
    %3481 = vmatprep.subr.mxu0 0.0
    %3482 = vmatpush1.msra.mxu0 0.0
    %3483 = vmatprep.subr.mxu0 0.0
    %3484 = vmatpush1.msra.mxu0 0.0
    %3485 = vmatprep.subr.mxu0 0.0
    %3486 = vmatpush1.msra.mxu0 0.0
    %3487 = vmatprep.subr.mxu0 0.0
    %3488 = vmatpush1.msra.mxu0 0.0
    %3489 = vmatprep.subr.mxu0 0.0
    %3490 = vmatpush1.msra.mxu0 0.0
    %3491 = vmatprep.subr.mxu0 0.0
    %3492 = vmatpush1.msra.mxu0 0.0
    %3493 = vmatprep.subr.mxu0 0.0
    %3494 = vmatpush1.msra.mxu0 0.0
    %3495 = vmatprep.subr.mxu0 0.0
    %3496 = vmatpush1.msra.mxu0 0.0
    %3497 = vmatprep.subr.mxu0 0.0
    %3498 = vmatpush1.msra.mxu0 0.0
    %3499 = vmatprep.subr.mxu0 0.0
    %3500 = vmatpush1.msra.mxu0 0.0
    %3501 = vmatprep.subr.mxu0 0.0
    %3502 = vmatpush1.msra.mxu0 0.0
    %3503 = vmatprep.mubr.f32.mxu0 0.0
    %3504 = vmatmul.mubr.f32.gmra.mrb[0].mxu0 %v3434
    %v3505 = vpop.f32.mrb[0].mxu0
    %v3506 = vadd.f32 %v3432, %v3505
    %v3507 = vpop.f32.mrb[0].mxu0
    %3508 = vmatprep.mubr.f32.mxu0 0.0
    %3509 = vmatmul.mubr.f32.gmra.mrb[0].mxu0 %v3437
    %v3510 = vpop.f32.mrb[0].mxu0
    %v3511 = vadd.f32 %v3432, %v3510
    %v3512 = vpop.f32.mrb[0].mxu0
    %3513 = vdwg.mxu0
    %v3514 = vmax.f32 %v3506, 0.0
    %v3515 = vmax.f32 %v3511, 0.0
    %v3516 = vld [vmem:[%s11] sm:$0xff]
    %v3517 = vld [vmem:[%s11 + $0x8] sm:$0xff]
    %v3518 = vld [vmem:[%s11 + $0x10] sm:$0xff]
    %v3519 = vld [vmem:[%s11 + $0x18] sm:$0xff]
    %v3520 = vld [vmem:[%s11 + $0x20] sm:$0xff]
    %v3521 = vld [vmem:[%s11 + $0x28] sm:$0xff]
    %v3522 = vld [vmem:[%s11 + $0x30] sm:$0xff]
    %v3523 = vld [vmem:[%s11 + $0x38] sm:$0xff]
    %v3524 = vlaneseq
    %v3525 = vshrl.u32 %v3524, 7
    %v3526 = vsub.s32 6, %v3525
    %v3527 = vrot.slane %v51, %v3526
    %vm3528 = vcmask 523264
    %v3530 = vsel %vm3528, %v3514, 0
    %v3533 = vsel %vm3528, %v3515, 0
    %3535 = vmatprep.subr.mxu0 0.0
    %3536 = vmatpush1.msra.mxu0 %v3516
    %3537 = vmatprep.subr.mxu0 0.0
    %3538 = vmatpush1.msra.mxu0 %v3517
    %3539 = vmatprep.subr.mxu0 0.0
    %3540 = vmatpush1.msra.mxu0 %v3518
    %3541 = vmatprep.subr.mxu0 0.0
    %3542 = vmatpush1.msra.mxu0 %v3519
    %3543 = vmatprep.subr.mxu0 0.0
    %3544 = vmatpush1.msra.mxu0 %v3520
    %3545 = vmatprep.subr.mxu0 0.0
    %3546 = vmatpush1.msra.mxu0 %v3521
    %3547 = vmatprep.subr.mxu0 0.0
    %3548 = vmatpush1.msra.mxu0 %v3522
    %3549 = vmatprep.subr.mxu0 0.0
    %3550 = vmatpush1.msra.mxu0 %v3523
    %3551 = vmatprep.subr.mxu0 0.0
    %3552 = vmatpush1.msra.mxu0 0.0
    %3553 = vmatprep.subr.mxu0 0.0
    %3554 = vmatpush1.msra.mxu0 0.0
    %3555 = vmatprep.subr.mxu0 0.0
    %3556 = vmatpush1.msra.mxu0 0.0
    %3557 = vmatprep.subr.mxu0 0.0
    %3558 = vmatpush1.msra.mxu0 0.0
    %3559 = vmatprep.subr.mxu0 0.0
    %3560 = vmatpush1.msra.mxu0 0.0
    %3561 = vmatprep.subr.mxu0 0.0
    %3562 = vmatpush1.msra.mxu0 0.0
    %3563 = vmatprep.subr.mxu0 0.0
    %3564 = vmatpush1.msra.mxu0 0.0
    %3565 = vmatprep.subr.mxu0 0.0
    %3566 = vmatpush1.msra.mxu0 0.0
    %3567 = vmatprep.subr.mxu0 0.0
    %3568 = vmatpush1.msra.mxu0 0.0
    %3569 = vmatprep.subr.mxu0 0.0
    %3570 = vmatpush1.msra.mxu0 0.0
    %3571 = vmatprep.subr.mxu0 0.0
    %3572 = vmatpush1.msra.mxu0 0.0
    %3573 = vmatprep.subr.mxu0 0.0
    %3574 = vmatpush1.msra.mxu0 0.0
    %3575 = vmatprep.subr.mxu0 0.0
    %3576 = vmatpush1.msra.mxu0 0.0
    %3577 = vmatprep.subr.mxu0 0.0
    %3578 = vmatpush1.msra.mxu0 0.0
    %3579 = vmatprep.subr.mxu0 0.0
    %3580 = vmatpush1.msra.mxu0 0.0
    %3581 = vmatprep.subr.mxu0 0.0
    %3582 = vmatpush1.msra.mxu0 0.0
    %3583 = vmatprep.subr.mxu0 0.0
    %3584 = vmatpush1.msra.mxu0 0.0
    %3585 = vmatprep.subr.mxu0 0.0
    %3586 = vmatpush1.msra.mxu0 0.0
    %3587 = vmatprep.subr.mxu0 0.0
    %3588 = vmatpush1.msra.mxu0 0.0
    %3589 = vmatprep.subr.mxu0 0.0
    %3590 = vmatpush1.msra.mxu0 0.0
    %3591 = vmatprep.subr.mxu0 0.0
    %3592 = vmatpush1.msra.mxu0 0.0
    %3593 = vmatprep.subr.mxu0 0.0
    %3594 = vmatpush1.msra.mxu0 0.0
    %3595 = vmatprep.subr.mxu0 0.0
    %3596 = vmatpush1.msra.mxu0 0.0
    %3597 = vmatprep.subr.mxu0 0.0
    %3598 = vmatpush1.msra.mxu0 0.0
    %3599 = vmatprep.mubr.f32.mxu0 0.0
    %3600 = vmatmul.mubr.f32.gmra.mrb[0].mxu0 %v3530
    %v3601 = vpop.f32.mrb[0].mxu0
    %v3602 = vadd.f32 %v3527, %v3601
    %v3603 = vpop.f32.mrb[0].mxu0
    %3604 = vmatprep.mubr.f32.mxu0 0.0
    %3605 = vmatmul.mubr.f32.gmra.mrb[0].mxu0 %v3533
    %v3606 = vpop.f32.mrb[0].mxu0
    %v3607 = vadd.f32 %v3527, %v3606
    %v3608 = vpop.f32.mrb[0].mxu0
    %3609 = vdwg.mxu0
    %v3610 = vadd.f32 %v3371, %v3602
    %v3611 = vadd.f32 %v3372, %v3607
    %3612 = vst.msk [vmem:[#allocation2] sm:$0xff] %vm52, %v3610
    %3613 = vst.msk [vmem:[#allocation2 + $0x8] sm:$0xff] %vm52, %v3611
    // Predicated region
    $region50: #{decoder_layer.1} parent=1 // pred_check
      _
    $region51: #{decoder_layer.1} parent=1 // pred_check_branch
      %3615 = sbr.rel (0) target = $region53
    $region52: #{decoder_layer.1} parent=1 // pred_region
      %s3617 = ssub.s32 256, 256
      %3618 = vsyncadd [#allocation3], %s3617
      %s3619 = sshll.u32 [#allocation2], 4
      %s3620 = int_to_ptr.vmem [resolvable:$true] %s3619
      %3625 = dma.vmem_to_hbm [thread:$0]  %s3620, 256, %s12, [#allocation3], 128, 128, 8
    $region53: #{decoder_layer.1} parent=1 // pred_fallthru
      _
    // Predicated region
    $region54: #{decoder_layer.1} parent=1 // pred_check
      _
    $region55: #{decoder_layer.1} parent=1 // pred_check_branch
      %3627 = sbr.rel (0) target = $region57
    $region56: #{decoder_layer.1} parent=1 // pred_region
      %3628 = dma.done [#allocation3], 256
    $region57: #{decoder_layer.1} parent=1 // pred_fallthru
      _
    %3629 = vsyncpa [#allocation3], 1

</llo_original>
